<compile_context>
chip_gen: v6e
topology: v6e:2x2x1
jax: 0.10.0
libtpu: 0.0.40
codegen_flags: <defaults>
</compile_context>

<pallas_src>
import functools
import numpy as np
import jax
import jax.numpy as jnp
from jax.experimental import pallas as pl
from jax.experimental.pallas import tpu as pltpu


# ---------------------------------------------------------------------------
# Parameter packing: fold BN + bias, zero-embed small kernels into kmax,
# pad output channels to a lane-dense 128 multiple, concat branches.
# ---------------------------------------------------------------------------
def pack_params(params, klist, Cin, Cout, kmax, Cpad, Chalf, Chalf_pad):
    K = len(klist)
    w_cols, b_cols = [], []
    for i, k in enumerate(klist):
        scale = params["bn_scale"][i]                                  # (Cout,)
        bias = params["conv_b"][i] * scale + params["bn_bias"][i]      # (Cout,)
        w = params["conv_w"][i] * scale[None, None, None, :]           # (k,k,Cin,Cout)
        off = (kmax - k) // 2
        w_full = jnp.zeros((kmax, kmax, Cin, Cout), jnp.float32)
        w_full = w_full.at[off:off + k, off:off + k].set(w)
        w3 = w_full.reshape(kmax * kmax, Cin, Cout)
        w_cols.append(jnp.pad(w3, ((0, 0), (0, 0), (0, Cpad - Cout))))
        b_cols.append(jnp.pad(bias, (0, Cpad - Cout)))
    w_packed = jnp.concatenate(w_cols, axis=2)                         # (kmax^2, Cin, K*Cpad)
    b_packed = jnp.concatenate(b_cols)[None, :]                        # (1, K*Cpad)

    lw = jnp.zeros((Cpad, Chalf_pad), jnp.float32)
    lw = lw.at[:Cout, :Chalf].set(params["lin_w"].T)                   # (Cpad, Chalf_pad)
    lb = jnp.pad(params["lin_b"], (0, Chalf_pad - Chalf))[None, :]     # (1, Chalf_pad)

    m_cols = []
    for i in range(K):
        mp = jnp.zeros((Chalf_pad, Cpad), jnp.float32)
        m_cols.append(mp.at[:Chalf, :Cout].set(params["mats"][i]))
    m_packed = jnp.concatenate(m_cols, axis=1)                         # (Chalf_pad, K*Cpad)
    return w_packed, b_packed, lw, lb, m_packed


# ---------------------------------------------------------------------------
# Pallas kernel: one grid step = Bt batch elements.
# ---------------------------------------------------------------------------
def sk_kernel(xs_ref, w_ref, b_ref, lw_ref, lb_ref, m_ref, o_ref, *,
              K, KK, Q, Cpad, Bt, kp, kmax, Cin, pool_is_max):
    # xs_ref: (Bt, G, G, Q, Cin)       bf16 strided input slabs (G = kp+kmax-1)
    # w_ref : (kmax*kmax, Cin, K*Cpad) bf16 packed conv weights (BN folded)
    # b_ref : (1, K*Cpad)              f32  packed folded bias
    # lw_ref: (Cpad, Chalf_pad)        f32  squeeze linear weight (transposed, padded)
    # lb_ref: (1, Chalf_pad)           f32
    # m_ref : (Chalf_pad, K*Cpad)      f32  attention matrices (packed, padded)
    # o_ref : (Bt, Q, Cpad)            bf16 pooled output (lane-dense)
    R = Bt * KK * Q
    KCout = K * Cpad
    inv_hw = 1.0 / float(KK * Q)

    # --- all conv branches: kmax^2 accumulated MXU matmuls, f32 accumulation --
    # Row order of `conv` is (batch, pooling offset (py,px), pooled position q).
    conv = None
    for dy in range(kmax):
        for dx in range(kmax):
            lhs = xs_ref[:, pl.ds(dy, kp), pl.ds(dx, kp), :, :].reshape(R, Cin)
            part = jnp.dot(lhs, w_ref[dy * kmax + dx],
                           preferred_element_type=jnp.float32)
            conv = part if conv is None else conv + part               # (R, K*Cpad)

    acts = jnp.maximum(conv + b_ref[...], 0.0)                         # bias+BN folded, ReLU
    acts3 = acts.reshape(Bt, KK * Q, KCout)

    # --- squeeze: global average pool over all H*W positions, per batch elem --
    zfull = jnp.sum(acts3, axis=1) * inv_hw                            # (Bt, K*Cpad)
    z = zfull[:, 0:Cpad]
    for k in range(1, K):
        z = z + zfull[:, k * Cpad:(k + 1) * Cpad]                      # (Bt, Cpad)

    s = jnp.dot(z, lw_ref[...], preferred_element_type=jnp.float32) + lb_ref[...]
    fac = jnp.dot(s, m_ref[...], preferred_element_type=jnp.float32)   # (Bt, K*Cpad)

    # --- softmax over the K branches (padded lanes give 1/K * 0 -> harmless) --
    facs = [fac[:, k * Cpad:(k + 1) * Cpad] for k in range(K)]
    fmax = facs[0]
    for k in range(1, K):
        fmax = jnp.maximum(fmax, facs[k])
    exps = [jnp.exp(f - fmax) for f in facs]
    denom = exps[0]
    for k in range(1, K):
        denom = denom + exps[k]
    inv = pl.reciprocal(denom, approx=False)                           # EUP
    # NOTE: self.attFactor is a detached CPU-side side effect in PyTorch; it
    # does not affect the returned value and is not produced here.

    # --- attention-weighted fusion ---------------------------------------------
    result = (exps[0] * inv)[:, None, :] * acts3[:, :, 0:Cpad]
    for k in range(1, K):
        result = result + (exps[k] * inv)[:, None, :] * \
            acts3[:, :, k * Cpad:(k + 1) * Cpad]                       # (Bt, KK*Q, Cpad)

    # --- spatial pooling: contiguous, sublane-aligned row blocks per offset ----
    r4 = result.reshape(Bt, KK, Q, Cpad)
    pooled = r4[:, 0]
    for o in range(1, KK):
        pooled = jnp.maximum(pooled, r4[:, o]) if pool_is_max else pooled + r4[:, o]
    if not pool_is_max:
        pooled = pooled * (1.0 / KK)

    # Dropout: eval-mode identity.
    # TODO(synk): training-mode dropout mask/scaling not implemented.
    o_ref[...] = pooled.astype(o_ref.dtype)


# ---------------------------------------------------------------------------
# Wrapper
# ---------------------------------------------------------------------------
def sk_block_forward(x_nchw, params, skconv_dict, pooling_dict, dropout_dict):
    B, Cin, H, W = x_nchw.shape
    Cout = skconv_dict["out_channels"]
    Chalf = Cout // 2
    klist = list(skconv_dict["kernel_list"])
    K = len(klist)
    # TODO(synk): PyTorch padding='same' with an even kernel pads asymmetrically;
    # only odd kernels are handled here.
    assert all(k % 2 == 1 for k in klist), "only odd conv kernels supported"
    kmax = max(klist)
    p = kmax // 2

    kp = pooling_dict["pooling_kernel"]
    sp = pooling_dict["pooling_stride"]
    pool_is_max = pooling_dict["pooling_type"] == "max2d"
    # TODO(synk): only non-overlapping, fully-tiling pooling (kernel == stride,
    # H,W divisible) is implemented in-kernel.
    assert kp == sp and H % kp == 0 and W % kp == 0, \
        "pooling kernel must equal stride and tile H,W"

    Hp, Wp = H // kp, W // kp
    KK, Q = kp * kp, Hp * Wp
    G = kp + kmax - 1
    Cpad = max(128, ((Cout + 127) // 128) * 128)
    Chalf_pad = max(128, ((Chalf + 127) // 128) * 128)

    # bf16 from the very first op: all wrapper-side data movement is half-width.
    x = jnp.transpose(x_nchw, (0, 2, 3, 1)).astype(jnp.bfloat16)       # NHWC bf16
    x_pad = jnp.pad(x, ((0, 0), (p, p), (p, p), (0, 0)))

    # Strided slabs of the RAW input (no im2col): slab[oy,ox][b,hp,wp,:] =
    # x_pad[b, oy + kp*hp, ox + kp*wp, :].  The kernel picks the kp x kp block
    # (dy:dy+kp, dx:dx+kp) of slabs for conv offset (dy,dx) with free
    # leading-dim slices.
    slabs = []
    for oy in range(G):
        for ox in range(G):
            slabs.append(x_pad[:, oy:oy + kp * (Hp - 1) + 1:kp,
                                  ox:ox + kp * (Wp - 1) + 1:kp, :])    # (B,Hp,Wp,Cin)
    xs = jnp.stack(slabs, axis=1).reshape(B, G, G, Q, Cin)             # (B,G,G,Q,Cin)

    w_packed, b_packed, lw, lb, m_packed = pack_params(
        params, klist, Cin, Cout, kmax, Cpad, Chalf, Chalf_pad)
    w_packed = w_packed.astype(jnp.bfloat16)

    # Block over batch: Bt divides B (no pad copy) and leaves >=2 grid steps so
    # both v7x TensorCores get work and BlockSpec pipelining stays active.
    rows_per_elem = KK * Q
    Bt = 1
    for d in range(1, B + 1):
        if B % d == 0 and d * rows_per_elem <= 1024 and (B // d) >= min(2, B):
            Bt = d
    grid = (B // Bt,)

    kernel = functools.partial(sk_kernel, K=K, KK=KK, Q=Q, Cpad=Cpad, Bt=Bt,
                               kp=kp, kmax=kmax, Cin=Cin, pool_is_max=pool_is_max)

    y = pl.pallas_call(
        kernel,
        out_shape=jax.ShapeDtypeStruct((B, Q, Cpad), jnp.bfloat16),
        grid=grid,
        in_specs=[
            pl.BlockSpec((Bt, G, G, Q, Cin), lambda i: (i, 0, 0, 0, 0)),
            pl.BlockSpec((kmax * kmax, Cin, K * Cpad), lambda i: (0, 0, 0)),
            pl.BlockSpec((1, K * Cpad), lambda i: (0, 0)),
            pl.BlockSpec((Cpad, Chalf_pad), lambda i: (0, 0)),
            pl.BlockSpec((1, Chalf_pad), lambda i: (0, 0)),
            pl.BlockSpec((Chalf_pad, K * Cpad), lambda i: (0, 0)),
        ],
        out_specs=pl.BlockSpec((Bt, Q, Cpad), lambda i: (i, 0, 0)),
        compiler_params=pltpu.CompilerParams(
            dimension_semantics=("parallel",),
            # Sized to fit v7x's 64 MiB physical VMEM with headroom; v5e/v6e
            # (128 MiB) have slack to raise this if Bt / block sizes are grown.
            vmem_limit_bytes=48 * 1024 * 1024),
    )(xs, w_packed, b_packed, lw, lb, m_packed)

    # Strip channel padding, back to NCHW, restore f32 (pure layout glue).
    # TODO(synk): when Cout << 128 the padded lanes could be packed lane-dense
    # in-kernel for a further writeback reduction.
    y = y[:, :, :Cout].astype(jnp.float32).reshape(B, Hp, Wp, Cout)
    return jnp.transpose(y, (0, 3, 1, 2))


# ---------------------------------------------------------------------------
# Pure-JAX f32 reference (same math, no Pallas) for validation
# ---------------------------------------------------------------------------
def im2col_2d(x_nhwc, k):
    """x_nhwc: (B,H,W,C) -> (B,H,W,k*k*C) patches for 'same', stride 1, odd k."""
    B, H, W, C = x_nhwc.shape
    p = k // 2
    xp = jnp.pad(x_nhwc, ((0, 0), (p, p), (p, p), (0, 0)))
    cols = [xp[:, dy:dy + H, dx:dx + W, :] for dy in range(k) for dx in range(k)]
    patches = jnp.stack(cols, axis=3)                       # (B,H,W,k*k,C)
    return patches.reshape(B, H, W, k * k * C)


def reference_forward(x_nchw, params, skconv_dict, pooling_dict):
    B, Cin, H, W = x_nchw.shape
    Cout = skconv_dict["out_channels"]
    klist = skconv_dict["kernel_list"]
    x = jnp.transpose(x_nchw, (0, 2, 3, 1)).astype(jnp.float32)
    outs = []
    for i, k in enumerate(klist):
        p = im2col_2d(x, k).reshape(B, H * W, k * k * Cin)
        w = params["conv_w"][i].reshape(k * k * Cin, Cout)
        conv = p @ w + params["conv_b"][i]
        y = jnp.maximum(conv * params["bn_scale"][i] + params["bn_bias"][i], 0.0)
        outs.append(y)                                            # (B, HW, Cout)
    fuse = sum(outs)
    z = jnp.mean(fuse, axis=1)                                    # (B, Cout)
    s = z @ params["lin_w"].T + params["lin_b"]                   # (B, Cout//2)
    factors = jnp.stack([s @ M for M in params["mats"]], axis=1)  # (B, K, Cout)
    att = jax.nn.softmax(factors, axis=1)
    result = sum(att[:, i, :][:, None, :] * outs[i] for i in range(len(klist)))
    result = result.reshape(B, H, W, Cout)
    kp, sp = pooling_dict["pooling_kernel"], pooling_dict["pooling_stride"]
    if pooling_dict["pooling_type"] == "max2d":
        pooled = jax.lax.reduce_window(result, -jnp.inf, jax.lax.max,
                                       (1, kp, kp, 1), (1, sp, sp, 1), "VALID")
    else:
        pooled = jax.lax.reduce_window(result, 0.0, jax.lax.add,
                                       (1, kp, kp, 1), (1, sp, sp, 1), "VALID") / (kp * kp)
    return jnp.transpose(pooled, (0, 3, 1, 2))


# ---------------------------------------------------------------------------
if __name__ == "__main__":
    skconv_dict = {"in_channels": 4, "out_channels": 8, "kernel_list": [1, 3]}
    pooling_dict = {"pooling_type": "max2d", "pooling_kernel": 2, "pooling_stride": 2}
    dropout_dict = {"drop_rate": 0.5}

    B, Cin, H, W = 2, skconv_dict["in_channels"], 16, 16
    Cout = skconv_dict["out_channels"]
    Chalf = Cout // 2
    klist = skconv_dict["kernel_list"]

    key = jax.random.PRNGKey(0)
    ks = jax.random.split(key, 4 * len(klist) + 5)
    ki = iter(range(len(ks)))

    params = {
        "conv_w": [0.1 * jax.random.normal(ks[next(ki)], (k, k, Cin, Cout), jnp.float32)
                   for k in klist],
        "conv_b": [0.1 * jax.random.normal(ks[next(ki)], (Cout,), jnp.float32)
                   for _ in klist],
        # folded inference-mode BatchNorm: y = x * scale + bias
        "bn_scale": [1.0 + 0.05 * jax.random.normal(ks[next(ki)], (Cout,), jnp.float32)
                     for _ in klist],
        "bn_bias": [0.05 * jax.random.normal(ks[next(ki)], (Cout,), jnp.float32)
                    for _ in klist],
        "lin_w": 0.2 * jax.random.normal(ks[next(ki)], (Chalf, Cout), jnp.float32),
        "lin_b": 0.1 * jax.random.normal(ks[next(ki)], (Chalf,), jnp.float32),
        "mats": [jax.random.normal(ks[next(ki)], (Chalf, Cout), jnp.float32)
                 for _ in klist],
    }

    x = jax.random.normal(ks[next(ki)], (B, Cin, H, W), jnp.float32)

    out = sk_block_forward(x, params, skconv_dict, pooling_dict, dropout_dict)
    out = jax.block_until_ready(out)

    ref = jax.block_until_ready(reference_forward(x, params, skconv_dict, pooling_dict))
    assert out.shape == ref.shape, (out.shape, ref.shape)
    # Kernel feeds the MXU bf16 operands (f32 accumulation) and stores bf16
    # output -> relaxed tolerance vs. the all-f32 reference.
    assert np.allclose(np.asarray(out), np.asarray(ref), atol=3e-2, rtol=3e-2), \
        float(np.max(np.abs(np.asarray(out) - np.asarray(ref))))

    print("KERNEL_OK")
</pallas_src>

<mosaic_0001>
module attributes {stable_mosaic.version = 11 : i64} {
  func.func @sk_kernel(%arg0: i32, %arg1: memref<1x4x4x64x4xbf16, #tpu.memory_space<vmem>>, %arg2: memref<9x4x256xbf16, #tpu.memory_space<vmem>>, %arg3: memref<1x256xf32, #tpu.memory_space<vmem>>, %arg4: memref<128x128xf32, #tpu.memory_space<vmem>>, %arg5: memref<1x128xf32, #tpu.memory_space<vmem>>, %arg6: memref<128x256xf32, #tpu.memory_space<vmem>>, %arg7: memref<1x64x128xbf16, #tpu.memory_space<vmem>>) attributes {dimension_semantics = [#tpu.dimension_semantics<parallel>], iteration_bounds = array<i64: 2>, scalar_prefetch = 0 : i64, scratch_operands = 0 : i64, tpu.core_type = #tpu.core_type<tc>, window_params = [{transform_indices = @transform_0, window_bounds = array<i64: 1, 4, 4, 64, 4>}, {pipeline_mode = #tpu.pipeline_mode<synchronous>, transform_indices = @transform_1, window_bounds = array<i64: 9, 4, 256>}, {pipeline_mode = #tpu.pipeline_mode<synchronous>, transform_indices = @transform_2, window_bounds = array<i64: 1, 256>}, {pipeline_mode = #tpu.pipeline_mode<synchronous>, transform_indices = @transform_3, window_bounds = array<i64: 128, 128>}, {pipeline_mode = #tpu.pipeline_mode<synchronous>, transform_indices = @transform_4, window_bounds = array<i64: 1, 128>}, {pipeline_mode = #tpu.pipeline_mode<synchronous>, transform_indices = @transform_5, window_bounds = array<i64: 128, 256>}, {transform_indices = @transform_6, window_bounds = array<i64: 1, 64, 128>}]} {
    %c0 = arith.constant 0 : index
    %c0_0 = arith.constant 0 : index
    %c0_1 = arith.constant 0 : index
    %c0_2 = arith.constant 0 : index
    %c0_3 = arith.constant 0 : index
    %0 = vector.load %arg1[%c0, %c0_0, %c0_1, %c0_2, %c0_3] : memref<1x4x4x64x4xbf16, #tpu.memory_space<vmem>>, vector<1x2x2x64x4xbf16>
    %1 = vector.shape_cast %0 : vector<1x2x2x64x4xbf16> to vector<256x4xbf16>
    %c0_4 = arith.constant 0 : index
    %c0_5 = arith.constant 0 : index
    %c0_6 = arith.constant 0 : index
    %2 = vector.load %arg2[%c0_4, %c0_5, %c0_6] : memref<9x4x256xbf16, #tpu.memory_space<vmem>>, vector<1x4x256xbf16>
    %3 = vector.shape_cast %2 : vector<1x4x256xbf16> to vector<4x256xbf16>
    %cst = arith.constant dense<0.000000e+00> : vector<256x256xf32>
    %4 = tpu.matmul %1, %3, %cst {dimension_numbers = #tpu.dot_dimension_numbers<[1], [0], [0], [1], [0, 0, 1, 1], [], []>} : vector<256x4xbf16>, vector<4x256xbf16>, vector<256x256xf32> -> vector<256x256xf32>
    %c0_7 = arith.constant 0 : index
    %c0_8 = arith.constant 0 : index
    %c1 = arith.constant 1 : index
    %c0_9 = arith.constant 0 : index
    %c0_10 = arith.constant 0 : index
    %5 = vector.load %arg1[%c0_7, %c0_8, %c1, %c0_9, %c0_10] : memref<1x4x4x64x4xbf16, #tpu.memory_space<vmem>>, vector<1x2x2x64x4xbf16>
    %6 = vector.shape_cast %5 : vector<1x2x2x64x4xbf16> to vector<256x4xbf16>
    %c1_11 = arith.constant 1 : index
    %c0_12 = arith.constant 0 : index
    %c0_13 = arith.constant 0 : index
    %7 = vector.load %arg2[%c1_11, %c0_12, %c0_13] : memref<9x4x256xbf16, #tpu.memory_space<vmem>>, vector<1x4x256xbf16>
    %8 = vector.shape_cast %7 : vector<1x4x256xbf16> to vector<4x256xbf16>
    %cst_14 = arith.constant dense<0.000000e+00> : vector<256x256xf32>
    %9 = tpu.matmul %6, %8, %cst_14 {dimension_numbers = #tpu.dot_dimension_numbers<[1], [0], [0], [1], [0, 0, 1, 1], [], []>} : vector<256x4xbf16>, vector<4x256xbf16>, vector<256x256xf32> -> vector<256x256xf32>
    %10 = arith.addf %4, %9 : vector<256x256xf32>
    %c0_15 = arith.constant 0 : index
    %c0_16 = arith.constant 0 : index
    %c2 = arith.constant 2 : index
    %c0_17 = arith.constant 0 : index
    %c0_18 = arith.constant 0 : index
    %11 = vector.load %arg1[%c0_15, %c0_16, %c2, %c0_17, %c0_18] : memref<1x4x4x64x4xbf16, #tpu.memory_space<vmem>>, vector<1x2x2x64x4xbf16>
    %12 = vector.shape_cast %11 : vector<1x2x2x64x4xbf16> to vector<256x4xbf16>
    %c2_19 = arith.constant 2 : index
    %c0_20 = arith.constant 0 : index
    %c0_21 = arith.constant 0 : index
    %13 = vector.load %arg2[%c2_19, %c0_20, %c0_21] : memref<9x4x256xbf16, #tpu.memory_space<vmem>>, vector<1x4x256xbf16>
    %14 = vector.shape_cast %13 : vector<1x4x256xbf16> to vector<4x256xbf16>
    %cst_22 = arith.constant dense<0.000000e+00> : vector<256x256xf32>
    %15 = tpu.matmul %12, %14, %cst_22 {dimension_numbers = #tpu.dot_dimension_numbers<[1], [0], [0], [1], [0, 0, 1, 1], [], []>} : vector<256x4xbf16>, vector<4x256xbf16>, vector<256x256xf32> -> vector<256x256xf32>
    %16 = arith.addf %10, %15 : vector<256x256xf32>
    %c0_23 = arith.constant 0 : index
    %c1_24 = arith.constant 1 : index
    %c0_25 = arith.constant 0 : index
    %c0_26 = arith.constant 0 : index
    %c0_27 = arith.constant 0 : index
    %17 = vector.load %arg1[%c0_23, %c1_24, %c0_25, %c0_26, %c0_27] : memref<1x4x4x64x4xbf16, #tpu.memory_space<vmem>>, vector<1x2x2x64x4xbf16>
    %18 = vector.shape_cast %17 : vector<1x2x2x64x4xbf16> to vector<256x4xbf16>
    %c3 = arith.constant 3 : index
    %c0_28 = arith.constant 0 : index
    %c0_29 = arith.constant 0 : index
    %19 = vector.load %arg2[%c3, %c0_28, %c0_29] : memref<9x4x256xbf16, #tpu.memory_space<vmem>>, vector<1x4x256xbf16>
    %20 = vector.shape_cast %19 : vector<1x4x256xbf16> to vector<4x256xbf16>
    %cst_30 = arith.constant dense<0.000000e+00> : vector<256x256xf32>
    %21 = tpu.matmul %18, %20, %cst_30 {dimension_numbers = #tpu.dot_dimension_numbers<[1], [0], [0], [1], [0, 0, 1, 1], [], []>} : vector<256x4xbf16>, vector<4x256xbf16>, vector<256x256xf32> -> vector<256x256xf32>
    %22 = arith.addf %16, %21 : vector<256x256xf32>
    %c0_31 = arith.constant 0 : index
    %c1_32 = arith.constant 1 : index
    %c1_33 = arith.constant 1 : index
    %c0_34 = arith.constant 0 : index
    %c0_35 = arith.constant 0 : index
    %23 = vector.load %arg1[%c0_31, %c1_32, %c1_33, %c0_34, %c0_35] : memref<1x4x4x64x4xbf16, #tpu.memory_space<vmem>>, vector<1x2x2x64x4xbf16>
    %24 = vector.shape_cast %23 : vector<1x2x2x64x4xbf16> to vector<256x4xbf16>
    %c4 = arith.constant 4 : index
    %c0_36 = arith.constant 0 : index
    %c0_37 = arith.constant 0 : index
    %25 = vector.load %arg2[%c4, %c0_36, %c0_37] : memref<9x4x256xbf16, #tpu.memory_space<vmem>>, vector<1x4x256xbf16>
    %26 = vector.shape_cast %25 : vector<1x4x256xbf16> to vector<4x256xbf16>
    %cst_38 = arith.constant dense<0.000000e+00> : vector<256x256xf32>
    %27 = tpu.matmul %24, %26, %cst_38 {dimension_numbers = #tpu.dot_dimension_numbers<[1], [0], [0], [1], [0, 0, 1, 1], [], []>} : vector<256x4xbf16>, vector<4x256xbf16>, vector<256x256xf32> -> vector<256x256xf32>
    %28 = arith.addf %22, %27 : vector<256x256xf32>
    %c0_39 = arith.constant 0 : index
    %c1_40 = arith.constant 1 : index
    %c2_41 = arith.constant 2 : index
    %c0_42 = arith.constant 0 : index
    %c0_43 = arith.constant 0 : index
    %29 = vector.load %arg1[%c0_39, %c1_40, %c2_41, %c0_42, %c0_43] : memref<1x4x4x64x4xbf16, #tpu.memory_space<vmem>>, vector<1x2x2x64x4xbf16>
    %30 = vector.shape_cast %29 : vector<1x2x2x64x4xbf16> to vector<256x4xbf16>
    %c5 = arith.constant 5 : index
    %c0_44 = arith.constant 0 : index
    %c0_45 = arith.constant 0 : index
    %31 = vector.load %arg2[%c5, %c0_44, %c0_45] : memref<9x4x256xbf16, #tpu.memory_space<vmem>>, vector<1x4x256xbf16>
    %32 = vector.shape_cast %31 : vector<1x4x256xbf16> to vector<4x256xbf16>
    %cst_46 = arith.constant dense<0.000000e+00> : vector<256x256xf32>
    %33 = tpu.matmul %30, %32, %cst_46 {dimension_numbers = #tpu.dot_dimension_numbers<[1], [0], [0], [1], [0, 0, 1, 1], [], []>} : vector<256x4xbf16>, vector<4x256xbf16>, vector<256x256xf32> -> vector<256x256xf32>
    %34 = arith.addf %28, %33 : vector<256x256xf32>
    %c0_47 = arith.constant 0 : index
    %c2_48 = arith.constant 2 : index
    %c0_49 = arith.constant 0 : index
    %c0_50 = arith.constant 0 : index
    %c0_51 = arith.constant 0 : index
    %35 = vector.load %arg1[%c0_47, %c2_48, %c0_49, %c0_50, %c0_51] : memref<1x4x4x64x4xbf16, #tpu.memory_space<vmem>>, vector<1x2x2x64x4xbf16>
    %36 = vector.shape_cast %35 : vector<1x2x2x64x4xbf16> to vector<256x4xbf16>
    %c6 = arith.constant 6 : index
    %c0_52 = arith.constant 0 : index
    %c0_53 = arith.constant 0 : index
    %37 = vector.load %arg2[%c6, %c0_52, %c0_53] : memref<9x4x256xbf16, #tpu.memory_space<vmem>>, vector<1x4x256xbf16>
    %38 = vector.shape_cast %37 : vector<1x4x256xbf16> to vector<4x256xbf16>
    %cst_54 = arith.constant dense<0.000000e+00> : vector<256x256xf32>
    %39 = tpu.matmul %36, %38, %cst_54 {dimension_numbers = #tpu.dot_dimension_numbers<[1], [0], [0], [1], [0, 0, 1, 1], [], []>} : vector<256x4xbf16>, vector<4x256xbf16>, vector<256x256xf32> -> vector<256x256xf32>
    %40 = arith.addf %34, %39 : vector<256x256xf32>
    %c0_55 = arith.constant 0 : index
    %c2_56 = arith.constant 2 : index
    %c1_57 = arith.constant 1 : index
    %c0_58 = arith.constant 0 : index
    %c0_59 = arith.constant 0 : index
    %41 = vector.load %arg1[%c0_55, %c2_56, %c1_57, %c0_58, %c0_59] : memref<1x4x4x64x4xbf16, #tpu.memory_space<vmem>>, vector<1x2x2x64x4xbf16>
    %42 = vector.shape_cast %41 : vector<1x2x2x64x4xbf16> to vector<256x4xbf16>
    %c7 = arith.constant 7 : index
    %c0_60 = arith.constant 0 : index
    %c0_61 = arith.constant 0 : index
    %43 = vector.load %arg2[%c7, %c0_60, %c0_61] : memref<9x4x256xbf16, #tpu.memory_space<vmem>>, vector<1x4x256xbf16>
    %44 = vector.shape_cast %43 : vector<1x4x256xbf16> to vector<4x256xbf16>
    %cst_62 = arith.constant dense<0.000000e+00> : vector<256x256xf32>
    %45 = tpu.matmul %42, %44, %cst_62 {dimension_numbers = #tpu.dot_dimension_numbers<[1], [0], [0], [1], [0, 0, 1, 1], [], []>} : vector<256x4xbf16>, vector<4x256xbf16>, vector<256x256xf32> -> vector<256x256xf32>
    %46 = arith.addf %40, %45 : vector<256x256xf32>
    %c0_63 = arith.constant 0 : index
    %c2_64 = arith.constant 2 : index
    %c2_65 = arith.constant 2 : index
    %c0_66 = arith.constant 0 : index
    %c0_67 = arith.constant 0 : index
    %47 = vector.load %arg1[%c0_63, %c2_64, %c2_65, %c0_66, %c0_67] : memref<1x4x4x64x4xbf16, #tpu.memory_space<vmem>>, vector<1x2x2x64x4xbf16>
    %48 = vector.shape_cast %47 : vector<1x2x2x64x4xbf16> to vector<256x4xbf16>
    %c8 = arith.constant 8 : index
    %c0_68 = arith.constant 0 : index
    %c0_69 = arith.constant 0 : index
    %49 = vector.load %arg2[%c8, %c0_68, %c0_69] : memref<9x4x256xbf16, #tpu.memory_space<vmem>>, vector<1x4x256xbf16>
    %50 = vector.shape_cast %49 : vector<1x4x256xbf16> to vector<4x256xbf16>
    %cst_70 = arith.constant dense<0.000000e+00> : vector<256x256xf32>
    %51 = tpu.matmul %48, %50, %cst_70 {dimension_numbers = #tpu.dot_dimension_numbers<[1], [0], [0], [1], [0, 0, 1, 1], [], []>} : vector<256x4xbf16>, vector<4x256xbf16>, vector<256x256xf32> -> vector<256x256xf32>
    %52 = arith.addf %46, %51 : vector<256x256xf32>
    %c0_71 = arith.constant 0 : index
    %c0_72 = arith.constant 0 : index
    %53 = vector.load %arg3[%c0_71, %c0_72] : memref<1x256xf32, #tpu.memory_space<vmem>>, vector<1x256xf32>
    %54 = vector.broadcast %53 : vector<1x256xf32> to vector<256x256xf32>
    %55 = arith.addf %52, %54 : vector<256x256xf32>
    %cst_73 = arith.constant 0.000000e+00 : f32
    %56 = vector.broadcast %cst_73 : f32 to vector<256x256xf32>
    %57 = arith.maximumf %55, %56 : vector<256x256xf32>
    %58 = vector.shape_cast %57 : vector<256x256xf32> to vector<1x256x256xf32>
    %cst_74 = arith.constant dense<0.000000e+00> : vector<1x256xf32>
    %59 = vector.multi_reduction <add>, %58, %cst_74 [1] : vector<1x256x256xf32> to vector<1x256xf32>
    %cst_75 = arith.constant 3.906250e-03 : f32
    %60 = vector.broadcast %cst_75 : f32 to vector<1x256xf32>
    %61 = arith.mulf %59, %60 : vector<1x256xf32>
    %62 = vector.extract_strided_slice %61 {offsets = [0, 0], sizes = [1, 128], strides = [1, 1]} : vector<1x256xf32> to vector<1x128xf32>
    %63 = vector.extract_strided_slice %61 {offsets = [0, 128], sizes = [1, 128], strides = [1, 1]} : vector<1x256xf32> to vector<1x128xf32>
    %64 = arith.addf %62, %63 : vector<1x128xf32>
    %c0_76 = arith.constant 0 : index
    %c0_77 = arith.constant 0 : index
    %65 = vector.load %arg4[%c0_76, %c0_77] : memref<128x128xf32, #tpu.memory_space<vmem>>, vector<128x128xf32>
    %cst_78 = arith.constant dense<0.000000e+00> : vector<1x128xf32>
    %66 = tpu.matmul %64, %65, %cst_78 {dimension_numbers = #tpu.dot_dimension_numbers<[1], [0], [0], [1], [0, 0, 1, 1], [], []>} : vector<1x128xf32>, vector<128x128xf32>, vector<1x128xf32> -> vector<1x128xf32>
    %c0_79 = arith.constant 0 : index
    %c0_80 = arith.constant 0 : index
    %67 = vector.load %arg5[%c0_79, %c0_80] : memref<1x128xf32, #tpu.memory_space<vmem>>, vector<1x128xf32>
    %68 = arith.addf %66, %67 : vector<1x128xf32>
    %c0_81 = arith.constant 0 : index
    %c0_82 = arith.constant 0 : index
    %69 = vector.load %arg6[%c0_81, %c0_82] : memref<128x256xf32, #tpu.memory_space<vmem>>, vector<128x256xf32>
    %cst_83 = arith.constant dense<0.000000e+00> : vector<1x256xf32>
    %70 = tpu.matmul %68, %69, %cst_83 {dimension_numbers = #tpu.dot_dimension_numbers<[1], [0], [0], [1], [0, 0, 1, 1], [], []>} : vector<1x128xf32>, vector<128x256xf32>, vector<1x256xf32> -> vector<1x256xf32>
    %71 = vector.extract_strided_slice %70 {offsets = [0, 0], sizes = [1, 128], strides = [1, 1]} : vector<1x256xf32> to vector<1x128xf32>
    %72 = vector.extract_strided_slice %70 {offsets = [0, 128], sizes = [1, 128], strides = [1, 1]} : vector<1x256xf32> to vector<1x128xf32>
    %73 = arith.maximumf %71, %72 : vector<1x128xf32>
    %74 = arith.subf %71, %73 : vector<1x128xf32>
    %75 = math.exp %74 : vector<1x128xf32>
    %76 = arith.subf %72, %73 : vector<1x128xf32>
    %77 = math.exp %76 : vector<1x128xf32>
    %78 = arith.addf %75, %77 : vector<1x128xf32>
    %79 = tpu.reciprocal %78 : vector<1x128xf32> -> vector<1x128xf32>
    %80 = arith.mulf %75, %79 : vector<1x128xf32>
    %81 = vector.shape_cast %80 : vector<1x128xf32> to vector<1x1x128xf32>
    %82 = vector.extract_strided_slice %58 {offsets = [0, 0, 0], sizes = [1, 256, 128], strides = [1, 1, 1]} : vector<1x256x256xf32> to vector<1x256x128xf32>
    %83 = vector.broadcast %81 : vector<1x1x128xf32> to vector<1x256x128xf32>
    %84 = arith.mulf %83, %82 : vector<1x256x128xf32>
    %85 = arith.mulf %77, %79 : vector<1x128xf32>
    %86 = vector.shape_cast %85 : vector<1x128xf32> to vector<1x1x128xf32>
    %87 = vector.extract_strided_slice %58 {offsets = [0, 0, 128], sizes = [1, 256, 128], strides = [1, 1, 1]} : vector<1x256x256xf32> to vector<1x256x128xf32>
    %88 = vector.broadcast %86 : vector<1x1x128xf32> to vector<1x256x128xf32>
    %89 = arith.mulf %88, %87 : vector<1x256x128xf32>
    %90 = arith.addf %84, %89 : vector<1x256x128xf32>
    %91 = vector.shape_cast %90 : vector<1x256x128xf32> to vector<1x4x64x128xf32>
    %92 = vector.extract_strided_slice %91 {offsets = [0, 0, 0, 0], sizes = [1, 1, 64, 128], strides = [1, 1, 1, 1]} : vector<1x4x64x128xf32> to vector<1x1x64x128xf32>
    %93 = vector.shape_cast %92 : vector<1x1x64x128xf32> to vector<1x64x128xf32>
    %94 = vector.extract_strided_slice %91 {offsets = [0, 1, 0, 0], sizes = [1, 1, 64, 128], strides = [1, 1, 1, 1]} : vector<1x4x64x128xf32> to vector<1x1x64x128xf32>
    %95 = vector.shape_cast %94 : vector<1x1x64x128xf32> to vector<1x64x128xf32>
    %96 = arith.maximumf %93, %95 : vector<1x64x128xf32>
    %97 = vector.extract_strided_slice %91 {offsets = [0, 2, 0, 0], sizes = [1, 1, 64, 128], strides = [1, 1, 1, 1]} : vector<1x4x64x128xf32> to vector<1x1x64x128xf32>
    %98 = vector.shape_cast %97 : vector<1x1x64x128xf32> to vector<1x64x128xf32>
    %99 = arith.maximumf %96, %98 : vector<1x64x128xf32>
    %100 = vector.extract_strided_slice %91 {offsets = [0, 3, 0, 0], sizes = [1, 1, 64, 128], strides = [1, 1, 1, 1]} : vector<1x4x64x128xf32> to vector<1x1x64x128xf32>
    %101 = vector.shape_cast %100 : vector<1x1x64x128xf32> to vector<1x64x128xf32>
    %102 = arith.maximumf %99, %101 : vector<1x64x128xf32>
    %103 = arith.truncf %102 : vector<1x64x128xf32> to vector<1x64x128xbf16>
    %c0_84 = arith.constant 0 : index
    %c0_85 = arith.constant 0 : index
    %c0_86 = arith.constant 0 : index
    %104 = vector.load %arg7[%c0_84, %c0_85, %c0_86] : memref<1x64x128xbf16, #tpu.memory_space<vmem>>, vector<1x64x128xbf16>
    tpu.vector_store %arg7[%c0_84, %c0_85, %c0_86], %103 {strides = array<i32>} : memref<1x64x128xbf16, #tpu.memory_space<vmem>>, vector<1x64x128xbf16>,
    return
  }
  func.func @transform_0(%arg0: i32) -> (i32, i32, i32, i32, i32) {
    %c0_i32 = arith.constant 0 : i32
    %c0_i32_0 = arith.constant 0 : i32
    %c0_i32_1 = arith.constant 0 : i32
    %c0_i32_2 = arith.constant 0 : i32
    %c0_i32_3 = arith.constant 0 : i32
    return %arg0, %c0_i32, %c0_i32_0, %c0_i32_1, %c0_i32_2 : i32, i32, i32, i32, i32
  }
  func.func @transform_1(%arg0: i32) -> (i32, i32, i32) {
    %c0_i32 = arith.constant 0 : i32
    %c0_i32_0 = arith.constant 0 : i32
    %c0_i32_1 = arith.constant 0 : i32
    %c0_i32_2 = arith.constant 0 : i32
    return %c0_i32, %c0_i32_0, %c0_i32_1 : i32, i32, i32
  }
  func.func @transform_2(%arg0: i32) -> (i32, i32) {
    %c0_i32 = arith.constant 0 : i32
    %c0_i32_0 = arith.constant 0 : i32
    %c0_i32_1 = arith.constant 0 : i32
    return %c0_i32, %c0_i32_0 : i32, i32
  }
  func.func @transform_3(%arg0: i32) -> (i32, i32) {
    %c0_i32 = arith.constant 0 : i32
    %c0_i32_0 = arith.constant 0 : i32
    %c0_i32_1 = arith.constant 0 : i32
    return %c0_i32, %c0_i32_0 : i32, i32
  }
  func.func @transform_4(%arg0: i32) -> (i32, i32) {
    %c0_i32 = arith.constant 0 : i32
    %c0_i32_0 = arith.constant 0 : i32
    %c0_i32_1 = arith.constant 0 : i32
    return %c0_i32, %c0_i32_0 : i32, i32
  }
  func.func @transform_5(%arg0: i32) -> (i32, i32) {
    %c0_i32 = arith.constant 0 : i32
    %c0_i32_0 = arith.constant 0 : i32
    %c0_i32_1 = arith.constant 0 : i32
    return %c0_i32, %c0_i32_0 : i32, i32
  }
  func.func @transform_6(%arg0: i32) -> (i32, i32, i32) {
    %c0_i32 = arith.constant 0 : i32
    %c0_i32_0 = arith.constant 0 : i32
    %c0_i32_1 = arith.constant 0 : i32
    return %arg0, %c0_i32, %c0_i32_0 : i32, i32, i32
  }
}

</mosaic_0001>

<llo_original>
// kernel: tpu_custom_call.1
$region0: #{tpu_custom_call.1}
  #allocation0 [shape = 'u32[]', space=smem, size = 0x4, offset = 0x4, fixed_abs, tag = 'smem constant byte address 0x4 - core index']
  #allocation1 [shape = 'u32[144,128]{1,0:T(1,128)}', space=vmem, size = 0x12000, scoped, tag = 'internal scratch']
  %s0 = inlined_call_operand.vmem [shape: bf16[2,4,4,64,4], index: 0, kind: input, shape index: {}]
  %s1 = inlined_call_operand.vmem [shape: bf16[9,4,256], index: 1, kind: input, shape index: {}]
  %s2 = inlined_call_operand.vmem [shape: f32[1,256], index: 2, kind: input, shape index: {}]
  %s3 = inlined_call_operand.vmem [shape: f32[128,128], index: 3, kind: input, shape index: {}]
  %s4 = inlined_call_operand.vmem [shape: f32[1,128], index: 4, kind: input, shape index: {}]
  %s5 = inlined_call_operand.vmem [shape: f32[128,256], index: 5, kind: input, shape index: {}]
  %s6 = inlined_call_operand.hbm [shape: bf16[2,64,128], index: 6, kind: output, shape index: {}]
  %s7 = sld [smem:[#allocation0]]
  $region57: #{tpu_custom_call.1} parent=0
    _
  %s9 = ssub.s32 1, %s7
  %s10 = scalar_select 0, %s9, %s7
  $region1: #{tpu_custom_call.1} parent=0
    #allocation2 [shape = 'u8[32768]{0}', space=vmem, size = 0x8000, scoped, tag = 'output window, operand 0']
    #allocation3 [shape = 's32[2]{0}', space=sflag, size = 0x8, scoped, tag = 'scoped memory for tpu_custom_call.1']
    %11 = vsyncpa [#allocation3], 0
    %s12 = scalar_lea.sflag [#allocation3], 1
    %13 = vsyncpa %s12, 0
    loop: start=0, step=1, limit=4
    $region2: #{tpu_custom_call.1} parent=1 // loop_pre_header
      _
    $region3: #{tpu_custom_call.1} parent=1 // loop_header
      %s15 = sphi 0, %s19
      %p16 = scmp.ge.s32.totalorder %s15, 4
      %s25 = sphi 0, %s27
      %s28 = sphi 0, %s25
      %s29 = sphi 0, %s28
      %s45 = sphi 0, %s29
      %s49 = sphi 0, %s49
      %s51 = sphi 0, %s49
      %s52 = sphi 0, %s51
      %s66 = sphi 0, %s52
      %s70 = sphi 0, %s70
      %s72 = sphi 0, %s70
      %s73 = sphi 0, %s72
      %s87 = sphi 0, %s73
      %s91 = sphi 0, %s91
      %s93 = sphi 0, %s91
      %s94 = sphi 0, %s93
      %s108 = sphi 0, %s94
      %s112 = sphi 0, %s112
      %s114 = sphi 0, %s112
      %s115 = sphi 0, %s114
      %s129 = sphi 0, %s115
      %s133 = sphi 0, %s133
      %s135 = sphi 0, %s133
      %s136 = sphi 0, %s135
      %s150 = sphi 0, %s136
      %s156 = sphi 0, %s158
      %s159 = sphi 0, %s156
      %s160 = sphi 0, %s159
      %s176 = sphi 0, %s160
    $region4: #{tpu_custom_call.1} parent=1 // loop_header_branch
      %18 = sbr.rel (%p16) target = $region8
    $region5: #{tpu_custom_call.1} parent=1 // loop_body
      %s20 = ssub.s32 %s15, 1
      %s21 = ssub.s32 %s15, 2
      %s22 = sadd.s32 %s15, 1
      %s23 = ssub.s32 %s15, %s22
      %p24 = scmp.eq.s32.totalorder %s23, 0
      %s26 = sadd.s32 %s25, 1
      %s27 = scalar_select %p24, %s25, %s26
      %p30 = pneg %p24
      %p31 = scmp.eq.s32.totalorder %s15, 1
      %p32 = por %p30, %p31
      %p33 = scmp.ne.s32.totalorder %s25, %s28
      %p34 = scmp.eq.s32.totalorder %s15, 0
      %p35 = por %p33, %p34
      %p36 = scmp.ne.s32.totalorder %s25, %s28
      %p37 = scmp.eq.s32.totalorder %s20, 1
      %p38 = por %p36, %p37
      %p39 = scmp.ne.s32.totalorder %s28, %s29
      %p40 = scmp.eq.s32.totalorder %s20, 0
      %p41 = por %p39, %p40
      %p42 = scmp.ne.s32.totalorder %s28, %s29
      %p43 = scmp.eq.s32.totalorder %s21, 1
      %p44 = por %p42, %p43
      %p46 = scmp.ne.s32.totalorder %s29, %s45
      %p47 = scmp.eq.s32.totalorder %s21, 0
      %p48 = por %p46, %p47
      %s50 = sadd.s32 %s49, 1
      %p53 = scmp.eq.s32.totalorder %s15, 1
      %p54 = scmp.ne.s32.totalorder %s49, %s51
      %p55 = scmp.eq.s32.totalorder %s15, 0
      %p56 = por %p54, %p55
      %p57 = scmp.ne.s32.totalorder %s49, %s51
      %p58 = scmp.eq.s32.totalorder %s20, 1
      %p59 = por %p57, %p58
      %p60 = scmp.ne.s32.totalorder %s51, %s52
      %p61 = scmp.eq.s32.totalorder %s20, 0
      %p62 = por %p60, %p61
      %p63 = scmp.ne.s32.totalorder %s51, %s52
      %p64 = scmp.eq.s32.totalorder %s21, 1
      %p65 = por %p63, %p64
      %p67 = scmp.ne.s32.totalorder %s52, %s66
      %p68 = scmp.eq.s32.totalorder %s21, 0
      %p69 = por %p67, %p68
      %s71 = sadd.s32 %s70, 1
      %p74 = scmp.eq.s32.totalorder %s15, 1
      %p75 = scmp.ne.s32.totalorder %s70, %s72
      %p76 = scmp.eq.s32.totalorder %s15, 0
      %p77 = por %p75, %p76
      %p78 = scmp.ne.s32.totalorder %s70, %s72
      %p79 = scmp.eq.s32.totalorder %s20, 1
      %p80 = por %p78, %p79
      %p81 = scmp.ne.s32.totalorder %s72, %s73
      %p82 = scmp.eq.s32.totalorder %s20, 0
      %p83 = por %p81, %p82
      %p84 = scmp.ne.s32.totalorder %s72, %s73
      %p85 = scmp.eq.s32.totalorder %s21, 1
      %p86 = por %p84, %p85
      %p88 = scmp.ne.s32.totalorder %s73, %s87
      %p89 = scmp.eq.s32.totalorder %s21, 0
      %p90 = por %p88, %p89
      %s92 = sadd.s32 %s91, 1
      %p95 = scmp.eq.s32.totalorder %s15, 1
      %p96 = scmp.ne.s32.totalorder %s91, %s93
      %p97 = scmp.eq.s32.totalorder %s15, 0
      %p98 = por %p96, %p97
      %p99 = scmp.ne.s32.totalorder %s91, %s93
      %p100 = scmp.eq.s32.totalorder %s20, 1
      %p101 = por %p99, %p100
      %p102 = scmp.ne.s32.totalorder %s93, %s94
      %p103 = scmp.eq.s32.totalorder %s20, 0
      %p104 = por %p102, %p103
      %p105 = scmp.ne.s32.totalorder %s93, %s94
      %p106 = scmp.eq.s32.totalorder %s21, 1
      %p107 = por %p105, %p106
      %p109 = scmp.ne.s32.totalorder %s94, %s108
      %p110 = scmp.eq.s32.totalorder %s21, 0
      %p111 = por %p109, %p110
      %s113 = sadd.s32 %s112, 1
      %p116 = scmp.eq.s32.totalorder %s15, 1
      %p117 = scmp.ne.s32.totalorder %s112, %s114
      %p118 = scmp.eq.s32.totalorder %s15, 0
      %p119 = por %p117, %p118
      %p120 = scmp.ne.s32.totalorder %s112, %s114
      %p121 = scmp.eq.s32.totalorder %s20, 1
      %p122 = por %p120, %p121
      %p123 = scmp.ne.s32.totalorder %s114, %s115
      %p124 = scmp.eq.s32.totalorder %s20, 0
      %p125 = por %p123, %p124
      %p126 = scmp.ne.s32.totalorder %s114, %s115
      %p127 = scmp.eq.s32.totalorder %s21, 1
      %p128 = por %p126, %p127
      %p130 = scmp.ne.s32.totalorder %s115, %s129
      %p131 = scmp.eq.s32.totalorder %s21, 0
      %p132 = por %p130, %p131
      %s134 = sadd.s32 %s133, 1
      %p137 = scmp.eq.s32.totalorder %s15, 1
      %p138 = scmp.ne.s32.totalorder %s133, %s135
      %p139 = scmp.eq.s32.totalorder %s15, 0
      %p140 = por %p138, %p139
      %p141 = scmp.ne.s32.totalorder %s133, %s135
      %p142 = scmp.eq.s32.totalorder %s20, 1
      %p143 = por %p141, %p142
      %p144 = scmp.ne.s32.totalorder %s135, %s136
      %p145 = scmp.eq.s32.totalorder %s20, 0
      %p146 = por %p144, %p145
      %p147 = scmp.ne.s32.totalorder %s135, %s136
      %p148 = scmp.eq.s32.totalorder %s21, 1
      %p149 = por %p147, %p148
      %p151 = scmp.ne.s32.totalorder %s136, %s150
      %p152 = scmp.eq.s32.totalorder %s21, 0
      %p153 = por %p151, %p152
      %s154 = ssub.s32 %s15, %s22
      %p155 = scmp.eq.s32.totalorder %s154, 0
      %s157 = sadd.s32 %s156, 1
      %s158 = scalar_select %p155, %s156, %s157
      %p161 = pneg %p155
      %p162 = scmp.eq.s32.totalorder %s15, 1
      %p163 = por %p161, %p162
      %p164 = scmp.ne.s32.totalorder %s156, %s159
      %p165 = scmp.eq.s32.totalorder %s15, 0
      %p166 = por %p164, %p165
      %p167 = scmp.ne.s32.totalorder %s156, %s159
      %p168 = scmp.eq.s32.totalorder %s20, 1
      %p169 = por %p167, %p168
      %p170 = scmp.ne.s32.totalorder %s159, %s160
      %p171 = scmp.eq.s32.totalorder %s20, 0
      %p172 = por %p170, %p171
      %p173 = scmp.ne.s32.totalorder %s159, %s160
      %p174 = scmp.eq.s32.totalorder %s21, 1
      %p175 = por %p173, %p174
      %p177 = scmp.ne.s32.totalorder %s160, %s176
      %p178 = scmp.eq.s32.totalorder %s21, 0
      %p179 = por %p177, %p178
      %p180 = scmp.le.s32.totalorder 1, %s15
      %p181 = scmp.lt.s32.totalorder %s15, 3
      %p182 = pnand %p180, %p181
      %p183 = pneg %p182
      // Predicated region
      $region9: #{tpu_custom_call.1} parent=5 // pred_check
        _
      $region10: #{tpu_custom_call.1} parent=5 // pred_check_branch
        %185 = sbr.rel (%p182) target = $region12
      $region11: #{tpu_custom_call.1} parent=5 // pred_region
        %s186 = ssub.s32 %s15, 1
        // Predicated region
        $region13: #{tpu_custom_call.1} parent=11 // pred_check
          %p187 = pneg %p62
        $region14: #{tpu_custom_call.1} parent=11 // pred_check_branch
          %189 = sbr.rel (%p187) target = $region16
        $region15: #{tpu_custom_call.1} parent=11 // pred_region
          _
        $region16: #{tpu_custom_call.1} parent=11 // pred_fallthru
          _
        // Predicated region
        $region17: #{tpu_custom_call.1} parent=11 // pred_check
          %p190 = pneg %p83
        $region18: #{tpu_custom_call.1} parent=11 // pred_check_branch
          %192 = sbr.rel (%p190) target = $region20
        $region19: #{tpu_custom_call.1} parent=11 // pred_region
          _
        $region20: #{tpu_custom_call.1} parent=11 // pred_fallthru
          _
        // Predicated region
        $region21: #{tpu_custom_call.1} parent=11 // pred_check
          %p193 = pneg %p104
        $region22: #{tpu_custom_call.1} parent=11 // pred_check_branch
          %195 = sbr.rel (%p193) target = $region24
        $region23: #{tpu_custom_call.1} parent=11 // pred_region
          _
        $region24: #{tpu_custom_call.1} parent=11 // pred_fallthru
          _
        // Predicated region
        $region25: #{tpu_custom_call.1} parent=11 // pred_check
          %p196 = pneg %p125
        $region26: #{tpu_custom_call.1} parent=11 // pred_check_branch
          %198 = sbr.rel (%p196) target = $region28
        $region27: #{tpu_custom_call.1} parent=11 // pred_region
          _
        $region28: #{tpu_custom_call.1} parent=11 // pred_fallthru
          _
        // Predicated region
        $region29: #{tpu_custom_call.1} parent=11 // pred_check
          %p199 = pneg %p146
        $region30: #{tpu_custom_call.1} parent=11 // pred_check_branch
          %201 = sbr.rel (%p199) target = $region32
        $region31: #{tpu_custom_call.1} parent=11 // pred_region
          _
        $region32: #{tpu_custom_call.1} parent=11 // pred_fallthru
          _
      $region12: #{tpu_custom_call.1} parent=5 // pred_fallthru
        _
      %p202 = scmp.lt.s32.totalorder %s15, 2
      // Predicated region
      $region33: #{tpu_custom_call.1} parent=5 // pred_check
        %p203 = pneg %p202
      $region34: #{tpu_custom_call.1} parent=5 // pred_check_branch
        %205 = sbr.rel (%p203) target = $region36
      $region35: #{tpu_custom_call.1} parent=5 // pred_region
        // Predicated region
        $region37: #{tpu_custom_call.1} parent=35 // pred_check
          %p206 = pneg %p35
        $region38: #{tpu_custom_call.1} parent=35 // pred_check_branch
          %208 = sbr.rel (%p206) target = $region40
        $region39: #{tpu_custom_call.1} parent=35 // pred_region
          %p209 = scmp.lt.s32.totalorder %s15, 1
          %s210 = scalar_select %p209, %s15, 1
          %s211 = smul.addr %s210, 128
          %s212 = smul.addr %s211, 4
          %s213 = scalar_lea.vmem %s0, %s212
        $region40: #{tpu_custom_call.1} parent=35 // pred_fallthru
          _
      $region36: #{tpu_custom_call.1} parent=5 // pred_fallthru
        _
      %p214 = scmp.le.s32.totalorder 1, %s15
      %p215 = scmp.lt.s32.totalorder %s15, 3
      %p216 = pnand %p214, %p215
      %p217 = pneg %p216
      // Predicated region
      $region41: #{tpu_custom_call.1} parent=5 // pred_check
        _
      $region42: #{tpu_custom_call.1} parent=5 // pred_check_branch
        %219 = sbr.rel (%p216) target = $region44
      $region43: #{tpu_custom_call.1} parent=5 // pred_region
        %s220 = ssub.s32 %s15, 1
        %p221 = scmp.lt.s32.totalorder %s20, 1
        %s222 = scalar_select %p221, %s20, 1
        %s223 = smul.addr %s222, 128
        %s224 = smul.addr %s223, 4
        %s225 = scalar_lea.vmem %s0, %s224
        %p226 = pneg %p41
        %p227 = pneg %p38
        %p228 = pneg %p62
        %p229 = pneg %p59
        %p230 = pneg %p83
        %p231 = pneg %p80
        %p232 = pneg %p104
        %p233 = pneg %p101
        %p234 = pneg %p125
        %p235 = pneg %p122
        %p236 = pneg %p146
        %p237 = pneg %p143
        %p238 = pneg %p172
        %p239 = pneg %p169
        %s240 = sand.u32 %s159, 1
        %s241 = scalar_lea.sflag [#allocation3], %s240
        %s242 = sand.u32 %s159, 1
        %s243 = smul.addr %s242, 32
        %s244 = scalar_lea.vmem [#allocation2], %s243
        %p245 = scmp.lt.s32.totalorder %s20, 1
        %s246 = scalar_select %p245, %s20, 1
        %s247 = smul.addr %s246, 128
        %s248 = smul.addr %s247, 4
        %s249 = scalar_lea.vmem %s0, %s248
        %v251 = vld [vmem:[%s249] sm:$0xf]
        %v252 = vld [vmem:[%s249 + $0x4] sm:$0xf]
        %v253 = vld [vmem:[%s249 + $0x8] sm:$0xf]
        %v254 = vld [vmem:[%s249 + $0xc] sm:$0xf]
        %v255 = vld [vmem:[%s249 + $0x10] sm:$0xf]
        %v256 = vld [vmem:[%s249 + $0x14] sm:$0xf]
        %v257 = vld [vmem:[%s249 + $0x18] sm:$0xf]
        %v258 = vld [vmem:[%s249 + $0x1c] sm:$0xf]
        %v259 = vld [vmem:[%s249 + $0x20] sm:$0xf]
        %v260 = vld [vmem:[%s249 + $0x24] sm:$0xf]
        %v261 = vld [vmem:[%s249 + $0x28] sm:$0xf]
        %v262 = vld [vmem:[%s249 + $0x2c] sm:$0xf]
        %v263 = vld [vmem:[%s249 + $0x30] sm:$0xf]
        %v264 = vld [vmem:[%s249 + $0x34] sm:$0xf]
        %v265 = vld [vmem:[%s249 + $0x38] sm:$0xf]
        %v266 = vld [vmem:[%s249 + $0x3c] sm:$0xf]
        %v267 = vld [vmem:[%s249 + $0x80] sm:$0xf]
        %v268 = vld [vmem:[%s249 + $0x84] sm:$0xf]
        %v269 = vld [vmem:[%s249 + $0x88] sm:$0xf]
        %v270 = vld [vmem:[%s249 + $0x8c] sm:$0xf]
        %v271 = vld [vmem:[%s249 + $0x90] sm:$0xf]
        %v272 = vld [vmem:[%s249 + $0x94] sm:$0xf]
        %v273 = vld [vmem:[%s249 + $0x98] sm:$0xf]
        %v274 = vld [vmem:[%s249 + $0x9c] sm:$0xf]
        %v275 = vld [vmem:[%s249 + $0xa0] sm:$0xf]
        %v276 = vld [vmem:[%s249 + $0xa4] sm:$0xf]
        %v277 = vld [vmem:[%s249 + $0xa8] sm:$0xf]
        %v278 = vld [vmem:[%s249 + $0xac] sm:$0xf]
        %v279 = vld [vmem:[%s249 + $0xb0] sm:$0xf]
        %v280 = vld [vmem:[%s249 + $0xb4] sm:$0xf]
        %v281 = vld [vmem:[%s249 + $0xb8] sm:$0xf]
        %v282 = vld [vmem:[%s249 + $0xbc] sm:$0xf]
        %v283 = vld [vmem:[%s1] sm:$0xf]
        %s284 = scalar_lea.vmem %s249, 32
        %v285 = vld [vmem:[%s284] sm:$0xf]
        %v286 = vld [vmem:[%s284 + $0x4] sm:$0xf]
        %v287 = vld [vmem:[%s284 + $0x8] sm:$0xf]
        %v288 = vld [vmem:[%s284 + $0xc] sm:$0xf]
        %v289 = vld [vmem:[%s284 + $0x10] sm:$0xf]
        %v290 = vld [vmem:[%s284 + $0x14] sm:$0xf]
        %v291 = vld [vmem:[%s284 + $0x18] sm:$0xf]
        %v292 = vld [vmem:[%s284 + $0x1c] sm:$0xf]
        %v293 = vld [vmem:[%s284 + $0x20] sm:$0xf]
        %v294 = vld [vmem:[%s284 + $0x24] sm:$0xf]
        %v295 = vld [vmem:[%s284 + $0x28] sm:$0xf]
        %v296 = vld [vmem:[%s284 + $0x2c] sm:$0xf]
        %v297 = vld [vmem:[%s284 + $0x30] sm:$0xf]
        %v298 = vld [vmem:[%s284 + $0x34] sm:$0xf]
        %v299 = vld [vmem:[%s284 + $0x38] sm:$0xf]
        %v300 = vld [vmem:[%s284 + $0x3c] sm:$0xf]
        %v301 = vld [vmem:[%s284 + $0x80] sm:$0xf]
        %v302 = vld [vmem:[%s284 + $0x84] sm:$0xf]
        %v303 = vld [vmem:[%s284 + $0x88] sm:$0xf]
        %v304 = vld [vmem:[%s284 + $0x8c] sm:$0xf]
        %v305 = vld [vmem:[%s284 + $0x90] sm:$0xf]
        %v306 = vld [vmem:[%s284 + $0x94] sm:$0xf]
        %v307 = vld [vmem:[%s284 + $0x98] sm:$0xf]
        %v308 = vld [vmem:[%s284 + $0x9c] sm:$0xf]
        %v309 = vld [vmem:[%s284 + $0xa0] sm:$0xf]
        %v310 = vld [vmem:[%s284 + $0xa4] sm:$0xf]
        %v311 = vld [vmem:[%s284 + $0xa8] sm:$0xf]
        %v312 = vld [vmem:[%s284 + $0xac] sm:$0xf]
        %v313 = vld [vmem:[%s284 + $0xb0] sm:$0xf]
        %v314 = vld [vmem:[%s284 + $0xb4] sm:$0xf]
        %v315 = vld [vmem:[%s284 + $0xb8] sm:$0xf]
        %v316 = vld [vmem:[%s284 + $0xbc] sm:$0xf]
        %s317 = scalar_lea.vmem %s1, 4
        %v318 = vld [vmem:[%s317] sm:$0xf]
        %v351 = vunpack.c.l.b16 %v285
        %v352 = vunpack.c.l.b16 %v286
        %v353 = vunpack.c.l.b16 %v287
        %v354 = vunpack.c.l.b16 %v288
        %v355 = vunpack.c.l.b16 %v289
        %v356 = vunpack.c.l.b16 %v290
        %v357 = vunpack.c.l.b16 %v291
        %v358 = vunpack.c.l.b16 %v292
        %v359 = vunpack.c.l.b16 %v293
        %v360 = vunpack.c.l.b16 %v294
        %v361 = vunpack.c.l.b16 %v295
        %v362 = vunpack.c.l.b16 %v296
        %v363 = vunpack.c.l.b16 %v297
        %v364 = vunpack.c.l.b16 %v298
        %v365 = vunpack.c.l.b16 %v299
        %v366 = vunpack.c.l.b16 %v300
        %v367 = vunpack.c.l.b16 %v301
        %v368 = vunpack.c.l.b16 %v302
        %v369 = vunpack.c.l.b16 %v303
        %v370 = vunpack.c.l.b16 %v304
        %v371 = vunpack.c.l.b16 %v305
        %v372 = vunpack.c.l.b16 %v306
        %v373 = vunpack.c.l.b16 %v307
        %v374 = vunpack.c.l.b16 %v308
        %v375 = vunpack.c.l.b16 %v309
        %v376 = vunpack.c.l.b16 %v310
        %v377 = vunpack.c.l.b16 %v311
        %v378 = vunpack.c.l.b16 %v312
        %v379 = vunpack.c.l.b16 %v313
        %v380 = vunpack.c.l.b16 %v314
        %v381 = vunpack.c.l.b16 %v315
        %v382 = vunpack.c.l.b16 %v316
        %v383 = vpack.c.b16 %v352, %v351
        %v384 = vpack.c.b16 %v354, %v353
        %v385 = vpack.c.b16 %v356, %v355
        %v386 = vpack.c.b16 %v358, %v357
        %v387 = vpack.c.b16 %v360, %v359
        %v388 = vpack.c.b16 %v362, %v361
        %v389 = vpack.c.b16 %v364, %v363
        %v390 = vpack.c.b16 %v366, %v365
        %v391 = vpack.c.b16 %v368, %v367
        %v392 = vpack.c.b16 %v370, %v369
        %v393 = vpack.c.b16 %v372, %v371
        %v394 = vpack.c.b16 %v374, %v373
        %v395 = vpack.c.b16 %v376, %v375
        %v396 = vpack.c.b16 %v378, %v377
        %v397 = vpack.c.b16 %v380, %v379
        %v398 = vpack.c.b16 %v382, %v381
        %v401 = vunpack.c.l.s4 1983009808
        %v402 = vunpack.c.0.s8 %v401
        %v403 = vlaneseq
        %v404 = vshrl.u32 %v403, 7
        %v405 = vsub.s32 %v402, %v404
        %v406 = vrot.slane %v318, %v405
        %v407 = vcombine.high %v406, %v406
        %vm408 = vcmask 31744
        %v410 = vsel %vm408, %v383, 0
        %v413 = vsel %vm408, %v384, 0
        %v416 = vsel %vm408, %v385, 0
        %v419 = vsel %vm408, %v386, 0
        %v422 = vsel %vm408, %v387, 0
        %v425 = vsel %vm408, %v388, 0
        %v428 = vsel %vm408, %v389, 0
        %v431 = vsel %vm408, %v390, 0
        %v434 = vsel %vm408, %v391, 0
        %v437 = vsel %vm408, %v392, 0
        %v440 = vsel %vm408, %v393, 0
        %v443 = vsel %vm408, %v394, 0
        %v446 = vsel %vm408, %v395, 0
        %v449 = vsel %vm408, %v396, 0
        %v452 = vsel %vm408, %v397, 0
        %v455 = vsel %vm408, %v398, 0
        %vm457 = vcmask 1041408
        %v459 = vsel %vm457, %v406, 0
        %v462 = vsel %vm457, %v407, 0
        %464 = vmatprep.subr.bf16.mxu0 0
        %465 = vmatpush1.bf16.msra.mxu0 0
        %466 = vmatprep.subr.bf16.mxu0 0
        %467 = vmatpush1.bf16.msra.mxu0 0
        %468 = vmatprep.subr.bf16.mxu0 0
        %469 = vmatpush1.bf16.msra.mxu0 0
        %470 = vmatprep.subr.bf16.mxu0 0
        %471 = vmatpush1.bf16.msra.mxu0 0
        %472 = vmatprep.subr.bf16.mxu0 0
        %473 = vmatpush1.bf16.msra.mxu0 0
        %474 = vmatprep.subr.bf16.mxu0 0
        %475 = vmatpush1.bf16.msra.mxu0 0
        %476 = vmatprep.subr.bf16.mxu0 0
        %477 = vmatpush1.bf16.msra.mxu0 0
        %478 = vmatprep.subr.bf16.mxu0 %v462
        %479 = vmatpush1.bf16.msra.mxu0 %v459
        %480 = vmatprep.subr.bf16.mxu0 0
        %481 = vmatpush2.bf16.msra.mxu0 0
        %482 = vmatprep.subr.bf16.mxu0 0
        %483 = vmatpush2.bf16.msra.mxu0 0
        %484 = vmatprep.subr.bf16.mxu0 0
        %485 = vmatpush2.bf16.msra.mxu0 0
        %486 = vmatprep.subr.bf16.mxu0 0
        %487 = vmatpush2.bf16.msra.mxu0 0
        %488 = vmatprep.subr.bf16.mxu0 0
        %489 = vmatpush2.bf16.msra.mxu0 0
        %490 = vmatprep.subr.bf16.mxu0 0
        %491 = vmatpush2.bf16.msra.mxu0 0
        %492 = vmatprep.subr.bf16.mxu0 0
        %493 = vmatpush2.bf16.msra.mxu0 0
        %494 = vmatprep.subr.bf16.mxu0 0
        %495 = vmatpush2.bf16.msra.mxu0 0
        %496 = vmatprep.mubr.bf16.mxu0 0
        %497 = vmatmul.mubr.bf16.gmra.mxu0 %v410
        %v498 = vpop.f32.mrf.mxu0
        %v499 = vadd.f32 0.0, %v498
        %v500 = vpop.f32.mrf.mxu0
        %v501 = vadd.f32 0.0, %v500
        %v502 = vpop.f32.mrf.mxu0
        %v503 = vadd.f32 0.0, %v502
        %v504 = vpop.f32.mrf.mxu0
        %v505 = vadd.f32 0.0, %v504
        %506 = vmatprep.mubr.bf16.mxu0 0
        %507 = vmatmul.mubr.bf16.gmra.mxu0 %v413
        %v508 = vpop.f32.mrf.mxu0
        %v509 = vadd.f32 0.0, %v508
        %v510 = vpop.f32.mrf.mxu0
        %v511 = vadd.f32 0.0, %v510
        %v512 = vpop.f32.mrf.mxu0
        %v513 = vadd.f32 0.0, %v512
        %v514 = vpop.f32.mrf.mxu0
        %v515 = vadd.f32 0.0, %v514
        %516 = vmatprep.mubr.bf16.mxu0 0
        %517 = vmatmul.mubr.bf16.gmra.mxu0 %v416
        %v518 = vpop.f32.mrf.mxu0
        %v519 = vadd.f32 0.0, %v518
        %v520 = vpop.f32.mrf.mxu0
        %v521 = vadd.f32 0.0, %v520
        %v522 = vpop.f32.mrf.mxu0
        %v523 = vadd.f32 0.0, %v522
        %v524 = vpop.f32.mrf.mxu0
        %v525 = vadd.f32 0.0, %v524
        %526 = vmatprep.mubr.bf16.mxu0 0
        %527 = vmatmul.mubr.bf16.gmra.mxu0 %v419
        %v528 = vpop.f32.mrf.mxu0
        %v529 = vadd.f32 0.0, %v528
        %v530 = vpop.f32.mrf.mxu0
        %v531 = vadd.f32 0.0, %v530
        %v532 = vpop.f32.mrf.mxu0
        %v533 = vadd.f32 0.0, %v532
        %v534 = vpop.f32.mrf.mxu0
        %v535 = vadd.f32 0.0, %v534
        %536 = vmatprep.mubr.bf16.mxu0 0
        %537 = vmatmul.mubr.bf16.gmra.mxu0 %v422
        %v538 = vpop.f32.mrf.mxu0
        %v539 = vadd.f32 0.0, %v538
        %v540 = vpop.f32.mrf.mxu0
        %v541 = vadd.f32 0.0, %v540
        %v542 = vpop.f32.mrf.mxu0
        %v543 = vadd.f32 0.0, %v542
        %v544 = vpop.f32.mrf.mxu0
        %v545 = vadd.f32 0.0, %v544
        %546 = vmatprep.mubr.bf16.mxu0 0
        %547 = vmatmul.mubr.bf16.gmra.mxu0 %v425
        %v548 = vpop.f32.mrf.mxu0
        %v549 = vadd.f32 0.0, %v548
        %v550 = vpop.f32.mrf.mxu0
        %v551 = vadd.f32 0.0, %v550
        %v552 = vpop.f32.mrf.mxu0
        %v553 = vadd.f32 0.0, %v552
        %v554 = vpop.f32.mrf.mxu0
        %v555 = vadd.f32 0.0, %v554
        %556 = vmatprep.mubr.bf16.mxu0 0
        %557 = vmatmul.mubr.bf16.gmra.mxu0 %v428
        %v558 = vpop.f32.mrf.mxu0
        %v559 = vadd.f32 0.0, %v558
        %v560 = vpop.f32.mrf.mxu0
        %v561 = vadd.f32 0.0, %v560
        %v562 = vpop.f32.mrf.mxu0
        %v563 = vadd.f32 0.0, %v562
        %v564 = vpop.f32.mrf.mxu0
        %v565 = vadd.f32 0.0, %v564
        %566 = vmatprep.mubr.bf16.mxu0 0
        %567 = vmatmul.mubr.bf16.gmra.mxu0 %v431
        %v568 = vpop.f32.mrf.mxu0
        %v569 = vadd.f32 0.0, %v568
        %v570 = vpop.f32.mrf.mxu0
        %v571 = vadd.f32 0.0, %v570
        %v572 = vpop.f32.mrf.mxu0
        %v573 = vadd.f32 0.0, %v572
        %v574 = vpop.f32.mrf.mxu0
        %v575 = vadd.f32 0.0, %v574
        %576 = vmatprep.mubr.bf16.mxu0 0
        %577 = vmatmul.mubr.bf16.gmra.mxu0 %v434
        %v578 = vpop.f32.mrf.mxu0
        %v579 = vadd.f32 0.0, %v578
        %v580 = vpop.f32.mrf.mxu0
        %v581 = vadd.f32 0.0, %v580
        %v582 = vpop.f32.mrf.mxu0
        %v583 = vadd.f32 0.0, %v582
        %v584 = vpop.f32.mrf.mxu0
        %v585 = vadd.f32 0.0, %v584
        %586 = vmatprep.mubr.bf16.mxu0 0
        %587 = vmatmul.mubr.bf16.gmra.mxu0 %v437
        %v588 = vpop.f32.mrf.mxu0
        %v589 = vadd.f32 0.0, %v588
        %v590 = vpop.f32.mrf.mxu0
        %v591 = vadd.f32 0.0, %v590
        %v592 = vpop.f32.mrf.mxu0
        %v593 = vadd.f32 0.0, %v592
        %v594 = vpop.f32.mrf.mxu0
        %v595 = vadd.f32 0.0, %v594
        %596 = vmatprep.mubr.bf16.mxu0 0
        %597 = vmatmul.mubr.bf16.gmra.mxu0 %v440
        %v598 = vpop.f32.mrf.mxu0
        %v599 = vadd.f32 0.0, %v598
        %v600 = vpop.f32.mrf.mxu0
        %v601 = vadd.f32 0.0, %v600
        %v602 = vpop.f32.mrf.mxu0
        %v603 = vadd.f32 0.0, %v602
        %v604 = vpop.f32.mrf.mxu0
        %v605 = vadd.f32 0.0, %v604
        %606 = vmatprep.mubr.bf16.mxu0 0
        %607 = vmatmul.mubr.bf16.gmra.mxu0 %v443
        %v608 = vpop.f32.mrf.mxu0
        %v609 = vadd.f32 0.0, %v608
        %v610 = vpop.f32.mrf.mxu0
        %v611 = vadd.f32 0.0, %v610
        %v612 = vpop.f32.mrf.mxu0
        %v613 = vadd.f32 0.0, %v612
        %v614 = vpop.f32.mrf.mxu0
        %v615 = vadd.f32 0.0, %v614
        %616 = vmatprep.mubr.bf16.mxu0 0
        %617 = vmatmul.mubr.bf16.gmra.mxu0 %v446
        %v618 = vpop.f32.mrf.mxu0
        %v619 = vadd.f32 0.0, %v618
        %v620 = vpop.f32.mrf.mxu0
        %v621 = vadd.f32 0.0, %v620
        %v622 = vpop.f32.mrf.mxu0
        %v623 = vadd.f32 0.0, %v622
        %v624 = vpop.f32.mrf.mxu0
        %v625 = vadd.f32 0.0, %v624
        %626 = vmatprep.mubr.bf16.mxu0 0
        %627 = vmatmul.mubr.bf16.gmra.mxu0 %v449
        %v628 = vpop.f32.mrf.mxu0
        %v629 = vadd.f32 0.0, %v628
        %v630 = vpop.f32.mrf.mxu0
        %v631 = vadd.f32 0.0, %v630
        %v632 = vpop.f32.mrf.mxu0
        %v633 = vadd.f32 0.0, %v632
        %v634 = vpop.f32.mrf.mxu0
        %v635 = vadd.f32 0.0, %v634
        %636 = vmatprep.mubr.bf16.mxu0 0
        %637 = vmatmul.mubr.bf16.gmra.mxu0 %v452
        %v638 = vpop.f32.mrf.mxu0
        %v639 = vadd.f32 0.0, %v638
        %v640 = vpop.f32.mrf.mxu0
        %v641 = vadd.f32 0.0, %v640
        %v642 = vpop.f32.mrf.mxu0
        %v643 = vadd.f32 0.0, %v642
        %v644 = vpop.f32.mrf.mxu0
        %v645 = vadd.f32 0.0, %v644
        %646 = vmatprep.mubr.bf16.mxu0 0
        %647 = vmatmul.mubr.bf16.gmra.mxu0 %v455
        %v648 = vpop.f32.mrf.mxu0
        %v649 = vadd.f32 0.0, %v648
        %v650 = vpop.f32.mrf.mxu0
        %v651 = vadd.f32 0.0, %v650
        %v652 = vpop.f32.mrf.mxu0
        %v653 = vadd.f32 0.0, %v652
        %v654 = vpop.f32.mrf.mxu0
        %v655 = vadd.f32 0.0, %v654
        %656 = vdwg.mxu0
        %v689 = vunpack.c.l.b16 %v251
        %v690 = vunpack.c.l.b16 %v252
        %v691 = vunpack.c.l.b16 %v253
        %v692 = vunpack.c.l.b16 %v254
        %v693 = vunpack.c.l.b16 %v255
        %v694 = vunpack.c.l.b16 %v256
        %v695 = vunpack.c.l.b16 %v257
        %v696 = vunpack.c.l.b16 %v258
        %v697 = vunpack.c.l.b16 %v259
        %v698 = vunpack.c.l.b16 %v260
        %v699 = vunpack.c.l.b16 %v261
        %v700 = vunpack.c.l.b16 %v262
        %v701 = vunpack.c.l.b16 %v263
        %v702 = vunpack.c.l.b16 %v264
        %v703 = vunpack.c.l.b16 %v265
        %v704 = vunpack.c.l.b16 %v266
        %v705 = vunpack.c.l.b16 %v267
        %v706 = vunpack.c.l.b16 %v268
        %v707 = vunpack.c.l.b16 %v269
        %v708 = vunpack.c.l.b16 %v270
        %v709 = vunpack.c.l.b16 %v271
        %v710 = vunpack.c.l.b16 %v272
        %v711 = vunpack.c.l.b16 %v273
        %v712 = vunpack.c.l.b16 %v274
        %v713 = vunpack.c.l.b16 %v275
        %v714 = vunpack.c.l.b16 %v276
        %v715 = vunpack.c.l.b16 %v277
        %v716 = vunpack.c.l.b16 %v278
        %v717 = vunpack.c.l.b16 %v279
        %v718 = vunpack.c.l.b16 %v280
        %v719 = vunpack.c.l.b16 %v281
        %v720 = vunpack.c.l.b16 %v282
        %v721 = vpack.c.b16 %v690, %v689
        %v722 = vpack.c.b16 %v692, %v691
        %v723 = vpack.c.b16 %v694, %v693
        %v724 = vpack.c.b16 %v696, %v695
        %v725 = vpack.c.b16 %v698, %v697
        %v726 = vpack.c.b16 %v700, %v699
        %v727 = vpack.c.b16 %v702, %v701
        %v728 = vpack.c.b16 %v704, %v703
        %v729 = vpack.c.b16 %v706, %v705
        %v730 = vpack.c.b16 %v708, %v707
        %v731 = vpack.c.b16 %v710, %v709
        %v732 = vpack.c.b16 %v712, %v711
        %v733 = vpack.c.b16 %v714, %v713
        %v734 = vpack.c.b16 %v716, %v715
        %v735 = vpack.c.b16 %v718, %v717
        %v736 = vpack.c.b16 %v720, %v719
        %v739 = vunpack.c.l.s4 1983009808
        %v740 = vunpack.c.0.s8 %v739
        %v741 = vlaneseq
        %v742 = vshrl.u32 %v741, 7
        %v743 = vsub.s32 %v740, %v742
        %v744 = vrot.slane %v283, %v743
        %v745 = vcombine.high %v744, %v744
        %v747 = vsel %vm408, %v721, 0
        %v750 = vsel %vm408, %v722, 0
        %v753 = vsel %vm408, %v723, 0
        %v756 = vsel %vm408, %v724, 0
        %v759 = vsel %vm408, %v725, 0
        %v762 = vsel %vm408, %v726, 0
        %v765 = vsel %vm408, %v727, 0
        %v768 = vsel %vm408, %v728, 0
        %v771 = vsel %vm408, %v729, 0
        %v774 = vsel %vm408, %v730, 0
        %v777 = vsel %vm408, %v731, 0
        %v780 = vsel %vm408, %v732, 0
        %v783 = vsel %vm408, %v733, 0
        %v786 = vsel %vm408, %v734, 0
        %v789 = vsel %vm408, %v735, 0
        %v792 = vsel %vm408, %v736, 0
        %v795 = vsel %vm457, %v744, 0
        %v798 = vsel %vm457, %v745, 0
        %800 = vmatprep.subr.bf16.mxu0 0
        %801 = vmatpush1.bf16.msra.mxu0 0
        %802 = vmatprep.subr.bf16.mxu0 0
        %803 = vmatpush1.bf16.msra.mxu0 0
        %804 = vmatprep.subr.bf16.mxu0 0
        %805 = vmatpush1.bf16.msra.mxu0 0
        %806 = vmatprep.subr.bf16.mxu0 0
        %807 = vmatpush1.bf16.msra.mxu0 0
        %808 = vmatprep.subr.bf16.mxu0 0
        %809 = vmatpush1.bf16.msra.mxu0 0
        %810 = vmatprep.subr.bf16.mxu0 0
        %811 = vmatpush1.bf16.msra.mxu0 0
        %812 = vmatprep.subr.bf16.mxu0 0
        %813 = vmatpush1.bf16.msra.mxu0 0
        %814 = vmatprep.subr.bf16.mxu0 %v798
        %815 = vmatpush1.bf16.msra.mxu0 %v795
        %816 = vmatprep.subr.bf16.mxu0 0
        %817 = vmatpush2.bf16.msra.mxu0 0
        %818 = vmatprep.subr.bf16.mxu0 0
        %819 = vmatpush2.bf16.msra.mxu0 0
        %820 = vmatprep.subr.bf16.mxu0 0
        %821 = vmatpush2.bf16.msra.mxu0 0
        %822 = vmatprep.subr.bf16.mxu0 0
        %823 = vmatpush2.bf16.msra.mxu0 0
        %824 = vmatprep.subr.bf16.mxu0 0
        %825 = vmatpush2.bf16.msra.mxu0 0
        %826 = vmatprep.subr.bf16.mxu0 0
        %827 = vmatpush2.bf16.msra.mxu0 0
        %828 = vmatprep.subr.bf16.mxu0 0
        %829 = vmatpush2.bf16.msra.mxu0 0
        %830 = vmatprep.subr.bf16.mxu0 0
        %831 = vmatpush2.bf16.msra.mxu0 0
        %832 = vmatprep.mubr.bf16.mxu0 0
        %833 = vmatmul.mubr.bf16.gmra.mxu0 %v747
        %v834 = vpop.f32.mrf.mxu0
        %v835 = vadd.f32 %v499, %v834
        %v836 = vpop.f32.mrf.mxu0
        %v837 = vadd.f32 %v501, %v836
        %v838 = vpop.f32.mrf.mxu0
        %v839 = vadd.f32 %v503, %v838
        %v840 = vpop.f32.mrf.mxu0
        %v841 = vadd.f32 %v505, %v840
        %842 = vmatprep.mubr.bf16.mxu0 0
        %843 = vmatmul.mubr.bf16.gmra.mxu0 %v750
        %v844 = vpop.f32.mrf.mxu0
        %v845 = vadd.f32 %v509, %v844
        %v846 = vpop.f32.mrf.mxu0
        %v847 = vadd.f32 %v511, %v846
        %v848 = vpop.f32.mrf.mxu0
        %v849 = vadd.f32 %v513, %v848
        %v850 = vpop.f32.mrf.mxu0
        %v851 = vadd.f32 %v515, %v850
        %852 = vmatprep.mubr.bf16.mxu0 0
        %853 = vmatmul.mubr.bf16.gmra.mxu0 %v753
        %v854 = vpop.f32.mrf.mxu0
        %v855 = vadd.f32 %v519, %v854
        %v856 = vpop.f32.mrf.mxu0
        %v857 = vadd.f32 %v521, %v856
        %v858 = vpop.f32.mrf.mxu0
        %v859 = vadd.f32 %v523, %v858
        %v860 = vpop.f32.mrf.mxu0
        %v861 = vadd.f32 %v525, %v860
        %862 = vmatprep.mubr.bf16.mxu0 0
        %863 = vmatmul.mubr.bf16.gmra.mxu0 %v756
        %v864 = vpop.f32.mrf.mxu0
        %v865 = vadd.f32 %v529, %v864
        %v866 = vpop.f32.mrf.mxu0
        %v867 = vadd.f32 %v531, %v866
        %v868 = vpop.f32.mrf.mxu0
        %v869 = vadd.f32 %v533, %v868
        %v870 = vpop.f32.mrf.mxu0
        %v871 = vadd.f32 %v535, %v870
        %872 = vmatprep.mubr.bf16.mxu0 0
        %873 = vmatmul.mubr.bf16.gmra.mxu0 %v759
        %v874 = vpop.f32.mrf.mxu0
        %v875 = vadd.f32 %v539, %v874
        %v876 = vpop.f32.mrf.mxu0
        %v877 = vadd.f32 %v541, %v876
        %v878 = vpop.f32.mrf.mxu0
        %v879 = vadd.f32 %v543, %v878
        %v880 = vpop.f32.mrf.mxu0
        %v881 = vadd.f32 %v545, %v880
        %882 = vmatprep.mubr.bf16.mxu0 0
        %883 = vmatmul.mubr.bf16.gmra.mxu0 %v762
        %v884 = vpop.f32.mrf.mxu0
        %v885 = vadd.f32 %v549, %v884
        %v886 = vpop.f32.mrf.mxu0
        %v887 = vadd.f32 %v551, %v886
        %v888 = vpop.f32.mrf.mxu0
        %v889 = vadd.f32 %v553, %v888
        %v890 = vpop.f32.mrf.mxu0
        %v891 = vadd.f32 %v555, %v890
        %892 = vmatprep.mubr.bf16.mxu0 0
        %893 = vmatmul.mubr.bf16.gmra.mxu0 %v765
        %v894 = vpop.f32.mrf.mxu0
        %v895 = vadd.f32 %v559, %v894
        %v896 = vpop.f32.mrf.mxu0
        %v897 = vadd.f32 %v561, %v896
        %v898 = vpop.f32.mrf.mxu0
        %v899 = vadd.f32 %v563, %v898
        %v900 = vpop.f32.mrf.mxu0
        %v901 = vadd.f32 %v565, %v900
        %902 = vmatprep.mubr.bf16.mxu0 0
        %903 = vmatmul.mubr.bf16.gmra.mxu0 %v768
        %v904 = vpop.f32.mrf.mxu0
        %v905 = vadd.f32 %v569, %v904
        %v906 = vpop.f32.mrf.mxu0
        %v907 = vadd.f32 %v571, %v906
        %v908 = vpop.f32.mrf.mxu0
        %v909 = vadd.f32 %v573, %v908
        %v910 = vpop.f32.mrf.mxu0
        %v911 = vadd.f32 %v575, %v910
        %912 = vmatprep.mubr.bf16.mxu0 0
        %913 = vmatmul.mubr.bf16.gmra.mxu0 %v771
        %v914 = vpop.f32.mrf.mxu0
        %v915 = vadd.f32 %v579, %v914
        %v916 = vpop.f32.mrf.mxu0
        %v917 = vadd.f32 %v581, %v916
        %v918 = vpop.f32.mrf.mxu0
        %v919 = vadd.f32 %v583, %v918
        %v920 = vpop.f32.mrf.mxu0
        %v921 = vadd.f32 %v585, %v920
        %922 = vmatprep.mubr.bf16.mxu0 0
        %923 = vmatmul.mubr.bf16.gmra.mxu0 %v774
        %v924 = vpop.f32.mrf.mxu0
        %v925 = vadd.f32 %v589, %v924
        %v926 = vpop.f32.mrf.mxu0
        %v927 = vadd.f32 %v591, %v926
        %v928 = vpop.f32.mrf.mxu0
        %v929 = vadd.f32 %v593, %v928
        %v930 = vpop.f32.mrf.mxu0
        %v931 = vadd.f32 %v595, %v930
        %932 = vmatprep.mubr.bf16.mxu0 0
        %933 = vmatmul.mubr.bf16.gmra.mxu0 %v777
        %v934 = vpop.f32.mrf.mxu0
        %v935 = vadd.f32 %v599, %v934
        %v936 = vpop.f32.mrf.mxu0
        %v937 = vadd.f32 %v601, %v936
        %v938 = vpop.f32.mrf.mxu0
        %v939 = vadd.f32 %v603, %v938
        %v940 = vpop.f32.mrf.mxu0
        %v941 = vadd.f32 %v605, %v940
        %942 = vmatprep.mubr.bf16.mxu0 0
        %943 = vmatmul.mubr.bf16.gmra.mxu0 %v780
        %v944 = vpop.f32.mrf.mxu0
        %v945 = vadd.f32 %v609, %v944
        %v946 = vpop.f32.mrf.mxu0
        %v947 = vadd.f32 %v611, %v946
        %v948 = vpop.f32.mrf.mxu0
        %v949 = vadd.f32 %v613, %v948
        %v950 = vpop.f32.mrf.mxu0
        %v951 = vadd.f32 %v615, %v950
        %952 = vmatprep.mubr.bf16.mxu0 0
        %953 = vmatmul.mubr.bf16.gmra.mxu0 %v783
        %v954 = vpop.f32.mrf.mxu0
        %v955 = vadd.f32 %v619, %v954
        %v956 = vpop.f32.mrf.mxu0
        %v957 = vadd.f32 %v621, %v956
        %v958 = vpop.f32.mrf.mxu0
        %v959 = vadd.f32 %v623, %v958
        %v960 = vpop.f32.mrf.mxu0
        %v961 = vadd.f32 %v625, %v960
        %962 = vmatprep.mubr.bf16.mxu0 0
        %963 = vmatmul.mubr.bf16.gmra.mxu0 %v786
        %v964 = vpop.f32.mrf.mxu0
        %v965 = vadd.f32 %v629, %v964
        %v966 = vpop.f32.mrf.mxu0
        %v967 = vadd.f32 %v631, %v966
        %v968 = vpop.f32.mrf.mxu0
        %v969 = vadd.f32 %v633, %v968
        %v970 = vpop.f32.mrf.mxu0
        %v971 = vadd.f32 %v635, %v970
        %972 = vmatprep.mubr.bf16.mxu0 0
        %973 = vmatmul.mubr.bf16.gmra.mxu0 %v789
        %v974 = vpop.f32.mrf.mxu0
        %v975 = vadd.f32 %v639, %v974
        %v976 = vpop.f32.mrf.mxu0
        %v977 = vadd.f32 %v641, %v976
        %v978 = vpop.f32.mrf.mxu0
        %v979 = vadd.f32 %v643, %v978
        %v980 = vpop.f32.mrf.mxu0
        %v981 = vadd.f32 %v645, %v980
        %982 = vmatprep.mubr.bf16.mxu0 0
        %983 = vmatmul.mubr.bf16.gmra.mxu0 %v792
        %v984 = vpop.f32.mrf.mxu0
        %v985 = vadd.f32 %v649, %v984
        %v986 = vpop.f32.mrf.mxu0
        %v987 = vadd.f32 %v651, %v986
        %v988 = vpop.f32.mrf.mxu0
        %v989 = vadd.f32 %v653, %v988
        %v990 = vpop.f32.mrf.mxu0
        %v991 = vadd.f32 %v655, %v990
        %992 = vdwg.mxu0
        %s993 = scalar_lea.vmem %s249, 64
        %v994 = vld [vmem:[%s993] sm:$0xf]
        %v995 = vld [vmem:[%s993 + $0x4] sm:$0xf]
        %v996 = vld [vmem:[%s993 + $0x8] sm:$0xf]
        %v997 = vld [vmem:[%s993 + $0xc] sm:$0xf]
        %v998 = vld [vmem:[%s993 + $0x10] sm:$0xf]
        %v999 = vld [vmem:[%s993 + $0x14] sm:$0xf]
        %v1000 = vld [vmem:[%s993 + $0x18] sm:$0xf]
        %v1001 = vld [vmem:[%s993 + $0x1c] sm:$0xf]
        %v1002 = vld [vmem:[%s993 + $0x20] sm:$0xf]
        %v1003 = vld [vmem:[%s993 + $0x24] sm:$0xf]
        %v1004 = vld [vmem:[%s993 + $0x28] sm:$0xf]
        %v1005 = vld [vmem:[%s993 + $0x2c] sm:$0xf]
        %v1006 = vld [vmem:[%s993 + $0x30] sm:$0xf]
        %v1007 = vld [vmem:[%s993 + $0x34] sm:$0xf]
        %v1008 = vld [vmem:[%s993 + $0x38] sm:$0xf]
        %v1009 = vld [vmem:[%s993 + $0x3c] sm:$0xf]
        %v1010 = vld [vmem:[%s993 + $0x80] sm:$0xf]
        %v1011 = vld [vmem:[%s993 + $0x84] sm:$0xf]
        %v1012 = vld [vmem:[%s993 + $0x88] sm:$0xf]
        %v1013 = vld [vmem:[%s993 + $0x8c] sm:$0xf]
        %v1014 = vld [vmem:[%s993 + $0x90] sm:$0xf]
        %v1015 = vld [vmem:[%s993 + $0x94] sm:$0xf]
        %v1016 = vld [vmem:[%s993 + $0x98] sm:$0xf]
        %v1017 = vld [vmem:[%s993 + $0x9c] sm:$0xf]
        %v1018 = vld [vmem:[%s993 + $0xa0] sm:$0xf]
        %v1019 = vld [vmem:[%s993 + $0xa4] sm:$0xf]
        %v1020 = vld [vmem:[%s993 + $0xa8] sm:$0xf]
        %v1021 = vld [vmem:[%s993 + $0xac] sm:$0xf]
        %v1022 = vld [vmem:[%s993 + $0xb0] sm:$0xf]
        %v1023 = vld [vmem:[%s993 + $0xb4] sm:$0xf]
        %v1024 = vld [vmem:[%s993 + $0xb8] sm:$0xf]
        %v1025 = vld [vmem:[%s993 + $0xbc] sm:$0xf]
        %s1026 = scalar_lea.vmem %s1, 8
        %v1027 = vld [vmem:[%s1026] sm:$0xf]
        %v1060 = vunpack.c.l.b16 %v994
        %v1061 = vunpack.c.l.b16 %v995
        %v1062 = vunpack.c.l.b16 %v996
        %v1063 = vunpack.c.l.b16 %v997
        %v1064 = vunpack.c.l.b16 %v998
        %v1065 = vunpack.c.l.b16 %v999
        %v1066 = vunpack.c.l.b16 %v1000
        %v1067 = vunpack.c.l.b16 %v1001
        %v1068 = vunpack.c.l.b16 %v1002
        %v1069 = vunpack.c.l.b16 %v1003
        %v1070 = vunpack.c.l.b16 %v1004
        %v1071 = vunpack.c.l.b16 %v1005
        %v1072 = vunpack.c.l.b16 %v1006
        %v1073 = vunpack.c.l.b16 %v1007
        %v1074 = vunpack.c.l.b16 %v1008
        %v1075 = vunpack.c.l.b16 %v1009
        %v1076 = vunpack.c.l.b16 %v1010
        %v1077 = vunpack.c.l.b16 %v1011
        %v1078 = vunpack.c.l.b16 %v1012
        %v1079 = vunpack.c.l.b16 %v1013
        %v1080 = vunpack.c.l.b16 %v1014
        %v1081 = vunpack.c.l.b16 %v1015
        %v1082 = vunpack.c.l.b16 %v1016
        %v1083 = vunpack.c.l.b16 %v1017
        %v1084 = vunpack.c.l.b16 %v1018
        %v1085 = vunpack.c.l.b16 %v1019
        %v1086 = vunpack.c.l.b16 %v1020
        %v1087 = vunpack.c.l.b16 %v1021
        %v1088 = vunpack.c.l.b16 %v1022
        %v1089 = vunpack.c.l.b16 %v1023
        %v1090 = vunpack.c.l.b16 %v1024
        %v1091 = vunpack.c.l.b16 %v1025
        %v1092 = vpack.c.b16 %v1061, %v1060
        %v1093 = vpack.c.b16 %v1063, %v1062
        %v1094 = vpack.c.b16 %v1065, %v1064
        %v1095 = vpack.c.b16 %v1067, %v1066
        %v1096 = vpack.c.b16 %v1069, %v1068
        %v1097 = vpack.c.b16 %v1071, %v1070
        %v1098 = vpack.c.b16 %v1073, %v1072
        %v1099 = vpack.c.b16 %v1075, %v1074
        %v1100 = vpack.c.b16 %v1077, %v1076
        %v1101 = vpack.c.b16 %v1079, %v1078
        %v1102 = vpack.c.b16 %v1081, %v1080
        %v1103 = vpack.c.b16 %v1083, %v1082
        %v1104 = vpack.c.b16 %v1085, %v1084
        %v1105 = vpack.c.b16 %v1087, %v1086
        %v1106 = vpack.c.b16 %v1089, %v1088
        %v1107 = vpack.c.b16 %v1091, %v1090
        %v1110 = vunpack.c.l.s4 1983009808
        %v1111 = vunpack.c.0.s8 %v1110
        %v1112 = vlaneseq
        %v1113 = vshrl.u32 %v1112, 7
        %v1114 = vsub.s32 %v1111, %v1113
        %v1115 = vrot.slane %v1027, %v1114
        %v1116 = vcombine.high %v1115, %v1115
        %v1118 = vsel %vm408, %v1092, 0
        %v1121 = vsel %vm408, %v1093, 0
        %v1124 = vsel %vm408, %v1094, 0
        %v1127 = vsel %vm408, %v1095, 0
        %v1130 = vsel %vm408, %v1096, 0
        %v1133 = vsel %vm408, %v1097, 0
        %v1136 = vsel %vm408, %v1098, 0
        %v1139 = vsel %vm408, %v1099, 0
        %v1142 = vsel %vm408, %v1100, 0
        %v1145 = vsel %vm408, %v1101, 0
        %v1148 = vsel %vm408, %v1102, 0
        %v1151 = vsel %vm408, %v1103, 0
        %v1154 = vsel %vm408, %v1104, 0
        %v1157 = vsel %vm408, %v1105, 0
        %v1160 = vsel %vm408, %v1106, 0
        %v1163 = vsel %vm408, %v1107, 0
        %v1166 = vsel %vm457, %v1115, 0
        %v1169 = vsel %vm457, %v1116, 0
        %1171 = vmatprep.subr.bf16.mxu0 0
        %1172 = vmatpush1.bf16.msra.mxu0 0
        %1173 = vmatprep.subr.bf16.mxu0 0
        %1174 = vmatpush1.bf16.msra.mxu0 0
        %1175 = vmatprep.subr.bf16.mxu0 0
        %1176 = vmatpush1.bf16.msra.mxu0 0
        %1177 = vmatprep.subr.bf16.mxu0 0
        %1178 = vmatpush1.bf16.msra.mxu0 0
        %1179 = vmatprep.subr.bf16.mxu0 0
        %1180 = vmatpush1.bf16.msra.mxu0 0
        %1181 = vmatprep.subr.bf16.mxu0 0
        %1182 = vmatpush1.bf16.msra.mxu0 0
        %1183 = vmatprep.subr.bf16.mxu0 0
        %1184 = vmatpush1.bf16.msra.mxu0 0
        %1185 = vmatprep.subr.bf16.mxu0 %v1169
        %1186 = vmatpush1.bf16.msra.mxu0 %v1166
        %1187 = vmatprep.subr.bf16.mxu0 0
        %1188 = vmatpush2.bf16.msra.mxu0 0
        %1189 = vmatprep.subr.bf16.mxu0 0
        %1190 = vmatpush2.bf16.msra.mxu0 0
        %1191 = vmatprep.subr.bf16.mxu0 0
        %1192 = vmatpush2.bf16.msra.mxu0 0
        %1193 = vmatprep.subr.bf16.mxu0 0
        %1194 = vmatpush2.bf16.msra.mxu0 0
        %1195 = vmatprep.subr.bf16.mxu0 0
        %1196 = vmatpush2.bf16.msra.mxu0 0
        %1197 = vmatprep.subr.bf16.mxu0 0
        %1198 = vmatpush2.bf16.msra.mxu0 0
        %1199 = vmatprep.subr.bf16.mxu0 0
        %1200 = vmatpush2.bf16.msra.mxu0 0
        %1201 = vmatprep.subr.bf16.mxu0 0
        %1202 = vmatpush2.bf16.msra.mxu0 0
        %1203 = vmatprep.mubr.bf16.mxu0 0
        %1204 = vmatmul.mubr.bf16.gmra.mxu0 %v1118
        %v1205 = vpop.f32.mrf.mxu0
        %v1206 = vadd.f32 0.0, %v1205
        %v1207 = vpop.f32.mrf.mxu0
        %v1208 = vadd.f32 0.0, %v1207
        %v1209 = vpop.f32.mrf.mxu0
        %v1210 = vadd.f32 0.0, %v1209
        %v1211 = vpop.f32.mrf.mxu0
        %v1212 = vadd.f32 0.0, %v1211
        %1213 = vmatprep.mubr.bf16.mxu0 0
        %1214 = vmatmul.mubr.bf16.gmra.mxu0 %v1121
        %v1215 = vpop.f32.mrf.mxu0
        %v1216 = vadd.f32 0.0, %v1215
        %v1217 = vpop.f32.mrf.mxu0
        %v1218 = vadd.f32 0.0, %v1217
        %v1219 = vpop.f32.mrf.mxu0
        %v1220 = vadd.f32 0.0, %v1219
        %v1221 = vpop.f32.mrf.mxu0
        %v1222 = vadd.f32 0.0, %v1221
        %1223 = vmatprep.mubr.bf16.mxu0 0
        %1224 = vmatmul.mubr.bf16.gmra.mxu0 %v1124
        %v1225 = vpop.f32.mrf.mxu0
        %v1226 = vadd.f32 0.0, %v1225
        %v1227 = vpop.f32.mrf.mxu0
        %v1228 = vadd.f32 0.0, %v1227
        %v1229 = vpop.f32.mrf.mxu0
        %v1230 = vadd.f32 0.0, %v1229
        %v1231 = vpop.f32.mrf.mxu0
        %v1232 = vadd.f32 0.0, %v1231
        %1233 = vmatprep.mubr.bf16.mxu0 0
        %1234 = vmatmul.mubr.bf16.gmra.mxu0 %v1127
        %v1235 = vpop.f32.mrf.mxu0
        %v1236 = vadd.f32 0.0, %v1235
        %v1237 = vpop.f32.mrf.mxu0
        %v1238 = vadd.f32 0.0, %v1237
        %v1239 = vpop.f32.mrf.mxu0
        %v1240 = vadd.f32 0.0, %v1239
        %v1241 = vpop.f32.mrf.mxu0
        %v1242 = vadd.f32 0.0, %v1241
        %1243 = vmatprep.mubr.bf16.mxu0 0
        %1244 = vmatmul.mubr.bf16.gmra.mxu0 %v1130
        %v1245 = vpop.f32.mrf.mxu0
        %v1246 = vadd.f32 0.0, %v1245
        %v1247 = vpop.f32.mrf.mxu0
        %v1248 = vadd.f32 0.0, %v1247
        %v1249 = vpop.f32.mrf.mxu0
        %v1250 = vadd.f32 0.0, %v1249
        %v1251 = vpop.f32.mrf.mxu0
        %v1252 = vadd.f32 0.0, %v1251
        %1253 = vmatprep.mubr.bf16.mxu0 0
        %1254 = vmatmul.mubr.bf16.gmra.mxu0 %v1133
        %v1255 = vpop.f32.mrf.mxu0
        %v1256 = vadd.f32 0.0, %v1255
        %v1257 = vpop.f32.mrf.mxu0
        %v1258 = vadd.f32 0.0, %v1257
        %v1259 = vpop.f32.mrf.mxu0
        %v1260 = vadd.f32 0.0, %v1259
        %v1261 = vpop.f32.mrf.mxu0
        %v1262 = vadd.f32 0.0, %v1261
        %1263 = vmatprep.mubr.bf16.mxu0 0
        %1264 = vmatmul.mubr.bf16.gmra.mxu0 %v1136
        %v1265 = vpop.f32.mrf.mxu0
        %v1266 = vadd.f32 0.0, %v1265
        %v1267 = vpop.f32.mrf.mxu0
        %v1268 = vadd.f32 0.0, %v1267
        %v1269 = vpop.f32.mrf.mxu0
        %v1270 = vadd.f32 0.0, %v1269
        %v1271 = vpop.f32.mrf.mxu0
        %v1272 = vadd.f32 0.0, %v1271
        %1273 = vmatprep.mubr.bf16.mxu0 0
        %1274 = vmatmul.mubr.bf16.gmra.mxu0 %v1139
        %v1275 = vpop.f32.mrf.mxu0
        %v1276 = vadd.f32 0.0, %v1275
        %v1277 = vpop.f32.mrf.mxu0
        %v1278 = vadd.f32 0.0, %v1277
        %v1279 = vpop.f32.mrf.mxu0
        %v1280 = vadd.f32 0.0, %v1279
        %v1281 = vpop.f32.mrf.mxu0
        %v1282 = vadd.f32 0.0, %v1281
        %1283 = vmatprep.mubr.bf16.mxu0 0
        %1284 = vmatmul.mubr.bf16.gmra.mxu0 %v1142
        %v1285 = vpop.f32.mrf.mxu0
        %v1286 = vadd.f32 0.0, %v1285
        %v1287 = vpop.f32.mrf.mxu0
        %v1288 = vadd.f32 0.0, %v1287
        %v1289 = vpop.f32.mrf.mxu0
        %v1290 = vadd.f32 0.0, %v1289
        %v1291 = vpop.f32.mrf.mxu0
        %v1292 = vadd.f32 0.0, %v1291
        %1293 = vmatprep.mubr.bf16.mxu0 0
        %1294 = vmatmul.mubr.bf16.gmra.mxu0 %v1145
        %v1295 = vpop.f32.mrf.mxu0
        %v1296 = vadd.f32 0.0, %v1295
        %v1297 = vpop.f32.mrf.mxu0
        %v1298 = vadd.f32 0.0, %v1297
        %v1299 = vpop.f32.mrf.mxu0
        %v1300 = vadd.f32 0.0, %v1299
        %v1301 = vpop.f32.mrf.mxu0
        %v1302 = vadd.f32 0.0, %v1301
        %1303 = vmatprep.mubr.bf16.mxu0 0
        %1304 = vmatmul.mubr.bf16.gmra.mxu0 %v1148
        %v1305 = vpop.f32.mrf.mxu0
        %v1306 = vadd.f32 0.0, %v1305
        %v1307 = vpop.f32.mrf.mxu0
        %v1308 = vadd.f32 0.0, %v1307
        %v1309 = vpop.f32.mrf.mxu0
        %v1310 = vadd.f32 0.0, %v1309
        %v1311 = vpop.f32.mrf.mxu0
        %v1312 = vadd.f32 0.0, %v1311
        %1313 = vmatprep.mubr.bf16.mxu0 0
        %1314 = vmatmul.mubr.bf16.gmra.mxu0 %v1151
        %v1315 = vpop.f32.mrf.mxu0
        %v1316 = vadd.f32 0.0, %v1315
        %v1317 = vpop.f32.mrf.mxu0
        %v1318 = vadd.f32 0.0, %v1317
        %v1319 = vpop.f32.mrf.mxu0
        %v1320 = vadd.f32 0.0, %v1319
        %v1321 = vpop.f32.mrf.mxu0
        %v1322 = vadd.f32 0.0, %v1321
        %1323 = vmatprep.mubr.bf16.mxu0 0
        %1324 = vmatmul.mubr.bf16.gmra.mxu0 %v1154
        %v1325 = vpop.f32.mrf.mxu0
        %v1326 = vadd.f32 0.0, %v1325
        %v1327 = vpop.f32.mrf.mxu0
        %v1328 = vadd.f32 0.0, %v1327
        %v1329 = vpop.f32.mrf.mxu0
        %v1330 = vadd.f32 0.0, %v1329
        %v1331 = vpop.f32.mrf.mxu0
        %v1332 = vadd.f32 0.0, %v1331
        %1333 = vmatprep.mubr.bf16.mxu0 0
        %1334 = vmatmul.mubr.bf16.gmra.mxu0 %v1157
        %v1335 = vpop.f32.mrf.mxu0
        %v1336 = vadd.f32 0.0, %v1335
        %v1337 = vpop.f32.mrf.mxu0
        %v1338 = vadd.f32 0.0, %v1337
        %v1339 = vpop.f32.mrf.mxu0
        %v1340 = vadd.f32 0.0, %v1339
        %v1341 = vpop.f32.mrf.mxu0
        %v1342 = vadd.f32 0.0, %v1341
        %1343 = vmatprep.mubr.bf16.mxu0 0
        %1344 = vmatmul.mubr.bf16.gmra.mxu0 %v1160
        %v1345 = vpop.f32.mrf.mxu0
        %v1346 = vadd.f32 0.0, %v1345
        %v1347 = vpop.f32.mrf.mxu0
        %v1348 = vadd.f32 0.0, %v1347
        %v1349 = vpop.f32.mrf.mxu0
        %v1350 = vadd.f32 0.0, %v1349
        %v1351 = vpop.f32.mrf.mxu0
        %v1352 = vadd.f32 0.0, %v1351
        %1353 = vmatprep.mubr.bf16.mxu0 0
        %1354 = vmatmul.mubr.bf16.gmra.mxu0 %v1163
        %v1355 = vpop.f32.mrf.mxu0
        %v1356 = vadd.f32 0.0, %v1355
        %v1357 = vpop.f32.mrf.mxu0
        %v1358 = vadd.f32 0.0, %v1357
        %v1359 = vpop.f32.mrf.mxu0
        %v1360 = vadd.f32 0.0, %v1359
        %v1361 = vpop.f32.mrf.mxu0
        %v1362 = vadd.f32 0.0, %v1361
        %1363 = vdwg.mxu0
        %v1364 = vadd.f32 %v835, %v1206
        %v1365 = vadd.f32 %v837, %v1208
        %v1366 = vadd.f32 %v839, %v1210
        %v1367 = vadd.f32 %v841, %v1212
        %v1368 = vadd.f32 %v845, %v1216
        %v1369 = vadd.f32 %v847, %v1218
        %v1370 = vadd.f32 %v849, %v1220
        %v1371 = vadd.f32 %v851, %v1222
        %v1372 = vadd.f32 %v855, %v1226
        %v1373 = vadd.f32 %v857, %v1228
        %v1374 = vadd.f32 %v859, %v1230
        %v1375 = vadd.f32 %v861, %v1232
        %v1376 = vadd.f32 %v865, %v1236
        %v1377 = vadd.f32 %v867, %v1238
        %v1378 = vadd.f32 %v869, %v1240
        %v1379 = vadd.f32 %v871, %v1242
        %v1380 = vadd.f32 %v875, %v1246
        %v1381 = vadd.f32 %v877, %v1248
        %v1382 = vadd.f32 %v879, %v1250
        %v1383 = vadd.f32 %v881, %v1252
        %v1384 = vadd.f32 %v885, %v1256
        %v1385 = vadd.f32 %v887, %v1258
        %v1386 = vadd.f32 %v889, %v1260
        %v1387 = vadd.f32 %v891, %v1262
        %v1388 = vadd.f32 %v895, %v1266
        %v1389 = vadd.f32 %v897, %v1268
        %v1390 = vadd.f32 %v899, %v1270
        %v1391 = vadd.f32 %v901, %v1272
        %v1392 = vadd.f32 %v905, %v1276
        %v1393 = vadd.f32 %v907, %v1278
        %v1394 = vadd.f32 %v909, %v1280
        %v1395 = vadd.f32 %v911, %v1282
        %v1396 = vadd.f32 %v915, %v1286
        %v1397 = vadd.f32 %v917, %v1288
        %v1398 = vadd.f32 %v919, %v1290
        %v1399 = vadd.f32 %v921, %v1292
        %v1400 = vadd.f32 %v925, %v1296
        %v1401 = vadd.f32 %v927, %v1298
        %v1402 = vadd.f32 %v929, %v1300
        %v1403 = vadd.f32 %v931, %v1302
        %v1404 = vadd.f32 %v935, %v1306
        %v1405 = vadd.f32 %v937, %v1308
        %v1406 = vadd.f32 %v939, %v1310
        %v1407 = vadd.f32 %v941, %v1312
        %v1408 = vadd.f32 %v945, %v1316
        %v1409 = vadd.f32 %v947, %v1318
        %v1410 = vadd.f32 %v949, %v1320
        %v1411 = vadd.f32 %v951, %v1322
        %v1412 = vadd.f32 %v955, %v1326
        %v1413 = vadd.f32 %v957, %v1328
        %v1414 = vadd.f32 %v959, %v1330
        %v1415 = vadd.f32 %v961, %v1332
        %v1416 = vadd.f32 %v965, %v1336
        %v1417 = vadd.f32 %v967, %v1338
        %v1418 = vadd.f32 %v969, %v1340
        %v1419 = vadd.f32 %v971, %v1342
        %v1420 = vadd.f32 %v975, %v1346
        %v1421 = vadd.f32 %v977, %v1348
        %v1422 = vadd.f32 %v979, %v1350
        %v1423 = vadd.f32 %v981, %v1352
        %v1424 = vadd.f32 %v985, %v1356
        %v1425 = vadd.f32 %v987, %v1358
        %v1426 = vadd.f32 %v989, %v1360
        %v1427 = vadd.f32 %v991, %v1362
        %s1428 = scalar_lea.vmem %s249, 128
        %v1429 = vld [vmem:[%s1428] sm:$0xf]
        %v1430 = vld [vmem:[%s1428 + $0x4] sm:$0xf]
        %v1431 = vld [vmem:[%s1428 + $0x8] sm:$0xf]
        %v1432 = vld [vmem:[%s1428 + $0xc] sm:$0xf]
        %v1433 = vld [vmem:[%s1428 + $0x10] sm:$0xf]
        %v1434 = vld [vmem:[%s1428 + $0x14] sm:$0xf]
        %v1435 = vld [vmem:[%s1428 + $0x18] sm:$0xf]
        %v1436 = vld [vmem:[%s1428 + $0x1c] sm:$0xf]
        %v1437 = vld [vmem:[%s1428 + $0x20] sm:$0xf]
        %v1438 = vld [vmem:[%s1428 + $0x24] sm:$0xf]
        %v1439 = vld [vmem:[%s1428 + $0x28] sm:$0xf]
        %v1440 = vld [vmem:[%s1428 + $0x2c] sm:$0xf]
        %v1441 = vld [vmem:[%s1428 + $0x30] sm:$0xf]
        %v1442 = vld [vmem:[%s1428 + $0x34] sm:$0xf]
        %v1443 = vld [vmem:[%s1428 + $0x38] sm:$0xf]
        %v1444 = vld [vmem:[%s1428 + $0x3c] sm:$0xf]
        %v1445 = vld [vmem:[%s1428 + $0x80] sm:$0xf]
        %v1446 = vld [vmem:[%s1428 + $0x84] sm:$0xf]
        %v1447 = vld [vmem:[%s1428 + $0x88] sm:$0xf]
        %v1448 = vld [vmem:[%s1428 + $0x8c] sm:$0xf]
        %v1449 = vld [vmem:[%s1428 + $0x90] sm:$0xf]
        %v1450 = vld [vmem:[%s1428 + $0x94] sm:$0xf]
        %v1451 = vld [vmem:[%s1428 + $0x98] sm:$0xf]
        %v1452 = vld [vmem:[%s1428 + $0x9c] sm:$0xf]
        %v1453 = vld [vmem:[%s1428 + $0xa0] sm:$0xf]
        %v1454 = vld [vmem:[%s1428 + $0xa4] sm:$0xf]
        %v1455 = vld [vmem:[%s1428 + $0xa8] sm:$0xf]
        %v1456 = vld [vmem:[%s1428 + $0xac] sm:$0xf]
        %v1457 = vld [vmem:[%s1428 + $0xb0] sm:$0xf]
        %v1458 = vld [vmem:[%s1428 + $0xb4] sm:$0xf]
        %v1459 = vld [vmem:[%s1428 + $0xb8] sm:$0xf]
        %v1460 = vld [vmem:[%s1428 + $0xbc] sm:$0xf]
        %s1461 = scalar_lea.vmem %s1, 12
        %v1462 = vld [vmem:[%s1461] sm:$0xf]
        %v1495 = vunpack.c.l.b16 %v1429
        %v1496 = vunpack.c.l.b16 %v1430
        %v1497 = vunpack.c.l.b16 %v1431
        %v1498 = vunpack.c.l.b16 %v1432
        %v1499 = vunpack.c.l.b16 %v1433
        %v1500 = vunpack.c.l.b16 %v1434
        %v1501 = vunpack.c.l.b16 %v1435
        %v1502 = vunpack.c.l.b16 %v1436
        %v1503 = vunpack.c.l.b16 %v1437
        %v1504 = vunpack.c.l.b16 %v1438
        %v1505 = vunpack.c.l.b16 %v1439
        %v1506 = vunpack.c.l.b16 %v1440
        %v1507 = vunpack.c.l.b16 %v1441
        %v1508 = vunpack.c.l.b16 %v1442
        %v1509 = vunpack.c.l.b16 %v1443
        %v1510 = vunpack.c.l.b16 %v1444
        %v1511 = vunpack.c.l.b16 %v1445
        %v1512 = vunpack.c.l.b16 %v1446
        %v1513 = vunpack.c.l.b16 %v1447
        %v1514 = vunpack.c.l.b16 %v1448
        %v1515 = vunpack.c.l.b16 %v1449
        %v1516 = vunpack.c.l.b16 %v1450
        %v1517 = vunpack.c.l.b16 %v1451
        %v1518 = vunpack.c.l.b16 %v1452
        %v1519 = vunpack.c.l.b16 %v1453
        %v1520 = vunpack.c.l.b16 %v1454
        %v1521 = vunpack.c.l.b16 %v1455
        %v1522 = vunpack.c.l.b16 %v1456
        %v1523 = vunpack.c.l.b16 %v1457
        %v1524 = vunpack.c.l.b16 %v1458
        %v1525 = vunpack.c.l.b16 %v1459
        %v1526 = vunpack.c.l.b16 %v1460
        %v1527 = vpack.c.b16 %v1496, %v1495
        %v1528 = vpack.c.b16 %v1498, %v1497
        %v1529 = vpack.c.b16 %v1500, %v1499
        %v1530 = vpack.c.b16 %v1502, %v1501
        %v1531 = vpack.c.b16 %v1504, %v1503
        %v1532 = vpack.c.b16 %v1506, %v1505
        %v1533 = vpack.c.b16 %v1508, %v1507
        %v1534 = vpack.c.b16 %v1510, %v1509
        %v1535 = vpack.c.b16 %v1512, %v1511
        %v1536 = vpack.c.b16 %v1514, %v1513
        %v1537 = vpack.c.b16 %v1516, %v1515
        %v1538 = vpack.c.b16 %v1518, %v1517
        %v1539 = vpack.c.b16 %v1520, %v1519
        %v1540 = vpack.c.b16 %v1522, %v1521
        %v1541 = vpack.c.b16 %v1524, %v1523
        %v1542 = vpack.c.b16 %v1526, %v1525
        %v1545 = vunpack.c.l.s4 1983009808
        %v1546 = vunpack.c.0.s8 %v1545
        %v1547 = vlaneseq
        %v1548 = vshrl.u32 %v1547, 7
        %v1549 = vsub.s32 %v1546, %v1548
        %v1550 = vrot.slane %v1462, %v1549
        %v1551 = vcombine.high %v1550, %v1550
        %v1553 = vsel %vm408, %v1527, 0
        %v1556 = vsel %vm408, %v1528, 0
        %v1559 = vsel %vm408, %v1529, 0
        %v1562 = vsel %vm408, %v1530, 0
        %v1565 = vsel %vm408, %v1531, 0
        %v1568 = vsel %vm408, %v1532, 0
        %v1571 = vsel %vm408, %v1533, 0
        %v1574 = vsel %vm408, %v1534, 0
        %v1577 = vsel %vm408, %v1535, 0
        %v1580 = vsel %vm408, %v1536, 0
        %v1583 = vsel %vm408, %v1537, 0
        %v1586 = vsel %vm408, %v1538, 0
        %v1589 = vsel %vm408, %v1539, 0
        %v1592 = vsel %vm408, %v1540, 0
        %v1595 = vsel %vm408, %v1541, 0
        %v1598 = vsel %vm408, %v1542, 0
        %v1601 = vsel %vm457, %v1550, 0
        %v1604 = vsel %vm457, %v1551, 0
        %1606 = vmatprep.subr.bf16.mxu0 0
        %1607 = vmatpush1.bf16.msra.mxu0 0
        %1608 = vmatprep.subr.bf16.mxu0 0
        %1609 = vmatpush1.bf16.msra.mxu0 0
        %1610 = vmatprep.subr.bf16.mxu0 0
        %1611 = vmatpush1.bf16.msra.mxu0 0
        %1612 = vmatprep.subr.bf16.mxu0 0
        %1613 = vmatpush1.bf16.msra.mxu0 0
        %1614 = vmatprep.subr.bf16.mxu0 0
        %1615 = vmatpush1.bf16.msra.mxu0 0
        %1616 = vmatprep.subr.bf16.mxu0 0
        %1617 = vmatpush1.bf16.msra.mxu0 0
        %1618 = vmatprep.subr.bf16.mxu0 0
        %1619 = vmatpush1.bf16.msra.mxu0 0
        %1620 = vmatprep.subr.bf16.mxu0 %v1604
        %1621 = vmatpush1.bf16.msra.mxu0 %v1601
        %1622 = vmatprep.subr.bf16.mxu0 0
        %1623 = vmatpush2.bf16.msra.mxu0 0
        %1624 = vmatprep.subr.bf16.mxu0 0
        %1625 = vmatpush2.bf16.msra.mxu0 0
        %1626 = vmatprep.subr.bf16.mxu0 0
        %1627 = vmatpush2.bf16.msra.mxu0 0
        %1628 = vmatprep.subr.bf16.mxu0 0
        %1629 = vmatpush2.bf16.msra.mxu0 0
        %1630 = vmatprep.subr.bf16.mxu0 0
        %1631 = vmatpush2.bf16.msra.mxu0 0
        %1632 = vmatprep.subr.bf16.mxu0 0
        %1633 = vmatpush2.bf16.msra.mxu0 0
        %1634 = vmatprep.subr.bf16.mxu0 0
        %1635 = vmatpush2.bf16.msra.mxu0 0
        %1636 = vmatprep.subr.bf16.mxu0 0
        %1637 = vmatpush2.bf16.msra.mxu0 0
        %1638 = vmatprep.mubr.bf16.mxu0 0
        %1639 = vmatmul.mubr.bf16.gmra.mxu0 %v1553
        %v1640 = vpop.f32.mrf.mxu0
        %v1641 = vadd.f32 0.0, %v1640
        %v1642 = vpop.f32.mrf.mxu0
        %v1643 = vadd.f32 0.0, %v1642
        %v1644 = vpop.f32.mrf.mxu0
        %v1645 = vadd.f32 0.0, %v1644
        %v1646 = vpop.f32.mrf.mxu0
        %v1647 = vadd.f32 0.0, %v1646
        %1648 = vmatprep.mubr.bf16.mxu0 0
        %1649 = vmatmul.mubr.bf16.gmra.mxu0 %v1556
        %v1650 = vpop.f32.mrf.mxu0
        %v1651 = vadd.f32 0.0, %v1650
        %v1652 = vpop.f32.mrf.mxu0
        %v1653 = vadd.f32 0.0, %v1652
        %v1654 = vpop.f32.mrf.mxu0
        %v1655 = vadd.f32 0.0, %v1654
        %v1656 = vpop.f32.mrf.mxu0
        %v1657 = vadd.f32 0.0, %v1656
        %1658 = vmatprep.mubr.bf16.mxu0 0
        %1659 = vmatmul.mubr.bf16.gmra.mxu0 %v1559
        %v1660 = vpop.f32.mrf.mxu0
        %v1661 = vadd.f32 0.0, %v1660
        %v1662 = vpop.f32.mrf.mxu0
        %v1663 = vadd.f32 0.0, %v1662
        %v1664 = vpop.f32.mrf.mxu0
        %v1665 = vadd.f32 0.0, %v1664
        %v1666 = vpop.f32.mrf.mxu0
        %v1667 = vadd.f32 0.0, %v1666
        %1668 = vmatprep.mubr.bf16.mxu0 0
        %1669 = vmatmul.mubr.bf16.gmra.mxu0 %v1562
        %v1670 = vpop.f32.mrf.mxu0
        %v1671 = vadd.f32 0.0, %v1670
        %v1672 = vpop.f32.mrf.mxu0
        %v1673 = vadd.f32 0.0, %v1672
        %v1674 = vpop.f32.mrf.mxu0
        %v1675 = vadd.f32 0.0, %v1674
        %v1676 = vpop.f32.mrf.mxu0
        %v1677 = vadd.f32 0.0, %v1676
        %1678 = vmatprep.mubr.bf16.mxu0 0
        %1679 = vmatmul.mubr.bf16.gmra.mxu0 %v1565
        %v1680 = vpop.f32.mrf.mxu0
        %v1681 = vadd.f32 0.0, %v1680
        %v1682 = vpop.f32.mrf.mxu0
        %v1683 = vadd.f32 0.0, %v1682
        %v1684 = vpop.f32.mrf.mxu0
        %v1685 = vadd.f32 0.0, %v1684
        %v1686 = vpop.f32.mrf.mxu0
        %v1687 = vadd.f32 0.0, %v1686
        %1688 = vmatprep.mubr.bf16.mxu0 0
        %1689 = vmatmul.mubr.bf16.gmra.mxu0 %v1568
        %v1690 = vpop.f32.mrf.mxu0
        %v1691 = vadd.f32 0.0, %v1690
        %v1692 = vpop.f32.mrf.mxu0
        %v1693 = vadd.f32 0.0, %v1692
        %v1694 = vpop.f32.mrf.mxu0
        %v1695 = vadd.f32 0.0, %v1694
        %v1696 = vpop.f32.mrf.mxu0
        %v1697 = vadd.f32 0.0, %v1696
        %1698 = vmatprep.mubr.bf16.mxu0 0
        %1699 = vmatmul.mubr.bf16.gmra.mxu0 %v1571
        %v1700 = vpop.f32.mrf.mxu0
        %v1701 = vadd.f32 0.0, %v1700
        %v1702 = vpop.f32.mrf.mxu0
        %v1703 = vadd.f32 0.0, %v1702
        %v1704 = vpop.f32.mrf.mxu0
        %v1705 = vadd.f32 0.0, %v1704
        %v1706 = vpop.f32.mrf.mxu0
        %v1707 = vadd.f32 0.0, %v1706
        %1708 = vmatprep.mubr.bf16.mxu0 0
        %1709 = vmatmul.mubr.bf16.gmra.mxu0 %v1574
        %v1710 = vpop.f32.mrf.mxu0
        %v1711 = vadd.f32 0.0, %v1710
        %v1712 = vpop.f32.mrf.mxu0
        %v1713 = vadd.f32 0.0, %v1712
        %v1714 = vpop.f32.mrf.mxu0
        %v1715 = vadd.f32 0.0, %v1714
        %v1716 = vpop.f32.mrf.mxu0
        %v1717 = vadd.f32 0.0, %v1716
        %1718 = vmatprep.mubr.bf16.mxu0 0
        %1719 = vmatmul.mubr.bf16.gmra.mxu0 %v1577
        %v1720 = vpop.f32.mrf.mxu0
        %v1721 = vadd.f32 0.0, %v1720
        %v1722 = vpop.f32.mrf.mxu0
        %v1723 = vadd.f32 0.0, %v1722
        %v1724 = vpop.f32.mrf.mxu0
        %v1725 = vadd.f32 0.0, %v1724
        %v1726 = vpop.f32.mrf.mxu0
        %v1727 = vadd.f32 0.0, %v1726
        %1728 = vmatprep.mubr.bf16.mxu0 0
        %1729 = vmatmul.mubr.bf16.gmra.mxu0 %v1580
        %v1730 = vpop.f32.mrf.mxu0
        %v1731 = vadd.f32 0.0, %v1730
        %v1732 = vpop.f32.mrf.mxu0
        %v1733 = vadd.f32 0.0, %v1732
        %v1734 = vpop.f32.mrf.mxu0
        %v1735 = vadd.f32 0.0, %v1734
        %v1736 = vpop.f32.mrf.mxu0
        %v1737 = vadd.f32 0.0, %v1736
        %1738 = vmatprep.mubr.bf16.mxu0 0
        %1739 = vmatmul.mubr.bf16.gmra.mxu0 %v1583
        %v1740 = vpop.f32.mrf.mxu0
        %v1741 = vadd.f32 0.0, %v1740
        %v1742 = vpop.f32.mrf.mxu0
        %v1743 = vadd.f32 0.0, %v1742
        %v1744 = vpop.f32.mrf.mxu0
        %v1745 = vadd.f32 0.0, %v1744
        %v1746 = vpop.f32.mrf.mxu0
        %v1747 = vadd.f32 0.0, %v1746
        %1748 = vmatprep.mubr.bf16.mxu0 0
        %1749 = vmatmul.mubr.bf16.gmra.mxu0 %v1586
        %v1750 = vpop.f32.mrf.mxu0
        %v1751 = vadd.f32 0.0, %v1750
        %v1752 = vpop.f32.mrf.mxu0
        %v1753 = vadd.f32 0.0, %v1752
        %v1754 = vpop.f32.mrf.mxu0
        %v1755 = vadd.f32 0.0, %v1754
        %v1756 = vpop.f32.mrf.mxu0
        %v1757 = vadd.f32 0.0, %v1756
        %1758 = vmatprep.mubr.bf16.mxu0 0
        %1759 = vmatmul.mubr.bf16.gmra.mxu0 %v1589
        %v1760 = vpop.f32.mrf.mxu0
        %v1761 = vadd.f32 0.0, %v1760
        %v1762 = vpop.f32.mrf.mxu0
        %v1763 = vadd.f32 0.0, %v1762
        %v1764 = vpop.f32.mrf.mxu0
        %v1765 = vadd.f32 0.0, %v1764
        %v1766 = vpop.f32.mrf.mxu0
        %v1767 = vadd.f32 0.0, %v1766
        %1768 = vmatprep.mubr.bf16.mxu0 0
        %1769 = vmatmul.mubr.bf16.gmra.mxu0 %v1592
        %v1770 = vpop.f32.mrf.mxu0
        %v1771 = vadd.f32 0.0, %v1770
        %v1772 = vpop.f32.mrf.mxu0
        %v1773 = vadd.f32 0.0, %v1772
        %v1774 = vpop.f32.mrf.mxu0
        %v1775 = vadd.f32 0.0, %v1774
        %v1776 = vpop.f32.mrf.mxu0
        %v1777 = vadd.f32 0.0, %v1776
        %1778 = vmatprep.mubr.bf16.mxu0 0
        %1779 = vmatmul.mubr.bf16.gmra.mxu0 %v1595
        %v1780 = vpop.f32.mrf.mxu0
        %v1781 = vadd.f32 0.0, %v1780
        %v1782 = vpop.f32.mrf.mxu0
        %v1783 = vadd.f32 0.0, %v1782
        %v1784 = vpop.f32.mrf.mxu0
        %v1785 = vadd.f32 0.0, %v1784
        %v1786 = vpop.f32.mrf.mxu0
        %v1787 = vadd.f32 0.0, %v1786
        %1788 = vmatprep.mubr.bf16.mxu0 0
        %1789 = vmatmul.mubr.bf16.gmra.mxu0 %v1598
        %v1790 = vpop.f32.mrf.mxu0
        %v1791 = vadd.f32 0.0, %v1790
        %v1792 = vpop.f32.mrf.mxu0
        %v1793 = vadd.f32 0.0, %v1792
        %v1794 = vpop.f32.mrf.mxu0
        %v1795 = vadd.f32 0.0, %v1794
        %v1796 = vpop.f32.mrf.mxu0
        %v1797 = vadd.f32 0.0, %v1796
        %1798 = vdwg.mxu0
        %v1799 = vadd.f32 %v1364, %v1641
        %v1800 = vadd.f32 %v1365, %v1643
        %v1801 = vadd.f32 %v1366, %v1645
        %v1802 = vadd.f32 %v1367, %v1647
        %v1803 = vadd.f32 %v1368, %v1651
        %v1804 = vadd.f32 %v1369, %v1653
        %v1805 = vadd.f32 %v1370, %v1655
        %v1806 = vadd.f32 %v1371, %v1657
        %v1807 = vadd.f32 %v1372, %v1661
        %v1808 = vadd.f32 %v1373, %v1663
        %v1809 = vadd.f32 %v1374, %v1665
        %v1810 = vadd.f32 %v1375, %v1667
        %v1811 = vadd.f32 %v1376, %v1671
        %v1812 = vadd.f32 %v1377, %v1673
        %v1813 = vadd.f32 %v1378, %v1675
        %v1814 = vadd.f32 %v1379, %v1677
        %v1815 = vadd.f32 %v1380, %v1681
        %v1816 = vadd.f32 %v1381, %v1683
        %v1817 = vadd.f32 %v1382, %v1685
        %v1818 = vadd.f32 %v1383, %v1687
        %v1819 = vadd.f32 %v1384, %v1691
        %v1820 = vadd.f32 %v1385, %v1693
        %v1821 = vadd.f32 %v1386, %v1695
        %v1822 = vadd.f32 %v1387, %v1697
        %v1823 = vadd.f32 %v1388, %v1701
        %v1824 = vadd.f32 %v1389, %v1703
        %v1825 = vadd.f32 %v1390, %v1705
        %v1826 = vadd.f32 %v1391, %v1707
        %v1827 = vadd.f32 %v1392, %v1711
        %v1828 = vadd.f32 %v1393, %v1713
        %v1829 = vadd.f32 %v1394, %v1715
        %v1830 = vadd.f32 %v1395, %v1717
        %v1831 = vadd.f32 %v1396, %v1721
        %v1832 = vadd.f32 %v1397, %v1723
        %v1833 = vadd.f32 %v1398, %v1725
        %v1834 = vadd.f32 %v1399, %v1727
        %v1835 = vadd.f32 %v1400, %v1731
        %v1836 = vadd.f32 %v1401, %v1733
        %v1837 = vadd.f32 %v1402, %v1735
        %v1838 = vadd.f32 %v1403, %v1737
        %v1839 = vadd.f32 %v1404, %v1741
        %v1840 = vadd.f32 %v1405, %v1743
        %v1841 = vadd.f32 %v1406, %v1745
        %v1842 = vadd.f32 %v1407, %v1747
        %v1843 = vadd.f32 %v1408, %v1751
        %v1844 = vadd.f32 %v1409, %v1753
        %v1845 = vadd.f32 %v1410, %v1755
        %v1846 = vadd.f32 %v1411, %v1757
        %v1847 = vadd.f32 %v1412, %v1761
        %v1848 = vadd.f32 %v1413, %v1763
        %v1849 = vadd.f32 %v1414, %v1765
        %v1850 = vadd.f32 %v1415, %v1767
        %v1851 = vadd.f32 %v1416, %v1771
        %v1852 = vadd.f32 %v1417, %v1773
        %v1853 = vadd.f32 %v1418, %v1775
        %v1854 = vadd.f32 %v1419, %v1777
        %v1855 = vadd.f32 %v1420, %v1781
        %v1856 = vadd.f32 %v1421, %v1783
        %v1857 = vadd.f32 %v1422, %v1785
        %v1858 = vadd.f32 %v1423, %v1787
        %v1859 = vadd.f32 %v1424, %v1791
        %v1860 = vadd.f32 %v1425, %v1793
        %v1861 = vadd.f32 %v1426, %v1795
        %v1862 = vadd.f32 %v1427, %v1797
        %s1863 = scalar_lea.vmem %s249, 160
        %v1864 = vld [vmem:[%s1863] sm:$0xf]
        %v1865 = vld [vmem:[%s1863 + $0x4] sm:$0xf]
        %v1866 = vld [vmem:[%s1863 + $0x8] sm:$0xf]
        %v1867 = vld [vmem:[%s1863 + $0xc] sm:$0xf]
        %v1868 = vld [vmem:[%s1863 + $0x10] sm:$0xf]
        %v1869 = vld [vmem:[%s1863 + $0x14] sm:$0xf]
        %v1870 = vld [vmem:[%s1863 + $0x18] sm:$0xf]
        %v1871 = vld [vmem:[%s1863 + $0x1c] sm:$0xf]
        %v1872 = vld [vmem:[%s1863 + $0x20] sm:$0xf]
        %v1873 = vld [vmem:[%s1863 + $0x24] sm:$0xf]
        %v1874 = vld [vmem:[%s1863 + $0x28] sm:$0xf]
        %v1875 = vld [vmem:[%s1863 + $0x2c] sm:$0xf]
        %v1876 = vld [vmem:[%s1863 + $0x30] sm:$0xf]
        %v1877 = vld [vmem:[%s1863 + $0x34] sm:$0xf]
        %v1878 = vld [vmem:[%s1863 + $0x38] sm:$0xf]
        %v1879 = vld [vmem:[%s1863 + $0x3c] sm:$0xf]
        %v1880 = vld [vmem:[%s1863 + $0x80] sm:$0xf]
        %v1881 = vld [vmem:[%s1863 + $0x84] sm:$0xf]
        %v1882 = vld [vmem:[%s1863 + $0x88] sm:$0xf]
        %v1883 = vld [vmem:[%s1863 + $0x8c] sm:$0xf]
        %v1884 = vld [vmem:[%s1863 + $0x90] sm:$0xf]
        %v1885 = vld [vmem:[%s1863 + $0x94] sm:$0xf]
        %v1886 = vld [vmem:[%s1863 + $0x98] sm:$0xf]
        %v1887 = vld [vmem:[%s1863 + $0x9c] sm:$0xf]
        %v1888 = vld [vmem:[%s1863 + $0xa0] sm:$0xf]
        %v1889 = vld [vmem:[%s1863 + $0xa4] sm:$0xf]
        %v1890 = vld [vmem:[%s1863 + $0xa8] sm:$0xf]
        %v1891 = vld [vmem:[%s1863 + $0xac] sm:$0xf]
        %v1892 = vld [vmem:[%s1863 + $0xb0] sm:$0xf]
        %v1893 = vld [vmem:[%s1863 + $0xb4] sm:$0xf]
        %v1894 = vld [vmem:[%s1863 + $0xb8] sm:$0xf]
        %v1895 = vld [vmem:[%s1863 + $0xbc] sm:$0xf]
        %s1896 = scalar_lea.vmem %s1, 16
        %v1897 = vld [vmem:[%s1896] sm:$0xf]
        %v1930 = vunpack.c.l.b16 %v1864
        %v1931 = vunpack.c.l.b16 %v1865
        %v1932 = vunpack.c.l.b16 %v1866
        %v1933 = vunpack.c.l.b16 %v1867
        %v1934 = vunpack.c.l.b16 %v1868
        %v1935 = vunpack.c.l.b16 %v1869
        %v1936 = vunpack.c.l.b16 %v1870
        %v1937 = vunpack.c.l.b16 %v1871
        %v1938 = vunpack.c.l.b16 %v1872
        %v1939 = vunpack.c.l.b16 %v1873
        %v1940 = vunpack.c.l.b16 %v1874
        %v1941 = vunpack.c.l.b16 %v1875
        %v1942 = vunpack.c.l.b16 %v1876
        %v1943 = vunpack.c.l.b16 %v1877
        %v1944 = vunpack.c.l.b16 %v1878
        %v1945 = vunpack.c.l.b16 %v1879
        %v1946 = vunpack.c.l.b16 %v1880
        %v1947 = vunpack.c.l.b16 %v1881
        %v1948 = vunpack.c.l.b16 %v1882
        %v1949 = vunpack.c.l.b16 %v1883
        %v1950 = vunpack.c.l.b16 %v1884
        %v1951 = vunpack.c.l.b16 %v1885
        %v1952 = vunpack.c.l.b16 %v1886
        %v1953 = vunpack.c.l.b16 %v1887
        %v1954 = vunpack.c.l.b16 %v1888
        %v1955 = vunpack.c.l.b16 %v1889
        %v1956 = vunpack.c.l.b16 %v1890
        %v1957 = vunpack.c.l.b16 %v1891
        %v1958 = vunpack.c.l.b16 %v1892
        %v1959 = vunpack.c.l.b16 %v1893
        %v1960 = vunpack.c.l.b16 %v1894
        %v1961 = vunpack.c.l.b16 %v1895
        %v1962 = vpack.c.b16 %v1931, %v1930
        %v1963 = vpack.c.b16 %v1933, %v1932
        %v1964 = vpack.c.b16 %v1935, %v1934
        %v1965 = vpack.c.b16 %v1937, %v1936
        %v1966 = vpack.c.b16 %v1939, %v1938
        %v1967 = vpack.c.b16 %v1941, %v1940
        %v1968 = vpack.c.b16 %v1943, %v1942
        %v1969 = vpack.c.b16 %v1945, %v1944
        %v1970 = vpack.c.b16 %v1947, %v1946
        %v1971 = vpack.c.b16 %v1949, %v1948
        %v1972 = vpack.c.b16 %v1951, %v1950
        %v1973 = vpack.c.b16 %v1953, %v1952
        %v1974 = vpack.c.b16 %v1955, %v1954
        %v1975 = vpack.c.b16 %v1957, %v1956
        %v1976 = vpack.c.b16 %v1959, %v1958
        %v1977 = vpack.c.b16 %v1961, %v1960
        %v1980 = vunpack.c.l.s4 1983009808
        %v1981 = vunpack.c.0.s8 %v1980
        %v1982 = vlaneseq
        %v1983 = vshrl.u32 %v1982, 7
        %v1984 = vsub.s32 %v1981, %v1983
        %v1985 = vrot.slane %v1897, %v1984
        %v1986 = vcombine.high %v1985, %v1985
        %v1988 = vsel %vm408, %v1962, 0
        %v1991 = vsel %vm408, %v1963, 0
        %v1994 = vsel %vm408, %v1964, 0
        %v1997 = vsel %vm408, %v1965, 0
        %v2000 = vsel %vm408, %v1966, 0
        %v2003 = vsel %vm408, %v1967, 0
        %v2006 = vsel %vm408, %v1968, 0
        %v2009 = vsel %vm408, %v1969, 0
        %v2012 = vsel %vm408, %v1970, 0
        %v2015 = vsel %vm408, %v1971, 0
        %v2018 = vsel %vm408, %v1972, 0
        %v2021 = vsel %vm408, %v1973, 0
        %v2024 = vsel %vm408, %v1974, 0
        %v2027 = vsel %vm408, %v1975, 0
        %v2030 = vsel %vm408, %v1976, 0
        %v2033 = vsel %vm408, %v1977, 0
        %v2036 = vsel %vm457, %v1985, 0
        %v2039 = vsel %vm457, %v1986, 0
        %2041 = vmatprep.subr.bf16.mxu0 0
        %2042 = vmatpush1.bf16.msra.mxu0 0
        %2043 = vmatprep.subr.bf16.mxu0 0
        %2044 = vmatpush1.bf16.msra.mxu0 0
        %2045 = vmatprep.subr.bf16.mxu0 0
        %2046 = vmatpush1.bf16.msra.mxu0 0
        %2047 = vmatprep.subr.bf16.mxu0 0
        %2048 = vmatpush1.bf16.msra.mxu0 0
        %2049 = vmatprep.subr.bf16.mxu0 0
        %2050 = vmatpush1.bf16.msra.mxu0 0
        %2051 = vmatprep.subr.bf16.mxu0 0
        %2052 = vmatpush1.bf16.msra.mxu0 0
        %2053 = vmatprep.subr.bf16.mxu0 0
        %2054 = vmatpush1.bf16.msra.mxu0 0
        %2055 = vmatprep.subr.bf16.mxu0 %v2039
        %2056 = vmatpush1.bf16.msra.mxu0 %v2036
        %2057 = vmatprep.subr.bf16.mxu0 0
        %2058 = vmatpush2.bf16.msra.mxu0 0
        %2059 = vmatprep.subr.bf16.mxu0 0
        %2060 = vmatpush2.bf16.msra.mxu0 0
        %2061 = vmatprep.subr.bf16.mxu0 0
        %2062 = vmatpush2.bf16.msra.mxu0 0
        %2063 = vmatprep.subr.bf16.mxu0 0
        %2064 = vmatpush2.bf16.msra.mxu0 0
        %2065 = vmatprep.subr.bf16.mxu0 0
        %2066 = vmatpush2.bf16.msra.mxu0 0
        %2067 = vmatprep.subr.bf16.mxu0 0
        %2068 = vmatpush2.bf16.msra.mxu0 0
        %2069 = vmatprep.subr.bf16.mxu0 0
        %2070 = vmatpush2.bf16.msra.mxu0 0
        %2071 = vmatprep.subr.bf16.mxu0 0
        %2072 = vmatpush2.bf16.msra.mxu0 0
        %2073 = vmatprep.mubr.bf16.mxu0 0
        %2074 = vmatmul.mubr.bf16.gmra.mxu0 %v1988
        %v2075 = vpop.f32.mrf.mxu0
        %v2076 = vadd.f32 0.0, %v2075
        %v2077 = vpop.f32.mrf.mxu0
        %v2078 = vadd.f32 0.0, %v2077
        %v2079 = vpop.f32.mrf.mxu0
        %v2080 = vadd.f32 0.0, %v2079
        %v2081 = vpop.f32.mrf.mxu0
        %v2082 = vadd.f32 0.0, %v2081
        %2083 = vmatprep.mubr.bf16.mxu0 0
        %2084 = vmatmul.mubr.bf16.gmra.mxu0 %v1991
        %v2085 = vpop.f32.mrf.mxu0
        %v2086 = vadd.f32 0.0, %v2085
        %v2087 = vpop.f32.mrf.mxu0
        %v2088 = vadd.f32 0.0, %v2087
        %v2089 = vpop.f32.mrf.mxu0
        %v2090 = vadd.f32 0.0, %v2089
        %v2091 = vpop.f32.mrf.mxu0
        %v2092 = vadd.f32 0.0, %v2091
        %2093 = vmatprep.mubr.bf16.mxu0 0
        %2094 = vmatmul.mubr.bf16.gmra.mxu0 %v1994
        %v2095 = vpop.f32.mrf.mxu0
        %v2096 = vadd.f32 0.0, %v2095
        %v2097 = vpop.f32.mrf.mxu0
        %v2098 = vadd.f32 0.0, %v2097
        %v2099 = vpop.f32.mrf.mxu0
        %v2100 = vadd.f32 0.0, %v2099
        %v2101 = vpop.f32.mrf.mxu0
        %v2102 = vadd.f32 0.0, %v2101
        %2103 = vmatprep.mubr.bf16.mxu0 0
        %2104 = vmatmul.mubr.bf16.gmra.mxu0 %v1997
        %v2105 = vpop.f32.mrf.mxu0
        %v2106 = vadd.f32 0.0, %v2105
        %v2107 = vpop.f32.mrf.mxu0
        %v2108 = vadd.f32 0.0, %v2107
        %v2109 = vpop.f32.mrf.mxu0
        %v2110 = vadd.f32 0.0, %v2109
        %v2111 = vpop.f32.mrf.mxu0
        %v2112 = vadd.f32 0.0, %v2111
        %2113 = vmatprep.mubr.bf16.mxu0 0
        %2114 = vmatmul.mubr.bf16.gmra.mxu0 %v2000
        %v2115 = vpop.f32.mrf.mxu0
        %v2116 = vadd.f32 0.0, %v2115
        %v2117 = vpop.f32.mrf.mxu0
        %v2118 = vadd.f32 0.0, %v2117
        %v2119 = vpop.f32.mrf.mxu0
        %v2120 = vadd.f32 0.0, %v2119
        %v2121 = vpop.f32.mrf.mxu0
        %v2122 = vadd.f32 0.0, %v2121
        %2123 = vmatprep.mubr.bf16.mxu0 0
        %2124 = vmatmul.mubr.bf16.gmra.mxu0 %v2003
        %v2125 = vpop.f32.mrf.mxu0
        %v2126 = vadd.f32 0.0, %v2125
        %v2127 = vpop.f32.mrf.mxu0
        %v2128 = vadd.f32 0.0, %v2127
        %v2129 = vpop.f32.mrf.mxu0
        %v2130 = vadd.f32 0.0, %v2129
        %v2131 = vpop.f32.mrf.mxu0
        %v2132 = vadd.f32 0.0, %v2131
        %2133 = vmatprep.mubr.bf16.mxu0 0
        %2134 = vmatmul.mubr.bf16.gmra.mxu0 %v2006
        %v2135 = vpop.f32.mrf.mxu0
        %v2136 = vadd.f32 0.0, %v2135
        %v2137 = vpop.f32.mrf.mxu0
        %v2138 = vadd.f32 0.0, %v2137
        %v2139 = vpop.f32.mrf.mxu0
        %v2140 = vadd.f32 0.0, %v2139
        %v2141 = vpop.f32.mrf.mxu0
        %v2142 = vadd.f32 0.0, %v2141
        %2143 = vmatprep.mubr.bf16.mxu0 0
        %2144 = vmatmul.mubr.bf16.gmra.mxu0 %v2009
        %v2145 = vpop.f32.mrf.mxu0
        %v2146 = vadd.f32 0.0, %v2145
        %v2147 = vpop.f32.mrf.mxu0
        %v2148 = vadd.f32 0.0, %v2147
        %v2149 = vpop.f32.mrf.mxu0
        %v2150 = vadd.f32 0.0, %v2149
        %v2151 = vpop.f32.mrf.mxu0
        %v2152 = vadd.f32 0.0, %v2151
        %2153 = vmatprep.mubr.bf16.mxu0 0
        %2154 = vmatmul.mubr.bf16.gmra.mxu0 %v2012
        %v2155 = vpop.f32.mrf.mxu0
        %v2156 = vadd.f32 0.0, %v2155
        %v2157 = vpop.f32.mrf.mxu0
        %v2158 = vadd.f32 0.0, %v2157
        %v2159 = vpop.f32.mrf.mxu0
        %v2160 = vadd.f32 0.0, %v2159
        %v2161 = vpop.f32.mrf.mxu0
        %v2162 = vadd.f32 0.0, %v2161
        %2163 = vmatprep.mubr.bf16.mxu0 0
        %2164 = vmatmul.mubr.bf16.gmra.mxu0 %v2015
        %v2165 = vpop.f32.mrf.mxu0
        %v2166 = vadd.f32 0.0, %v2165
        %v2167 = vpop.f32.mrf.mxu0
        %v2168 = vadd.f32 0.0, %v2167
        %v2169 = vpop.f32.mrf.mxu0
        %v2170 = vadd.f32 0.0, %v2169
        %v2171 = vpop.f32.mrf.mxu0
        %v2172 = vadd.f32 0.0, %v2171
        %2173 = vmatprep.mubr.bf16.mxu0 0
        %2174 = vmatmul.mubr.bf16.gmra.mxu0 %v2018
        %v2175 = vpop.f32.mrf.mxu0
        %v2176 = vadd.f32 0.0, %v2175
        %v2177 = vpop.f32.mrf.mxu0
        %v2178 = vadd.f32 0.0, %v2177
        %v2179 = vpop.f32.mrf.mxu0
        %v2180 = vadd.f32 0.0, %v2179
        %v2181 = vpop.f32.mrf.mxu0
        %v2182 = vadd.f32 0.0, %v2181
        %2183 = vmatprep.mubr.bf16.mxu0 0
        %2184 = vmatmul.mubr.bf16.gmra.mxu0 %v2021
        %v2185 = vpop.f32.mrf.mxu0
        %v2186 = vadd.f32 0.0, %v2185
        %v2187 = vpop.f32.mrf.mxu0
        %v2188 = vadd.f32 0.0, %v2187
        %v2189 = vpop.f32.mrf.mxu0
        %v2190 = vadd.f32 0.0, %v2189
        %v2191 = vpop.f32.mrf.mxu0
        %v2192 = vadd.f32 0.0, %v2191
        %2193 = vmatprep.mubr.bf16.mxu0 0
        %2194 = vmatmul.mubr.bf16.gmra.mxu0 %v2024
        %v2195 = vpop.f32.mrf.mxu0
        %v2196 = vadd.f32 0.0, %v2195
        %v2197 = vpop.f32.mrf.mxu0
        %v2198 = vadd.f32 0.0, %v2197
        %v2199 = vpop.f32.mrf.mxu0
        %v2200 = vadd.f32 0.0, %v2199
        %v2201 = vpop.f32.mrf.mxu0
        %v2202 = vadd.f32 0.0, %v2201
        %2203 = vmatprep.mubr.bf16.mxu0 0
        %2204 = vmatmul.mubr.bf16.gmra.mxu0 %v2027
        %v2205 = vpop.f32.mrf.mxu0
        %v2206 = vadd.f32 0.0, %v2205
        %v2207 = vpop.f32.mrf.mxu0
        %v2208 = vadd.f32 0.0, %v2207
        %v2209 = vpop.f32.mrf.mxu0
        %v2210 = vadd.f32 0.0, %v2209
        %v2211 = vpop.f32.mrf.mxu0
        %v2212 = vadd.f32 0.0, %v2211
        %2213 = vmatprep.mubr.bf16.mxu0 0
        %2214 = vmatmul.mubr.bf16.gmra.mxu0 %v2030
        %v2215 = vpop.f32.mrf.mxu0
        %v2216 = vadd.f32 0.0, %v2215
        %v2217 = vpop.f32.mrf.mxu0
        %v2218 = vadd.f32 0.0, %v2217
        %v2219 = vpop.f32.mrf.mxu0
        %v2220 = vadd.f32 0.0, %v2219
        %v2221 = vpop.f32.mrf.mxu0
        %v2222 = vadd.f32 0.0, %v2221
        %2223 = vmatprep.mubr.bf16.mxu0 0
        %2224 = vmatmul.mubr.bf16.gmra.mxu0 %v2033
        %v2225 = vpop.f32.mrf.mxu0
        %v2226 = vadd.f32 0.0, %v2225
        %v2227 = vpop.f32.mrf.mxu0
        %v2228 = vadd.f32 0.0, %v2227
        %v2229 = vpop.f32.mrf.mxu0
        %v2230 = vadd.f32 0.0, %v2229
        %v2231 = vpop.f32.mrf.mxu0
        %v2232 = vadd.f32 0.0, %v2231
        %2233 = vdwg.mxu0
        %v2234 = vadd.f32 %v1799, %v2076
        %v2235 = vadd.f32 %v1800, %v2078
        %v2236 = vadd.f32 %v1801, %v2080
        %v2237 = vadd.f32 %v1802, %v2082
        %v2238 = vadd.f32 %v1803, %v2086
        %v2239 = vadd.f32 %v1804, %v2088
        %v2240 = vadd.f32 %v1805, %v2090
        %v2241 = vadd.f32 %v1806, %v2092
        %v2242 = vadd.f32 %v1807, %v2096
        %v2243 = vadd.f32 %v1808, %v2098
        %v2244 = vadd.f32 %v1809, %v2100
        %v2245 = vadd.f32 %v1810, %v2102
        %v2246 = vadd.f32 %v1811, %v2106
        %v2247 = vadd.f32 %v1812, %v2108
        %v2248 = vadd.f32 %v1813, %v2110
        %v2249 = vadd.f32 %v1814, %v2112
        %v2250 = vadd.f32 %v1815, %v2116
        %v2251 = vadd.f32 %v1816, %v2118
        %v2252 = vadd.f32 %v1817, %v2120
        %v2253 = vadd.f32 %v1818, %v2122
        %v2254 = vadd.f32 %v1819, %v2126
        %v2255 = vadd.f32 %v1820, %v2128
        %v2256 = vadd.f32 %v1821, %v2130
        %v2257 = vadd.f32 %v1822, %v2132
        %v2258 = vadd.f32 %v1823, %v2136
        %v2259 = vadd.f32 %v1824, %v2138
        %v2260 = vadd.f32 %v1825, %v2140
        %v2261 = vadd.f32 %v1826, %v2142
        %v2262 = vadd.f32 %v1827, %v2146
        %v2263 = vadd.f32 %v1828, %v2148
        %v2264 = vadd.f32 %v1829, %v2150
        %v2265 = vadd.f32 %v1830, %v2152
        %v2266 = vadd.f32 %v1831, %v2156
        %v2267 = vadd.f32 %v1832, %v2158
        %v2268 = vadd.f32 %v1833, %v2160
        %v2269 = vadd.f32 %v1834, %v2162
        %v2270 = vadd.f32 %v1835, %v2166
        %v2271 = vadd.f32 %v1836, %v2168
        %v2272 = vadd.f32 %v1837, %v2170
        %v2273 = vadd.f32 %v1838, %v2172
        %v2274 = vadd.f32 %v1839, %v2176
        %v2275 = vadd.f32 %v1840, %v2178
        %v2276 = vadd.f32 %v1841, %v2180
        %v2277 = vadd.f32 %v1842, %v2182
        %v2278 = vadd.f32 %v1843, %v2186
        %v2279 = vadd.f32 %v1844, %v2188
        %v2280 = vadd.f32 %v1845, %v2190
        %v2281 = vadd.f32 %v1846, %v2192
        %v2282 = vadd.f32 %v1847, %v2196
        %v2283 = vadd.f32 %v1848, %v2198
        %v2284 = vadd.f32 %v1849, %v2200
        %v2285 = vadd.f32 %v1850, %v2202
        %v2286 = vadd.f32 %v1851, %v2206
        %v2287 = vadd.f32 %v1852, %v2208
        %v2288 = vadd.f32 %v1853, %v2210
        %v2289 = vadd.f32 %v1854, %v2212
        %v2290 = vadd.f32 %v1855, %v2216
        %v2291 = vadd.f32 %v1856, %v2218
        %v2292 = vadd.f32 %v1857, %v2220
        %v2293 = vadd.f32 %v1858, %v2222
        %v2294 = vadd.f32 %v1859, %v2226
        %v2295 = vadd.f32 %v1860, %v2228
        %v2296 = vadd.f32 %v1861, %v2230
        %v2297 = vadd.f32 %v1862, %v2232
        %s2298 = scalar_lea.vmem %s249, 192
        %v2299 = vld [vmem:[%s2298] sm:$0xf]
        %v2300 = vld [vmem:[%s2298 + $0x4] sm:$0xf]
        %v2301 = vld [vmem:[%s2298 + $0x8] sm:$0xf]
        %v2302 = vld [vmem:[%s2298 + $0xc] sm:$0xf]
        %v2303 = vld [vmem:[%s2298 + $0x10] sm:$0xf]
        %v2304 = vld [vmem:[%s2298 + $0x14] sm:$0xf]
        %v2305 = vld [vmem:[%s2298 + $0x18] sm:$0xf]
        %v2306 = vld [vmem:[%s2298 + $0x1c] sm:$0xf]
        %v2307 = vld [vmem:[%s2298 + $0x20] sm:$0xf]
        %v2308 = vld [vmem:[%s2298 + $0x24] sm:$0xf]
        %v2309 = vld [vmem:[%s2298 + $0x28] sm:$0xf]
        %v2310 = vld [vmem:[%s2298 + $0x2c] sm:$0xf]
        %v2311 = vld [vmem:[%s2298 + $0x30] sm:$0xf]
        %v2312 = vld [vmem:[%s2298 + $0x34] sm:$0xf]
        %v2313 = vld [vmem:[%s2298 + $0x38] sm:$0xf]
        %v2314 = vld [vmem:[%s2298 + $0x3c] sm:$0xf]
        %v2315 = vld [vmem:[%s2298 + $0x80] sm:$0xf]
        %v2316 = vld [vmem:[%s2298 + $0x84] sm:$0xf]
        %v2317 = vld [vmem:[%s2298 + $0x88] sm:$0xf]
        %v2318 = vld [vmem:[%s2298 + $0x8c] sm:$0xf]
        %v2319 = vld [vmem:[%s2298 + $0x90] sm:$0xf]
        %v2320 = vld [vmem:[%s2298 + $0x94] sm:$0xf]
        %v2321 = vld [vmem:[%s2298 + $0x98] sm:$0xf]
        %v2322 = vld [vmem:[%s2298 + $0x9c] sm:$0xf]
        %v2323 = vld [vmem:[%s2298 + $0xa0] sm:$0xf]
        %v2324 = vld [vmem:[%s2298 + $0xa4] sm:$0xf]
        %v2325 = vld [vmem:[%s2298 + $0xa8] sm:$0xf]
        %v2326 = vld [vmem:[%s2298 + $0xac] sm:$0xf]
        %v2327 = vld [vmem:[%s2298 + $0xb0] sm:$0xf]
        %v2328 = vld [vmem:[%s2298 + $0xb4] sm:$0xf]
        %v2329 = vld [vmem:[%s2298 + $0xb8] sm:$0xf]
        %v2330 = vld [vmem:[%s2298 + $0xbc] sm:$0xf]
        %s2331 = scalar_lea.vmem %s1, 20
        %v2332 = vld [vmem:[%s2331] sm:$0xf]
        %v2365 = vunpack.c.l.b16 %v2299
        %v2366 = vunpack.c.l.b16 %v2300
        %v2367 = vunpack.c.l.b16 %v2301
        %v2368 = vunpack.c.l.b16 %v2302
        %v2369 = vunpack.c.l.b16 %v2303
        %v2370 = vunpack.c.l.b16 %v2304
        %v2371 = vunpack.c.l.b16 %v2305
        %v2372 = vunpack.c.l.b16 %v2306
        %v2373 = vunpack.c.l.b16 %v2307
        %v2374 = vunpack.c.l.b16 %v2308
        %v2375 = vunpack.c.l.b16 %v2309
        %v2376 = vunpack.c.l.b16 %v2310
        %v2377 = vunpack.c.l.b16 %v2311
        %v2378 = vunpack.c.l.b16 %v2312
        %v2379 = vunpack.c.l.b16 %v2313
        %v2380 = vunpack.c.l.b16 %v2314
        %v2381 = vunpack.c.l.b16 %v2315
        %v2382 = vunpack.c.l.b16 %v2316
        %v2383 = vunpack.c.l.b16 %v2317
        %v2384 = vunpack.c.l.b16 %v2318
        %v2385 = vunpack.c.l.b16 %v2319
        %v2386 = vunpack.c.l.b16 %v2320
        %v2387 = vunpack.c.l.b16 %v2321
        %v2388 = vunpack.c.l.b16 %v2322
        %v2389 = vunpack.c.l.b16 %v2323
        %v2390 = vunpack.c.l.b16 %v2324
        %v2391 = vunpack.c.l.b16 %v2325
        %v2392 = vunpack.c.l.b16 %v2326
        %v2393 = vunpack.c.l.b16 %v2327
        %v2394 = vunpack.c.l.b16 %v2328
        %v2395 = vunpack.c.l.b16 %v2329
        %v2396 = vunpack.c.l.b16 %v2330
        %v2397 = vpack.c.b16 %v2366, %v2365
        %v2398 = vpack.c.b16 %v2368, %v2367
        %v2399 = vpack.c.b16 %v2370, %v2369
        %v2400 = vpack.c.b16 %v2372, %v2371
        %v2401 = vpack.c.b16 %v2374, %v2373
        %v2402 = vpack.c.b16 %v2376, %v2375
        %v2403 = vpack.c.b16 %v2378, %v2377
        %v2404 = vpack.c.b16 %v2380, %v2379
        %v2405 = vpack.c.b16 %v2382, %v2381
        %v2406 = vpack.c.b16 %v2384, %v2383
        %v2407 = vpack.c.b16 %v2386, %v2385
        %v2408 = vpack.c.b16 %v2388, %v2387
        %v2409 = vpack.c.b16 %v2390, %v2389
        %v2410 = vpack.c.b16 %v2392, %v2391
        %v2411 = vpack.c.b16 %v2394, %v2393
        %v2412 = vpack.c.b16 %v2396, %v2395
        %v2415 = vunpack.c.l.s4 1983009808
        %v2416 = vunpack.c.0.s8 %v2415
        %v2417 = vlaneseq
        %v2418 = vshrl.u32 %v2417, 7
        %v2419 = vsub.s32 %v2416, %v2418
        %v2420 = vrot.slane %v2332, %v2419
        %v2421 = vcombine.high %v2420, %v2420
        %v2423 = vsel %vm408, %v2397, 0
        %v2426 = vsel %vm408, %v2398, 0
        %v2429 = vsel %vm408, %v2399, 0
        %v2432 = vsel %vm408, %v2400, 0
        %v2435 = vsel %vm408, %v2401, 0
        %v2438 = vsel %vm408, %v2402, 0
        %v2441 = vsel %vm408, %v2403, 0
        %v2444 = vsel %vm408, %v2404, 0
        %v2447 = vsel %vm408, %v2405, 0
        %v2450 = vsel %vm408, %v2406, 0
        %v2453 = vsel %vm408, %v2407, 0
        %v2456 = vsel %vm408, %v2408, 0
        %v2459 = vsel %vm408, %v2409, 0
        %v2462 = vsel %vm408, %v2410, 0
        %v2465 = vsel %vm408, %v2411, 0
        %v2468 = vsel %vm408, %v2412, 0
        %v2471 = vsel %vm457, %v2420, 0
        %v2474 = vsel %vm457, %v2421, 0
        %2476 = vmatprep.subr.bf16.mxu0 0
        %2477 = vmatpush1.bf16.msra.mxu0 0
        %2478 = vmatprep.subr.bf16.mxu0 0
        %2479 = vmatpush1.bf16.msra.mxu0 0
        %2480 = vmatprep.subr.bf16.mxu0 0
        %2481 = vmatpush1.bf16.msra.mxu0 0
        %2482 = vmatprep.subr.bf16.mxu0 0
        %2483 = vmatpush1.bf16.msra.mxu0 0
        %2484 = vmatprep.subr.bf16.mxu0 0
        %2485 = vmatpush1.bf16.msra.mxu0 0
        %2486 = vmatprep.subr.bf16.mxu0 0
        %2487 = vmatpush1.bf16.msra.mxu0 0
        %2488 = vmatprep.subr.bf16.mxu0 0
        %2489 = vmatpush1.bf16.msra.mxu0 0
        %2490 = vmatprep.subr.bf16.mxu0 %v2474
        %2491 = vmatpush1.bf16.msra.mxu0 %v2471
        %2492 = vmatprep.subr.bf16.mxu0 0
        %2493 = vmatpush2.bf16.msra.mxu0 0
        %2494 = vmatprep.subr.bf16.mxu0 0
        %2495 = vmatpush2.bf16.msra.mxu0 0
        %2496 = vmatprep.subr.bf16.mxu0 0
        %2497 = vmatpush2.bf16.msra.mxu0 0
        %2498 = vmatprep.subr.bf16.mxu0 0
        %2499 = vmatpush2.bf16.msra.mxu0 0
        %2500 = vmatprep.subr.bf16.mxu0 0
        %2501 = vmatpush2.bf16.msra.mxu0 0
        %2502 = vmatprep.subr.bf16.mxu0 0
        %2503 = vmatpush2.bf16.msra.mxu0 0
        %2504 = vmatprep.subr.bf16.mxu0 0
        %2505 = vmatpush2.bf16.msra.mxu0 0
        %2506 = vmatprep.subr.bf16.mxu0 0
        %2507 = vmatpush2.bf16.msra.mxu0 0
        %2508 = vmatprep.mubr.bf16.mxu0 0
        %2509 = vmatmul.mubr.bf16.gmra.mxu0 %v2423
        %v2510 = vpop.f32.mrf.mxu0
        %v2511 = vadd.f32 0.0, %v2510
        %v2512 = vpop.f32.mrf.mxu0
        %v2513 = vadd.f32 0.0, %v2512
        %v2514 = vpop.f32.mrf.mxu0
        %v2515 = vadd.f32 0.0, %v2514
        %v2516 = vpop.f32.mrf.mxu0
        %v2517 = vadd.f32 0.0, %v2516
        %2518 = vmatprep.mubr.bf16.mxu0 0
        %2519 = vmatmul.mubr.bf16.gmra.mxu0 %v2426
        %v2520 = vpop.f32.mrf.mxu0
        %v2521 = vadd.f32 0.0, %v2520
        %v2522 = vpop.f32.mrf.mxu0
        %v2523 = vadd.f32 0.0, %v2522
        %v2524 = vpop.f32.mrf.mxu0
        %v2525 = vadd.f32 0.0, %v2524
        %v2526 = vpop.f32.mrf.mxu0
        %v2527 = vadd.f32 0.0, %v2526
        %2528 = vmatprep.mubr.bf16.mxu0 0
        %2529 = vmatmul.mubr.bf16.gmra.mxu0 %v2429
        %v2530 = vpop.f32.mrf.mxu0
        %v2531 = vadd.f32 0.0, %v2530
        %v2532 = vpop.f32.mrf.mxu0
        %v2533 = vadd.f32 0.0, %v2532
        %v2534 = vpop.f32.mrf.mxu0
        %v2535 = vadd.f32 0.0, %v2534
        %v2536 = vpop.f32.mrf.mxu0
        %v2537 = vadd.f32 0.0, %v2536
        %2538 = vmatprep.mubr.bf16.mxu0 0
        %2539 = vmatmul.mubr.bf16.gmra.mxu0 %v2432
        %v2540 = vpop.f32.mrf.mxu0
        %v2541 = vadd.f32 0.0, %v2540
        %v2542 = vpop.f32.mrf.mxu0
        %v2543 = vadd.f32 0.0, %v2542
        %v2544 = vpop.f32.mrf.mxu0
        %v2545 = vadd.f32 0.0, %v2544
        %v2546 = vpop.f32.mrf.mxu0
        %v2547 = vadd.f32 0.0, %v2546
        %2548 = vmatprep.mubr.bf16.mxu0 0
        %2549 = vmatmul.mubr.bf16.gmra.mxu0 %v2435
        %v2550 = vpop.f32.mrf.mxu0
        %v2551 = vadd.f32 0.0, %v2550
        %v2552 = vpop.f32.mrf.mxu0
        %v2553 = vadd.f32 0.0, %v2552
        %v2554 = vpop.f32.mrf.mxu0
        %v2555 = vadd.f32 0.0, %v2554
        %v2556 = vpop.f32.mrf.mxu0
        %v2557 = vadd.f32 0.0, %v2556
        %2558 = vmatprep.mubr.bf16.mxu0 0
        %2559 = vmatmul.mubr.bf16.gmra.mxu0 %v2438
        %v2560 = vpop.f32.mrf.mxu0
        %v2561 = vadd.f32 0.0, %v2560
        %v2562 = vpop.f32.mrf.mxu0
        %v2563 = vadd.f32 0.0, %v2562
        %v2564 = vpop.f32.mrf.mxu0
        %v2565 = vadd.f32 0.0, %v2564
        %v2566 = vpop.f32.mrf.mxu0
        %v2567 = vadd.f32 0.0, %v2566
        %2568 = vmatprep.mubr.bf16.mxu0 0
        %2569 = vmatmul.mubr.bf16.gmra.mxu0 %v2441
        %v2570 = vpop.f32.mrf.mxu0
        %v2571 = vadd.f32 0.0, %v2570
        %v2572 = vpop.f32.mrf.mxu0
        %v2573 = vadd.f32 0.0, %v2572
        %v2574 = vpop.f32.mrf.mxu0
        %v2575 = vadd.f32 0.0, %v2574
        %v2576 = vpop.f32.mrf.mxu0
        %v2577 = vadd.f32 0.0, %v2576
        %2578 = vmatprep.mubr.bf16.mxu0 0
        %2579 = vmatmul.mubr.bf16.gmra.mxu0 %v2444
        %v2580 = vpop.f32.mrf.mxu0
        %v2581 = vadd.f32 0.0, %v2580
        %v2582 = vpop.f32.mrf.mxu0
        %v2583 = vadd.f32 0.0, %v2582
        %v2584 = vpop.f32.mrf.mxu0
        %v2585 = vadd.f32 0.0, %v2584
        %v2586 = vpop.f32.mrf.mxu0
        %v2587 = vadd.f32 0.0, %v2586
        %2588 = vmatprep.mubr.bf16.mxu0 0
        %2589 = vmatmul.mubr.bf16.gmra.mxu0 %v2447
        %v2590 = vpop.f32.mrf.mxu0
        %v2591 = vadd.f32 0.0, %v2590
        %v2592 = vpop.f32.mrf.mxu0
        %v2593 = vadd.f32 0.0, %v2592
        %v2594 = vpop.f32.mrf.mxu0
        %v2595 = vadd.f32 0.0, %v2594
        %v2596 = vpop.f32.mrf.mxu0
        %v2597 = vadd.f32 0.0, %v2596
        %2598 = vmatprep.mubr.bf16.mxu0 0
        %2599 = vmatmul.mubr.bf16.gmra.mxu0 %v2450
        %v2600 = vpop.f32.mrf.mxu0
        %v2601 = vadd.f32 0.0, %v2600
        %v2602 = vpop.f32.mrf.mxu0
        %v2603 = vadd.f32 0.0, %v2602
        %v2604 = vpop.f32.mrf.mxu0
        %v2605 = vadd.f32 0.0, %v2604
        %v2606 = vpop.f32.mrf.mxu0
        %v2607 = vadd.f32 0.0, %v2606
        %2608 = vmatprep.mubr.bf16.mxu0 0
        %2609 = vmatmul.mubr.bf16.gmra.mxu0 %v2453
        %v2610 = vpop.f32.mrf.mxu0
        %v2611 = vadd.f32 0.0, %v2610
        %v2612 = vpop.f32.mrf.mxu0
        %v2613 = vadd.f32 0.0, %v2612
        %v2614 = vpop.f32.mrf.mxu0
        %v2615 = vadd.f32 0.0, %v2614
        %v2616 = vpop.f32.mrf.mxu0
        %v2617 = vadd.f32 0.0, %v2616
        %2618 = vmatprep.mubr.bf16.mxu0 0
        %2619 = vmatmul.mubr.bf16.gmra.mxu0 %v2456
        %v2620 = vpop.f32.mrf.mxu0
        %v2621 = vadd.f32 0.0, %v2620
        %v2622 = vpop.f32.mrf.mxu0
        %v2623 = vadd.f32 0.0, %v2622
        %v2624 = vpop.f32.mrf.mxu0
        %v2625 = vadd.f32 0.0, %v2624
        %v2626 = vpop.f32.mrf.mxu0
        %v2627 = vadd.f32 0.0, %v2626
        %2628 = vmatprep.mubr.bf16.mxu0 0
        %2629 = vmatmul.mubr.bf16.gmra.mxu0 %v2459
        %v2630 = vpop.f32.mrf.mxu0
        %v2631 = vadd.f32 0.0, %v2630
        %v2632 = vpop.f32.mrf.mxu0
        %v2633 = vadd.f32 0.0, %v2632
        %v2634 = vpop.f32.mrf.mxu0
        %v2635 = vadd.f32 0.0, %v2634
        %v2636 = vpop.f32.mrf.mxu0
        %v2637 = vadd.f32 0.0, %v2636
        %2638 = vmatprep.mubr.bf16.mxu0 0
        %2639 = vmatmul.mubr.bf16.gmra.mxu0 %v2462
        %v2640 = vpop.f32.mrf.mxu0
        %v2641 = vadd.f32 0.0, %v2640
        %v2642 = vpop.f32.mrf.mxu0
        %v2643 = vadd.f32 0.0, %v2642
        %v2644 = vpop.f32.mrf.mxu0
        %v2645 = vadd.f32 0.0, %v2644
        %v2646 = vpop.f32.mrf.mxu0
        %v2647 = vadd.f32 0.0, %v2646
        %2648 = vmatprep.mubr.bf16.mxu0 0
        %2649 = vmatmul.mubr.bf16.gmra.mxu0 %v2465
        %v2650 = vpop.f32.mrf.mxu0
        %v2651 = vadd.f32 0.0, %v2650
        %v2652 = vpop.f32.mrf.mxu0
        %v2653 = vadd.f32 0.0, %v2652
        %v2654 = vpop.f32.mrf.mxu0
        %v2655 = vadd.f32 0.0, %v2654
        %v2656 = vpop.f32.mrf.mxu0
        %v2657 = vadd.f32 0.0, %v2656
        %2658 = vmatprep.mubr.bf16.mxu0 0
        %2659 = vmatmul.mubr.bf16.gmra.mxu0 %v2468
        %v2660 = vpop.f32.mrf.mxu0
        %v2661 = vadd.f32 0.0, %v2660
        %v2662 = vpop.f32.mrf.mxu0
        %v2663 = vadd.f32 0.0, %v2662
        %v2664 = vpop.f32.mrf.mxu0
        %v2665 = vadd.f32 0.0, %v2664
        %v2666 = vpop.f32.mrf.mxu0
        %v2667 = vadd.f32 0.0, %v2666
        %2668 = vdwg.mxu0
        %v2669 = vadd.f32 %v2234, %v2511
        %v2670 = vadd.f32 %v2235, %v2513
        %v2671 = vadd.f32 %v2236, %v2515
        %v2672 = vadd.f32 %v2237, %v2517
        %v2673 = vadd.f32 %v2238, %v2521
        %v2674 = vadd.f32 %v2239, %v2523
        %v2675 = vadd.f32 %v2240, %v2525
        %v2676 = vadd.f32 %v2241, %v2527
        %v2677 = vadd.f32 %v2242, %v2531
        %v2678 = vadd.f32 %v2243, %v2533
        %v2679 = vadd.f32 %v2244, %v2535
        %v2680 = vadd.f32 %v2245, %v2537
        %v2681 = vadd.f32 %v2246, %v2541
        %v2682 = vadd.f32 %v2247, %v2543
        %v2683 = vadd.f32 %v2248, %v2545
        %v2684 = vadd.f32 %v2249, %v2547
        %v2685 = vadd.f32 %v2250, %v2551
        %v2686 = vadd.f32 %v2251, %v2553
        %v2687 = vadd.f32 %v2252, %v2555
        %v2688 = vadd.f32 %v2253, %v2557
        %v2689 = vadd.f32 %v2254, %v2561
        %v2690 = vadd.f32 %v2255, %v2563
        %v2691 = vadd.f32 %v2256, %v2565
        %v2692 = vadd.f32 %v2257, %v2567
        %v2693 = vadd.f32 %v2258, %v2571
        %v2694 = vadd.f32 %v2259, %v2573
        %v2695 = vadd.f32 %v2260, %v2575
        %v2696 = vadd.f32 %v2261, %v2577
        %v2697 = vadd.f32 %v2262, %v2581
        %v2698 = vadd.f32 %v2263, %v2583
        %v2699 = vadd.f32 %v2264, %v2585
        %v2700 = vadd.f32 %v2265, %v2587
        %v2701 = vadd.f32 %v2266, %v2591
        %v2702 = vadd.f32 %v2267, %v2593
        %v2703 = vadd.f32 %v2268, %v2595
        %v2704 = vadd.f32 %v2269, %v2597
        %v2705 = vadd.f32 %v2270, %v2601
        %v2706 = vadd.f32 %v2271, %v2603
        %v2707 = vadd.f32 %v2272, %v2605
        %v2708 = vadd.f32 %v2273, %v2607
        %v2709 = vadd.f32 %v2274, %v2611
        %v2710 = vadd.f32 %v2275, %v2613
        %v2711 = vadd.f32 %v2276, %v2615
        %v2712 = vadd.f32 %v2277, %v2617
        %v2713 = vadd.f32 %v2278, %v2621
        %v2714 = vadd.f32 %v2279, %v2623
        %v2715 = vadd.f32 %v2280, %v2625
        %v2716 = vadd.f32 %v2281, %v2627
        %v2717 = vadd.f32 %v2282, %v2631
        %v2718 = vadd.f32 %v2283, %v2633
        %v2719 = vadd.f32 %v2284, %v2635
        %v2720 = vadd.f32 %v2285, %v2637
        %v2721 = vadd.f32 %v2286, %v2641
        %v2722 = vadd.f32 %v2287, %v2643
        %v2723 = vadd.f32 %v2288, %v2645
        %v2724 = vadd.f32 %v2289, %v2647
        %v2725 = vadd.f32 %v2290, %v2651
        %v2726 = vadd.f32 %v2291, %v2653
        %v2727 = vadd.f32 %v2292, %v2655
        %v2728 = vadd.f32 %v2293, %v2657
        %v2729 = vadd.f32 %v2294, %v2661
        %v2730 = vadd.f32 %v2295, %v2663
        %v2731 = vadd.f32 %v2296, %v2665
        %v2732 = vadd.f32 %v2297, %v2667
        %s2733 = scalar_lea.vmem %s249, 256
        %v2734 = vld [vmem:[%s2733] sm:$0xf]
        %v2735 = vld [vmem:[%s2733 + $0x4] sm:$0xf]
        %v2736 = vld [vmem:[%s2733 + $0x8] sm:$0xf]
        %v2737 = vld [vmem:[%s2733 + $0xc] sm:$0xf]
        %v2738 = vld [vmem:[%s2733 + $0x10] sm:$0xf]
        %v2739 = vld [vmem:[%s2733 + $0x14] sm:$0xf]
        %v2740 = vld [vmem:[%s2733 + $0x18] sm:$0xf]
        %v2741 = vld [vmem:[%s2733 + $0x1c] sm:$0xf]
        %v2742 = vld [vmem:[%s2733 + $0x20] sm:$0xf]
        %v2743 = vld [vmem:[%s2733 + $0x24] sm:$0xf]
        %v2744 = vld [vmem:[%s2733 + $0x28] sm:$0xf]
        %v2745 = vld [vmem:[%s2733 + $0x2c] sm:$0xf]
        %v2746 = vld [vmem:[%s2733 + $0x30] sm:$0xf]
        %v2747 = vld [vmem:[%s2733 + $0x34] sm:$0xf]
        %v2748 = vld [vmem:[%s2733 + $0x38] sm:$0xf]
        %v2749 = vld [vmem:[%s2733 + $0x3c] sm:$0xf]
        %v2750 = vld [vmem:[%s2733 + $0x80] sm:$0xf]
        %v2751 = vld [vmem:[%s2733 + $0x84] sm:$0xf]
        %v2752 = vld [vmem:[%s2733 + $0x88] sm:$0xf]
        %v2753 = vld [vmem:[%s2733 + $0x8c] sm:$0xf]
        %v2754 = vld [vmem:[%s2733 + $0x90] sm:$0xf]
        %v2755 = vld [vmem:[%s2733 + $0x94] sm:$0xf]
        %v2756 = vld [vmem:[%s2733 + $0x98] sm:$0xf]
        %v2757 = vld [vmem:[%s2733 + $0x9c] sm:$0xf]
        %v2758 = vld [vmem:[%s2733 + $0xa0] sm:$0xf]
        %v2759 = vld [vmem:[%s2733 + $0xa4] sm:$0xf]
        %v2760 = vld [vmem:[%s2733 + $0xa8] sm:$0xf]
        %v2761 = vld [vmem:[%s2733 + $0xac] sm:$0xf]
        %v2762 = vld [vmem:[%s2733 + $0xb0] sm:$0xf]
        %v2763 = vld [vmem:[%s2733 + $0xb4] sm:$0xf]
        %v2764 = vld [vmem:[%s2733 + $0xb8] sm:$0xf]
        %v2765 = vld [vmem:[%s2733 + $0xbc] sm:$0xf]
        %s2766 = scalar_lea.vmem %s1, 24
        %v2767 = vld [vmem:[%s2766] sm:$0xf]
        %v2800 = vunpack.c.l.b16 %v2734
        %v2801 = vunpack.c.l.b16 %v2735
        %v2802 = vunpack.c.l.b16 %v2736
        %v2803 = vunpack.c.l.b16 %v2737
        %v2804 = vunpack.c.l.b16 %v2738
        %v2805 = vunpack.c.l.b16 %v2739
        %v2806 = vunpack.c.l.b16 %v2740
        %v2807 = vunpack.c.l.b16 %v2741
        %v2808 = vunpack.c.l.b16 %v2742
        %v2809 = vunpack.c.l.b16 %v2743
        %v2810 = vunpack.c.l.b16 %v2744
        %v2811 = vunpack.c.l.b16 %v2745
        %v2812 = vunpack.c.l.b16 %v2746
        %v2813 = vunpack.c.l.b16 %v2747
        %v2814 = vunpack.c.l.b16 %v2748
        %v2815 = vunpack.c.l.b16 %v2749
        %v2816 = vunpack.c.l.b16 %v2750
        %v2817 = vunpack.c.l.b16 %v2751
        %v2818 = vunpack.c.l.b16 %v2752
        %v2819 = vunpack.c.l.b16 %v2753
        %v2820 = vunpack.c.l.b16 %v2754
        %v2821 = vunpack.c.l.b16 %v2755
        %v2822 = vunpack.c.l.b16 %v2756
        %v2823 = vunpack.c.l.b16 %v2757
        %v2824 = vunpack.c.l.b16 %v2758
        %v2825 = vunpack.c.l.b16 %v2759
        %v2826 = vunpack.c.l.b16 %v2760
        %v2827 = vunpack.c.l.b16 %v2761
        %v2828 = vunpack.c.l.b16 %v2762
        %v2829 = vunpack.c.l.b16 %v2763
        %v2830 = vunpack.c.l.b16 %v2764
        %v2831 = vunpack.c.l.b16 %v2765
        %v2832 = vpack.c.b16 %v2801, %v2800
        %v2833 = vpack.c.b16 %v2803, %v2802
        %v2834 = vpack.c.b16 %v2805, %v2804
        %v2835 = vpack.c.b16 %v2807, %v2806
        %v2836 = vpack.c.b16 %v2809, %v2808
        %v2837 = vpack.c.b16 %v2811, %v2810
        %v2838 = vpack.c.b16 %v2813, %v2812
        %v2839 = vpack.c.b16 %v2815, %v2814
        %v2840 = vpack.c.b16 %v2817, %v2816
        %v2841 = vpack.c.b16 %v2819, %v2818
        %v2842 = vpack.c.b16 %v2821, %v2820
        %v2843 = vpack.c.b16 %v2823, %v2822
        %v2844 = vpack.c.b16 %v2825, %v2824
        %v2845 = vpack.c.b16 %v2827, %v2826
        %v2846 = vpack.c.b16 %v2829, %v2828
        %v2847 = vpack.c.b16 %v2831, %v2830
        %v2850 = vunpack.c.l.s4 1983009808
        %v2851 = vunpack.c.0.s8 %v2850
        %v2852 = vlaneseq
        %v2853 = vshrl.u32 %v2852, 7
        %v2854 = vsub.s32 %v2851, %v2853
        %v2855 = vrot.slane %v2767, %v2854
        %v2856 = vcombine.high %v2855, %v2855
        %v2858 = vsel %vm408, %v2832, 0
        %v2861 = vsel %vm408, %v2833, 0
        %v2864 = vsel %vm408, %v2834, 0
        %v2867 = vsel %vm408, %v2835, 0
        %v2870 = vsel %vm408, %v2836, 0
        %v2873 = vsel %vm408, %v2837, 0
        %v2876 = vsel %vm408, %v2838, 0
        %v2879 = vsel %vm408, %v2839, 0
        %v2882 = vsel %vm408, %v2840, 0
        %v2885 = vsel %vm408, %v2841, 0
        %v2888 = vsel %vm408, %v2842, 0
        %v2891 = vsel %vm408, %v2843, 0
        %v2894 = vsel %vm408, %v2844, 0
        %v2897 = vsel %vm408, %v2845, 0
        %v2900 = vsel %vm408, %v2846, 0
        %v2903 = vsel %vm408, %v2847, 0
        %v2906 = vsel %vm457, %v2855, 0
        %v2909 = vsel %vm457, %v2856, 0
        %2911 = vmatprep.subr.bf16.mxu0 0
        %2912 = vmatpush1.bf16.msra.mxu0 0
        %2913 = vmatprep.subr.bf16.mxu0 0
        %2914 = vmatpush1.bf16.msra.mxu0 0
        %2915 = vmatprep.subr.bf16.mxu0 0
        %2916 = vmatpush1.bf16.msra.mxu0 0
        %2917 = vmatprep.subr.bf16.mxu0 0
        %2918 = vmatpush1.bf16.msra.mxu0 0
        %2919 = vmatprep.subr.bf16.mxu0 0
        %2920 = vmatpush1.bf16.msra.mxu0 0
        %2921 = vmatprep.subr.bf16.mxu0 0
        %2922 = vmatpush1.bf16.msra.mxu0 0
        %2923 = vmatprep.subr.bf16.mxu0 0
        %2924 = vmatpush1.bf16.msra.mxu0 0
        %2925 = vmatprep.subr.bf16.mxu0 %v2909
        %2926 = vmatpush1.bf16.msra.mxu0 %v2906
        %2927 = vmatprep.subr.bf16.mxu0 0
        %2928 = vmatpush2.bf16.msra.mxu0 0
        %2929 = vmatprep.subr.bf16.mxu0 0
        %2930 = vmatpush2.bf16.msra.mxu0 0
        %2931 = vmatprep.subr.bf16.mxu0 0
        %2932 = vmatpush2.bf16.msra.mxu0 0
        %2933 = vmatprep.subr.bf16.mxu0 0
        %2934 = vmatpush2.bf16.msra.mxu0 0
        %2935 = vmatprep.subr.bf16.mxu0 0
        %2936 = vmatpush2.bf16.msra.mxu0 0
        %2937 = vmatprep.subr.bf16.mxu0 0
        %2938 = vmatpush2.bf16.msra.mxu0 0
        %2939 = vmatprep.subr.bf16.mxu0 0
        %2940 = vmatpush2.bf16.msra.mxu0 0
        %2941 = vmatprep.subr.bf16.mxu0 0
        %2942 = vmatpush2.bf16.msra.mxu0 0
        %2943 = vmatprep.mubr.bf16.mxu0 0
        %2944 = vmatmul.mubr.bf16.gmra.mxu0 %v2858
        %v2945 = vpop.f32.mrf.mxu0
        %v2946 = vadd.f32 0.0, %v2945
        %v2947 = vpop.f32.mrf.mxu0
        %v2948 = vadd.f32 0.0, %v2947
        %v2949 = vpop.f32.mrf.mxu0
        %v2950 = vadd.f32 0.0, %v2949
        %v2951 = vpop.f32.mrf.mxu0
        %v2952 = vadd.f32 0.0, %v2951
        %2953 = vmatprep.mubr.bf16.mxu0 0
        %2954 = vmatmul.mubr.bf16.gmra.mxu0 %v2861
        %v2955 = vpop.f32.mrf.mxu0
        %v2956 = vadd.f32 0.0, %v2955
        %v2957 = vpop.f32.mrf.mxu0
        %v2958 = vadd.f32 0.0, %v2957
        %v2959 = vpop.f32.mrf.mxu0
        %v2960 = vadd.f32 0.0, %v2959
        %v2961 = vpop.f32.mrf.mxu0
        %v2962 = vadd.f32 0.0, %v2961
        %2963 = vmatprep.mubr.bf16.mxu0 0
        %2964 = vmatmul.mubr.bf16.gmra.mxu0 %v2864
        %v2965 = vpop.f32.mrf.mxu0
        %v2966 = vadd.f32 0.0, %v2965
        %v2967 = vpop.f32.mrf.mxu0
        %v2968 = vadd.f32 0.0, %v2967
        %v2969 = vpop.f32.mrf.mxu0
        %v2970 = vadd.f32 0.0, %v2969
        %v2971 = vpop.f32.mrf.mxu0
        %v2972 = vadd.f32 0.0, %v2971
        %2973 = vmatprep.mubr.bf16.mxu0 0
        %2974 = vmatmul.mubr.bf16.gmra.mxu0 %v2867
        %v2975 = vpop.f32.mrf.mxu0
        %v2976 = vadd.f32 0.0, %v2975
        %v2977 = vpop.f32.mrf.mxu0
        %v2978 = vadd.f32 0.0, %v2977
        %v2979 = vpop.f32.mrf.mxu0
        %v2980 = vadd.f32 0.0, %v2979
        %v2981 = vpop.f32.mrf.mxu0
        %v2982 = vadd.f32 0.0, %v2981
        %2983 = vmatprep.mubr.bf16.mxu0 0
        %2984 = vmatmul.mubr.bf16.gmra.mxu0 %v2870
        %v2985 = vpop.f32.mrf.mxu0
        %v2986 = vadd.f32 0.0, %v2985
        %v2987 = vpop.f32.mrf.mxu0
        %v2988 = vadd.f32 0.0, %v2987
        %v2989 = vpop.f32.mrf.mxu0
        %v2990 = vadd.f32 0.0, %v2989
        %v2991 = vpop.f32.mrf.mxu0
        %v2992 = vadd.f32 0.0, %v2991
        %2993 = vmatprep.mubr.bf16.mxu0 0
        %2994 = vmatmul.mubr.bf16.gmra.mxu0 %v2873
        %v2995 = vpop.f32.mrf.mxu0
        %v2996 = vadd.f32 0.0, %v2995
        %v2997 = vpop.f32.mrf.mxu0
        %v2998 = vadd.f32 0.0, %v2997
        %v2999 = vpop.f32.mrf.mxu0
        %v3000 = vadd.f32 0.0, %v2999
        %v3001 = vpop.f32.mrf.mxu0
        %v3002 = vadd.f32 0.0, %v3001
        %3003 = vmatprep.mubr.bf16.mxu0 0
        %3004 = vmatmul.mubr.bf16.gmra.mxu0 %v2876
        %v3005 = vpop.f32.mrf.mxu0
        %v3006 = vadd.f32 0.0, %v3005
        %v3007 = vpop.f32.mrf.mxu0
        %v3008 = vadd.f32 0.0, %v3007
        %v3009 = vpop.f32.mrf.mxu0
        %v3010 = vadd.f32 0.0, %v3009
        %v3011 = vpop.f32.mrf.mxu0
        %v3012 = vadd.f32 0.0, %v3011
        %3013 = vmatprep.mubr.bf16.mxu0 0
        %3014 = vmatmul.mubr.bf16.gmra.mxu0 %v2879
        %v3015 = vpop.f32.mrf.mxu0
        %v3016 = vadd.f32 0.0, %v3015
        %v3017 = vpop.f32.mrf.mxu0
        %v3018 = vadd.f32 0.0, %v3017
        %v3019 = vpop.f32.mrf.mxu0
        %v3020 = vadd.f32 0.0, %v3019
        %v3021 = vpop.f32.mrf.mxu0
        %v3022 = vadd.f32 0.0, %v3021
        %3023 = vmatprep.mubr.bf16.mxu0 0
        %3024 = vmatmul.mubr.bf16.gmra.mxu0 %v2882
        %v3025 = vpop.f32.mrf.mxu0
        %v3026 = vadd.f32 0.0, %v3025
        %v3027 = vpop.f32.mrf.mxu0
        %v3028 = vadd.f32 0.0, %v3027
        %v3029 = vpop.f32.mrf.mxu0
        %v3030 = vadd.f32 0.0, %v3029
        %v3031 = vpop.f32.mrf.mxu0
        %v3032 = vadd.f32 0.0, %v3031
        %3033 = vmatprep.mubr.bf16.mxu0 0
        %3034 = vmatmul.mubr.bf16.gmra.mxu0 %v2885
        %v3035 = vpop.f32.mrf.mxu0
        %v3036 = vadd.f32 0.0, %v3035
        %v3037 = vpop.f32.mrf.mxu0
        %v3038 = vadd.f32 0.0, %v3037
        %v3039 = vpop.f32.mrf.mxu0
        %v3040 = vadd.f32 0.0, %v3039
        %v3041 = vpop.f32.mrf.mxu0
        %v3042 = vadd.f32 0.0, %v3041
        %3043 = vmatprep.mubr.bf16.mxu0 0
        %3044 = vmatmul.mubr.bf16.gmra.mxu0 %v2888
        %v3045 = vpop.f32.mrf.mxu0
        %v3046 = vadd.f32 0.0, %v3045
        %v3047 = vpop.f32.mrf.mxu0
        %v3048 = vadd.f32 0.0, %v3047
        %v3049 = vpop.f32.mrf.mxu0
        %v3050 = vadd.f32 0.0, %v3049
        %v3051 = vpop.f32.mrf.mxu0
        %v3052 = vadd.f32 0.0, %v3051
        %3053 = vmatprep.mubr.bf16.mxu0 0
        %3054 = vmatmul.mubr.bf16.gmra.mxu0 %v2891
        %v3055 = vpop.f32.mrf.mxu0
        %v3056 = vadd.f32 0.0, %v3055
        %v3057 = vpop.f32.mrf.mxu0
        %v3058 = vadd.f32 0.0, %v3057
        %v3059 = vpop.f32.mrf.mxu0
        %v3060 = vadd.f32 0.0, %v3059
        %v3061 = vpop.f32.mrf.mxu0
        %v3062 = vadd.f32 0.0, %v3061
        %3063 = vmatprep.mubr.bf16.mxu0 0
        %3064 = vmatmul.mubr.bf16.gmra.mxu0 %v2894
        %v3065 = vpop.f32.mrf.mxu0
        %v3066 = vadd.f32 0.0, %v3065
        %v3067 = vpop.f32.mrf.mxu0
        %v3068 = vadd.f32 0.0, %v3067
        %v3069 = vpop.f32.mrf.mxu0
        %v3070 = vadd.f32 0.0, %v3069
        %v3071 = vpop.f32.mrf.mxu0
        %v3072 = vadd.f32 0.0, %v3071
        %3073 = vmatprep.mubr.bf16.mxu0 0
        %3074 = vmatmul.mubr.bf16.gmra.mxu0 %v2897
        %v3075 = vpop.f32.mrf.mxu0
        %v3076 = vadd.f32 0.0, %v3075
        %v3077 = vpop.f32.mrf.mxu0
        %v3078 = vadd.f32 0.0, %v3077
        %v3079 = vpop.f32.mrf.mxu0
        %v3080 = vadd.f32 0.0, %v3079
        %v3081 = vpop.f32.mrf.mxu0
        %v3082 = vadd.f32 0.0, %v3081
        %3083 = vmatprep.mubr.bf16.mxu0 0
        %3084 = vmatmul.mubr.bf16.gmra.mxu0 %v2900
        %v3085 = vpop.f32.mrf.mxu0
        %v3086 = vadd.f32 0.0, %v3085
        %v3087 = vpop.f32.mrf.mxu0
        %v3088 = vadd.f32 0.0, %v3087
        %v3089 = vpop.f32.mrf.mxu0
        %v3090 = vadd.f32 0.0, %v3089
        %v3091 = vpop.f32.mrf.mxu0
        %v3092 = vadd.f32 0.0, %v3091
        %3093 = vmatprep.mubr.bf16.mxu0 0
        %3094 = vmatmul.mubr.bf16.gmra.mxu0 %v2903
        %v3095 = vpop.f32.mrf.mxu0
        %v3096 = vadd.f32 0.0, %v3095
        %v3097 = vpop.f32.mrf.mxu0
        %v3098 = vadd.f32 0.0, %v3097
        %v3099 = vpop.f32.mrf.mxu0
        %v3100 = vadd.f32 0.0, %v3099
        %v3101 = vpop.f32.mrf.mxu0
        %v3102 = vadd.f32 0.0, %v3101
        %3103 = vdwg.mxu0
        %v3104 = vadd.f32 %v2669, %v2946
        %v3105 = vadd.f32 %v2670, %v2948
        %v3106 = vadd.f32 %v2671, %v2950
        %v3107 = vadd.f32 %v2672, %v2952
        %v3108 = vadd.f32 %v2673, %v2956
        %v3109 = vadd.f32 %v2674, %v2958
        %v3110 = vadd.f32 %v2675, %v2960
        %v3111 = vadd.f32 %v2676, %v2962
        %v3112 = vadd.f32 %v2677, %v2966
        %v3113 = vadd.f32 %v2678, %v2968
        %v3114 = vadd.f32 %v2679, %v2970
        %v3115 = vadd.f32 %v2680, %v2972
        %v3116 = vadd.f32 %v2681, %v2976
        %v3117 = vadd.f32 %v2682, %v2978
        %v3118 = vadd.f32 %v2683, %v2980
        %v3119 = vadd.f32 %v2684, %v2982
        %v3120 = vadd.f32 %v2685, %v2986
        %v3121 = vadd.f32 %v2686, %v2988
        %v3122 = vadd.f32 %v2687, %v2990
        %v3123 = vadd.f32 %v2688, %v2992
        %v3124 = vadd.f32 %v2689, %v2996
        %v3125 = vadd.f32 %v2690, %v2998
        %v3126 = vadd.f32 %v2691, %v3000
        %v3127 = vadd.f32 %v2692, %v3002
        %v3128 = vadd.f32 %v2693, %v3006
        %v3129 = vadd.f32 %v2694, %v3008
        %v3130 = vadd.f32 %v2695, %v3010
        %v3131 = vadd.f32 %v2696, %v3012
        %v3132 = vadd.f32 %v2697, %v3016
        %v3133 = vadd.f32 %v2698, %v3018
        %v3134 = vadd.f32 %v2699, %v3020
        %v3135 = vadd.f32 %v2700, %v3022
        %v3136 = vadd.f32 %v2701, %v3026
        %v3137 = vadd.f32 %v2702, %v3028
        %v3138 = vadd.f32 %v2703, %v3030
        %v3139 = vadd.f32 %v2704, %v3032
        %v3140 = vadd.f32 %v2705, %v3036
        %v3141 = vadd.f32 %v2706, %v3038
        %v3142 = vadd.f32 %v2707, %v3040
        %v3143 = vadd.f32 %v2708, %v3042
        %v3144 = vadd.f32 %v2709, %v3046
        %v3145 = vadd.f32 %v2710, %v3048
        %v3146 = vadd.f32 %v2711, %v3050
        %v3147 = vadd.f32 %v2712, %v3052
        %v3148 = vadd.f32 %v2713, %v3056
        %v3149 = vadd.f32 %v2714, %v3058
        %v3150 = vadd.f32 %v2715, %v3060
        %v3151 = vadd.f32 %v2716, %v3062
        %v3152 = vadd.f32 %v2717, %v3066
        %v3153 = vadd.f32 %v2718, %v3068
        %v3154 = vadd.f32 %v2719, %v3070
        %v3155 = vadd.f32 %v2720, %v3072
        %v3156 = vadd.f32 %v2721, %v3076
        %v3157 = vadd.f32 %v2722, %v3078
        %v3158 = vadd.f32 %v2723, %v3080
        %v3159 = vadd.f32 %v2724, %v3082
        %v3160 = vadd.f32 %v2725, %v3086
        %v3161 = vadd.f32 %v2726, %v3088
        %v3162 = vadd.f32 %v2727, %v3090
        %v3163 = vadd.f32 %v2728, %v3092
        %v3164 = vadd.f32 %v2729, %v3096
        %v3165 = vadd.f32 %v2730, %v3098
        %v3166 = vadd.f32 %v2731, %v3100
        %v3167 = vadd.f32 %v2732, %v3102
        %s3168 = scalar_lea.vmem %s249, 288
        %v3169 = vld [vmem:[%s3168] sm:$0xf]
        %v3170 = vld [vmem:[%s3168 + $0x4] sm:$0xf]
        %v3171 = vld [vmem:[%s3168 + $0x8] sm:$0xf]
        %v3172 = vld [vmem:[%s3168 + $0xc] sm:$0xf]
        %v3173 = vld [vmem:[%s3168 + $0x10] sm:$0xf]
        %v3174 = vld [vmem:[%s3168 + $0x14] sm:$0xf]
        %v3175 = vld [vmem:[%s3168 + $0x18] sm:$0xf]
        %v3176 = vld [vmem:[%s3168 + $0x1c] sm:$0xf]
        %v3177 = vld [vmem:[%s3168 + $0x20] sm:$0xf]
        %v3178 = vld [vmem:[%s3168 + $0x24] sm:$0xf]
        %v3179 = vld [vmem:[%s3168 + $0x28] sm:$0xf]
        %v3180 = vld [vmem:[%s3168 + $0x2c] sm:$0xf]
        %v3181 = vld [vmem:[%s3168 + $0x30] sm:$0xf]
        %v3182 = vld [vmem:[%s3168 + $0x34] sm:$0xf]
        %v3183 = vld [vmem:[%s3168 + $0x38] sm:$0xf]
        %v3184 = vld [vmem:[%s3168 + $0x3c] sm:$0xf]
        %v3185 = vld [vmem:[%s3168 + $0x80] sm:$0xf]
        %v3186 = vld [vmem:[%s3168 + $0x84] sm:$0xf]
        %v3187 = vld [vmem:[%s3168 + $0x88] sm:$0xf]
        %v3188 = vld [vmem:[%s3168 + $0x8c] sm:$0xf]
        %v3189 = vld [vmem:[%s3168 + $0x90] sm:$0xf]
        %v3190 = vld [vmem:[%s3168 + $0x94] sm:$0xf]
        %v3191 = vld [vmem:[%s3168 + $0x98] sm:$0xf]
        %v3192 = vld [vmem:[%s3168 + $0x9c] sm:$0xf]
        %v3193 = vld [vmem:[%s3168 + $0xa0] sm:$0xf]
        %v3194 = vld [vmem:[%s3168 + $0xa4] sm:$0xf]
        %v3195 = vld [vmem:[%s3168 + $0xa8] sm:$0xf]
        %v3196 = vld [vmem:[%s3168 + $0xac] sm:$0xf]
        %v3197 = vld [vmem:[%s3168 + $0xb0] sm:$0xf]
        %v3198 = vld [vmem:[%s3168 + $0xb4] sm:$0xf]
        %v3199 = vld [vmem:[%s3168 + $0xb8] sm:$0xf]
        %v3200 = vld [vmem:[%s3168 + $0xbc] sm:$0xf]
        %s3201 = scalar_lea.vmem %s1, 28
        %v3202 = vld [vmem:[%s3201] sm:$0xf]
        %v3235 = vunpack.c.l.b16 %v3169
        %v3236 = vunpack.c.l.b16 %v3170
        %v3237 = vunpack.c.l.b16 %v3171
        %v3238 = vunpack.c.l.b16 %v3172
        %v3239 = vunpack.c.l.b16 %v3173
        %v3240 = vunpack.c.l.b16 %v3174
        %v3241 = vunpack.c.l.b16 %v3175
        %v3242 = vunpack.c.l.b16 %v3176
        %v3243 = vunpack.c.l.b16 %v3177
        %v3244 = vunpack.c.l.b16 %v3178
        %v3245 = vunpack.c.l.b16 %v3179
        %v3246 = vunpack.c.l.b16 %v3180
        %v3247 = vunpack.c.l.b16 %v3181
        %v3248 = vunpack.c.l.b16 %v3182
        %v3249 = vunpack.c.l.b16 %v3183
        %v3250 = vunpack.c.l.b16 %v3184
        %v3251 = vunpack.c.l.b16 %v3185
        %v3252 = vunpack.c.l.b16 %v3186
        %v3253 = vunpack.c.l.b16 %v3187
        %v3254 = vunpack.c.l.b16 %v3188
        %v3255 = vunpack.c.l.b16 %v3189
        %v3256 = vunpack.c.l.b16 %v3190
        %v3257 = vunpack.c.l.b16 %v3191
        %v3258 = vunpack.c.l.b16 %v3192
        %v3259 = vunpack.c.l.b16 %v3193
        %v3260 = vunpack.c.l.b16 %v3194
        %v3261 = vunpack.c.l.b16 %v3195
        %v3262 = vunpack.c.l.b16 %v3196
        %v3263 = vunpack.c.l.b16 %v3197
        %v3264 = vunpack.c.l.b16 %v3198
        %v3265 = vunpack.c.l.b16 %v3199
        %v3266 = vunpack.c.l.b16 %v3200
        %v3267 = vpack.c.b16 %v3236, %v3235
        %v3268 = vpack.c.b16 %v3238, %v3237
        %v3269 = vpack.c.b16 %v3240, %v3239
        %v3270 = vpack.c.b16 %v3242, %v3241
        %v3271 = vpack.c.b16 %v3244, %v3243
        %v3272 = vpack.c.b16 %v3246, %v3245
        %v3273 = vpack.c.b16 %v3248, %v3247
        %v3274 = vpack.c.b16 %v3250, %v3249
        %v3275 = vpack.c.b16 %v3252, %v3251
        %v3276 = vpack.c.b16 %v3254, %v3253
        %v3277 = vpack.c.b16 %v3256, %v3255
        %v3278 = vpack.c.b16 %v3258, %v3257
        %v3279 = vpack.c.b16 %v3260, %v3259
        %v3280 = vpack.c.b16 %v3262, %v3261
        %v3281 = vpack.c.b16 %v3264, %v3263
        %v3282 = vpack.c.b16 %v3266, %v3265
        %v3285 = vunpack.c.l.s4 1983009808
        %v3286 = vunpack.c.0.s8 %v3285
        %v3287 = vlaneseq
        %v3288 = vshrl.u32 %v3287, 7
        %v3289 = vsub.s32 %v3286, %v3288
        %v3290 = vrot.slane %v3202, %v3289
        %v3291 = vcombine.high %v3290, %v3290
        %v3293 = vsel %vm408, %v3267, 0
        %v3296 = vsel %vm408, %v3268, 0
        %v3299 = vsel %vm408, %v3269, 0
        %v3302 = vsel %vm408, %v3270, 0
        %v3305 = vsel %vm408, %v3271, 0
        %v3308 = vsel %vm408, %v3272, 0
        %v3311 = vsel %vm408, %v3273, 0
        %v3314 = vsel %vm408, %v3274, 0
        %v3317 = vsel %vm408, %v3275, 0
        %v3320 = vsel %vm408, %v3276, 0
        %v3323 = vsel %vm408, %v3277, 0
        %v3326 = vsel %vm408, %v3278, 0
        %v3329 = vsel %vm408, %v3279, 0
        %v3332 = vsel %vm408, %v3280, 0
        %v3335 = vsel %vm408, %v3281, 0
        %v3338 = vsel %vm408, %v3282, 0
        %v3341 = vsel %vm457, %v3290, 0
        %v3344 = vsel %vm457, %v3291, 0
        %3346 = vmatprep.subr.bf16.mxu0 0
        %3347 = vmatpush1.bf16.msra.mxu0 0
        %3348 = vmatprep.subr.bf16.mxu0 0
        %3349 = vmatpush1.bf16.msra.mxu0 0
        %3350 = vmatprep.subr.bf16.mxu0 0
        %3351 = vmatpush1.bf16.msra.mxu0 0
        %3352 = vmatprep.subr.bf16.mxu0 0
        %3353 = vmatpush1.bf16.msra.mxu0 0
        %3354 = vmatprep.subr.bf16.mxu0 0
        %3355 = vmatpush1.bf16.msra.mxu0 0
        %3356 = vmatprep.subr.bf16.mxu0 0
        %3357 = vmatpush1.bf16.msra.mxu0 0
        %3358 = vmatprep.subr.bf16.mxu0 0
        %3359 = vmatpush1.bf16.msra.mxu0 0
        %3360 = vmatprep.subr.bf16.mxu0 %v3344
        %3361 = vmatpush1.bf16.msra.mxu0 %v3341
        %3362 = vmatprep.subr.bf16.mxu0 0
        %3363 = vmatpush2.bf16.msra.mxu0 0
        %3364 = vmatprep.subr.bf16.mxu0 0
        %3365 = vmatpush2.bf16.msra.mxu0 0
        %3366 = vmatprep.subr.bf16.mxu0 0
        %3367 = vmatpush2.bf16.msra.mxu0 0
        %3368 = vmatprep.subr.bf16.mxu0 0
        %3369 = vmatpush2.bf16.msra.mxu0 0
        %3370 = vmatprep.subr.bf16.mxu0 0
        %3371 = vmatpush2.bf16.msra.mxu0 0
        %3372 = vmatprep.subr.bf16.mxu0 0
        %3373 = vmatpush2.bf16.msra.mxu0 0
        %3374 = vmatprep.subr.bf16.mxu0 0
        %3375 = vmatpush2.bf16.msra.mxu0 0
        %3376 = vmatprep.subr.bf16.mxu0 0
        %3377 = vmatpush2.bf16.msra.mxu0 0
        %3378 = vmatprep.mubr.bf16.mxu0 0
        %3379 = vmatmul.mubr.bf16.gmra.mxu0 %v3293
        %v3380 = vpop.f32.mrf.mxu0
        %v3381 = vadd.f32 0.0, %v3380
        %v3382 = vpop.f32.mrf.mxu0
        %v3383 = vadd.f32 0.0, %v3382
        %v3384 = vpop.f32.mrf.mxu0
        %v3385 = vadd.f32 0.0, %v3384
        %v3386 = vpop.f32.mrf.mxu0
        %v3387 = vadd.f32 0.0, %v3386
        %3388 = vmatprep.mubr.bf16.mxu0 0
        %3389 = vmatmul.mubr.bf16.gmra.mxu0 %v3296
        %v3390 = vpop.f32.mrf.mxu0
        %v3391 = vadd.f32 0.0, %v3390
        %v3392 = vpop.f32.mrf.mxu0
        %v3393 = vadd.f32 0.0, %v3392
        %v3394 = vpop.f32.mrf.mxu0
        %v3395 = vadd.f32 0.0, %v3394
        %v3396 = vpop.f32.mrf.mxu0
        %v3397 = vadd.f32 0.0, %v3396
        %3398 = vmatprep.mubr.bf16.mxu0 0
        %3399 = vmatmul.mubr.bf16.gmra.mxu0 %v3299
        %v3400 = vpop.f32.mrf.mxu0
        %v3401 = vadd.f32 0.0, %v3400
        %v3402 = vpop.f32.mrf.mxu0
        %v3403 = vadd.f32 0.0, %v3402
        %v3404 = vpop.f32.mrf.mxu0
        %v3405 = vadd.f32 0.0, %v3404
        %v3406 = vpop.f32.mrf.mxu0
        %v3407 = vadd.f32 0.0, %v3406
        %3408 = vmatprep.mubr.bf16.mxu0 0
        %3409 = vmatmul.mubr.bf16.gmra.mxu0 %v3302
        %v3410 = vpop.f32.mrf.mxu0
        %v3411 = vadd.f32 0.0, %v3410
        %v3412 = vpop.f32.mrf.mxu0
        %v3413 = vadd.f32 0.0, %v3412
        %v3414 = vpop.f32.mrf.mxu0
        %v3415 = vadd.f32 0.0, %v3414
        %v3416 = vpop.f32.mrf.mxu0
        %v3417 = vadd.f32 0.0, %v3416
        %3418 = vmatprep.mubr.bf16.mxu0 0
        %3419 = vmatmul.mubr.bf16.gmra.mxu0 %v3305
        %v3420 = vpop.f32.mrf.mxu0
        %v3421 = vadd.f32 0.0, %v3420
        %v3422 = vpop.f32.mrf.mxu0
        %v3423 = vadd.f32 0.0, %v3422
        %v3424 = vpop.f32.mrf.mxu0
        %v3425 = vadd.f32 0.0, %v3424
        %v3426 = vpop.f32.mrf.mxu0
        %v3427 = vadd.f32 0.0, %v3426
        %3428 = vmatprep.mubr.bf16.mxu0 0
        %3429 = vmatmul.mubr.bf16.gmra.mxu0 %v3308
        %v3430 = vpop.f32.mrf.mxu0
        %v3431 = vadd.f32 0.0, %v3430
        %v3432 = vpop.f32.mrf.mxu0
        %v3433 = vadd.f32 0.0, %v3432
        %v3434 = vpop.f32.mrf.mxu0
        %v3435 = vadd.f32 0.0, %v3434
        %v3436 = vpop.f32.mrf.mxu0
        %v3437 = vadd.f32 0.0, %v3436
        %3438 = vmatprep.mubr.bf16.mxu0 0
        %3439 = vmatmul.mubr.bf16.gmra.mxu0 %v3311
        %v3440 = vpop.f32.mrf.mxu0
        %v3441 = vadd.f32 0.0, %v3440
        %v3442 = vpop.f32.mrf.mxu0
        %v3443 = vadd.f32 0.0, %v3442
        %v3444 = vpop.f32.mrf.mxu0
        %v3445 = vadd.f32 0.0, %v3444
        %v3446 = vpop.f32.mrf.mxu0
        %v3447 = vadd.f32 0.0, %v3446
        %3448 = vmatprep.mubr.bf16.mxu0 0
        %3449 = vmatmul.mubr.bf16.gmra.mxu0 %v3314
        %v3450 = vpop.f32.mrf.mxu0
        %v3451 = vadd.f32 0.0, %v3450
        %v3452 = vpop.f32.mrf.mxu0
        %v3453 = vadd.f32 0.0, %v3452
        %v3454 = vpop.f32.mrf.mxu0
        %v3455 = vadd.f32 0.0, %v3454
        %v3456 = vpop.f32.mrf.mxu0
        %v3457 = vadd.f32 0.0, %v3456
        %3458 = vmatprep.mubr.bf16.mxu0 0
        %3459 = vmatmul.mubr.bf16.gmra.mxu0 %v3317
        %v3460 = vpop.f32.mrf.mxu0
        %v3461 = vadd.f32 0.0, %v3460
        %v3462 = vpop.f32.mrf.mxu0
        %v3463 = vadd.f32 0.0, %v3462
        %v3464 = vpop.f32.mrf.mxu0
        %v3465 = vadd.f32 0.0, %v3464
        %v3466 = vpop.f32.mrf.mxu0
        %v3467 = vadd.f32 0.0, %v3466
        %3468 = vmatprep.mubr.bf16.mxu0 0
        %3469 = vmatmul.mubr.bf16.gmra.mxu0 %v3320
        %v3470 = vpop.f32.mrf.mxu0
        %v3471 = vadd.f32 0.0, %v3470
        %v3472 = vpop.f32.mrf.mxu0
        %v3473 = vadd.f32 0.0, %v3472
        %v3474 = vpop.f32.mrf.mxu0
        %v3475 = vadd.f32 0.0, %v3474
        %v3476 = vpop.f32.mrf.mxu0
        %v3477 = vadd.f32 0.0, %v3476
        %3478 = vmatprep.mubr.bf16.mxu0 0
        %3479 = vmatmul.mubr.bf16.gmra.mxu0 %v3323
        %v3480 = vpop.f32.mrf.mxu0
        %v3481 = vadd.f32 0.0, %v3480
        %v3482 = vpop.f32.mrf.mxu0
        %v3483 = vadd.f32 0.0, %v3482
        %v3484 = vpop.f32.mrf.mxu0
        %v3485 = vadd.f32 0.0, %v3484
        %v3486 = vpop.f32.mrf.mxu0
        %v3487 = vadd.f32 0.0, %v3486
        %3488 = vmatprep.mubr.bf16.mxu0 0
        %3489 = vmatmul.mubr.bf16.gmra.mxu0 %v3326
        %v3490 = vpop.f32.mrf.mxu0
        %v3491 = vadd.f32 0.0, %v3490
        %v3492 = vpop.f32.mrf.mxu0
        %v3493 = vadd.f32 0.0, %v3492
        %v3494 = vpop.f32.mrf.mxu0
        %v3495 = vadd.f32 0.0, %v3494
        %v3496 = vpop.f32.mrf.mxu0
        %v3497 = vadd.f32 0.0, %v3496
        %3498 = vmatprep.mubr.bf16.mxu0 0
        %3499 = vmatmul.mubr.bf16.gmra.mxu0 %v3329
        %v3500 = vpop.f32.mrf.mxu0
        %v3501 = vadd.f32 0.0, %v3500
        %v3502 = vpop.f32.mrf.mxu0
        %v3503 = vadd.f32 0.0, %v3502
        %v3504 = vpop.f32.mrf.mxu0
        %v3505 = vadd.f32 0.0, %v3504
        %v3506 = vpop.f32.mrf.mxu0
        %v3507 = vadd.f32 0.0, %v3506
        %3508 = vmatprep.mubr.bf16.mxu0 0
        %3509 = vmatmul.mubr.bf16.gmra.mxu0 %v3332
        %v3510 = vpop.f32.mrf.mxu0
        %v3511 = vadd.f32 0.0, %v3510
        %v3512 = vpop.f32.mrf.mxu0
        %v3513 = vadd.f32 0.0, %v3512
        %v3514 = vpop.f32.mrf.mxu0
        %v3515 = vadd.f32 0.0, %v3514
        %v3516 = vpop.f32.mrf.mxu0
        %v3517 = vadd.f32 0.0, %v3516
        %3518 = vmatprep.mubr.bf16.mxu0 0
        %3519 = vmatmul.mubr.bf16.gmra.mxu0 %v3335
        %v3520 = vpop.f32.mrf.mxu0
        %v3521 = vadd.f32 0.0, %v3520
        %v3522 = vpop.f32.mrf.mxu0
        %v3523 = vadd.f32 0.0, %v3522
        %v3524 = vpop.f32.mrf.mxu0
        %v3525 = vadd.f32 0.0, %v3524
        %v3526 = vpop.f32.mrf.mxu0
        %v3527 = vadd.f32 0.0, %v3526
        %3528 = vmatprep.mubr.bf16.mxu0 0
        %3529 = vmatmul.mubr.bf16.gmra.mxu0 %v3338
        %v3530 = vpop.f32.mrf.mxu0
        %v3531 = vadd.f32 0.0, %v3530
        %v3532 = vpop.f32.mrf.mxu0
        %v3533 = vadd.f32 0.0, %v3532
        %v3534 = vpop.f32.mrf.mxu0
        %v3535 = vadd.f32 0.0, %v3534
        %v3536 = vpop.f32.mrf.mxu0
        %v3537 = vadd.f32 0.0, %v3536
        %3538 = vdwg.mxu0
        %v3539 = vadd.f32 %v3104, %v3381
        %v3540 = vadd.f32 %v3105, %v3383
        %v3541 = vadd.f32 %v3106, %v3385
        %v3542 = vadd.f32 %v3107, %v3387
        %v3543 = vadd.f32 %v3108, %v3391
        %v3544 = vadd.f32 %v3109, %v3393
        %v3545 = vadd.f32 %v3110, %v3395
        %v3546 = vadd.f32 %v3111, %v3397
        %v3547 = vadd.f32 %v3112, %v3401
        %v3548 = vadd.f32 %v3113, %v3403
        %v3549 = vadd.f32 %v3114, %v3405
        %v3550 = vadd.f32 %v3115, %v3407
        %v3551 = vadd.f32 %v3116, %v3411
        %v3552 = vadd.f32 %v3117, %v3413
        %v3553 = vadd.f32 %v3118, %v3415
        %v3554 = vadd.f32 %v3119, %v3417
        %v3555 = vadd.f32 %v3120, %v3421
        %v3556 = vadd.f32 %v3121, %v3423
        %v3557 = vadd.f32 %v3122, %v3425
        %v3558 = vadd.f32 %v3123, %v3427
        %v3559 = vadd.f32 %v3124, %v3431
        %v3560 = vadd.f32 %v3125, %v3433
        %v3561 = vadd.f32 %v3126, %v3435
        %v3562 = vadd.f32 %v3127, %v3437
        %v3563 = vadd.f32 %v3128, %v3441
        %v3564 = vadd.f32 %v3129, %v3443
        %v3565 = vadd.f32 %v3130, %v3445
        %v3566 = vadd.f32 %v3131, %v3447
        %v3567 = vadd.f32 %v3132, %v3451
        %v3568 = vadd.f32 %v3133, %v3453
        %v3569 = vadd.f32 %v3134, %v3455
        %v3570 = vadd.f32 %v3135, %v3457
        %v3571 = vadd.f32 %v3136, %v3461
        %v3572 = vadd.f32 %v3137, %v3463
        %v3573 = vadd.f32 %v3138, %v3465
        %v3574 = vadd.f32 %v3139, %v3467
        %v3575 = vadd.f32 %v3140, %v3471
        %v3576 = vadd.f32 %v3141, %v3473
        %v3577 = vadd.f32 %v3142, %v3475
        %v3578 = vadd.f32 %v3143, %v3477
        %v3579 = vadd.f32 %v3144, %v3481
        %v3580 = vadd.f32 %v3145, %v3483
        %v3581 = vadd.f32 %v3146, %v3485
        %v3582 = vadd.f32 %v3147, %v3487
        %v3583 = vadd.f32 %v3148, %v3491
        %v3584 = vadd.f32 %v3149, %v3493
        %v3585 = vadd.f32 %v3150, %v3495
        %v3586 = vadd.f32 %v3151, %v3497
        %v3587 = vadd.f32 %v3152, %v3501
        %v3588 = vadd.f32 %v3153, %v3503
        %v3589 = vadd.f32 %v3154, %v3505
        %v3590 = vadd.f32 %v3155, %v3507
        %v3591 = vadd.f32 %v3156, %v3511
        %v3592 = vadd.f32 %v3157, %v3513
        %v3593 = vadd.f32 %v3158, %v3515
        %v3594 = vadd.f32 %v3159, %v3517
        %v3595 = vadd.f32 %v3160, %v3521
        %v3596 = vadd.f32 %v3161, %v3523
        %v3597 = vadd.f32 %v3162, %v3525
        %v3598 = vadd.f32 %v3163, %v3527
        %v3599 = vadd.f32 %v3164, %v3531
        %v3600 = vadd.f32 %v3165, %v3533
        %v3601 = vadd.f32 %v3166, %v3535
        %v3602 = vadd.f32 %v3167, %v3537
        %s3603 = scalar_lea.vmem %s249, 320
        %v3604 = vld [vmem:[%s3603] sm:$0xf]
        %v3605 = vld [vmem:[%s3603 + $0x4] sm:$0xf]
        %v3606 = vld [vmem:[%s3603 + $0x8] sm:$0xf]
        %v3607 = vld [vmem:[%s3603 + $0xc] sm:$0xf]
        %v3608 = vld [vmem:[%s3603 + $0x10] sm:$0xf]
        %v3609 = vld [vmem:[%s3603 + $0x14] sm:$0xf]
        %v3610 = vld [vmem:[%s3603 + $0x18] sm:$0xf]
        %v3611 = vld [vmem:[%s3603 + $0x1c] sm:$0xf]
        %v3612 = vld [vmem:[%s3603 + $0x20] sm:$0xf]
        %v3613 = vld [vmem:[%s3603 + $0x24] sm:$0xf]
        %v3614 = vld [vmem:[%s3603 + $0x28] sm:$0xf]
        %v3615 = vld [vmem:[%s3603 + $0x2c] sm:$0xf]
        %v3616 = vld [vmem:[%s3603 + $0x30] sm:$0xf]
        %v3617 = vld [vmem:[%s3603 + $0x34] sm:$0xf]
        %v3618 = vld [vmem:[%s3603 + $0x38] sm:$0xf]
        %v3619 = vld [vmem:[%s3603 + $0x3c] sm:$0xf]
        %v3620 = vld [vmem:[%s3603 + $0x80] sm:$0xf]
        %v3621 = vld [vmem:[%s3603 + $0x84] sm:$0xf]
        %v3622 = vld [vmem:[%s3603 + $0x88] sm:$0xf]
        %v3623 = vld [vmem:[%s3603 + $0x8c] sm:$0xf]
        %v3624 = vld [vmem:[%s3603 + $0x90] sm:$0xf]
        %v3625 = vld [vmem:[%s3603 + $0x94] sm:$0xf]
        %v3626 = vld [vmem:[%s3603 + $0x98] sm:$0xf]
        %v3627 = vld [vmem:[%s3603 + $0x9c] sm:$0xf]
        %v3628 = vld [vmem:[%s3603 + $0xa0] sm:$0xf]
        %v3629 = vld [vmem:[%s3603 + $0xa4] sm:$0xf]
        %v3630 = vld [vmem:[%s3603 + $0xa8] sm:$0xf]
        %v3631 = vld [vmem:[%s3603 + $0xac] sm:$0xf]
        %v3632 = vld [vmem:[%s3603 + $0xb0] sm:$0xf]
        %v3633 = vld [vmem:[%s3603 + $0xb4] sm:$0xf]
        %v3634 = vld [vmem:[%s3603 + $0xb8] sm:$0xf]
        %v3635 = vld [vmem:[%s3603 + $0xbc] sm:$0xf]
        %s3636 = scalar_lea.vmem %s1, 32
        %v3637 = vld [vmem:[%s3636] sm:$0xf]
        %v3670 = vunpack.c.l.b16 %v3604
        %v3671 = vunpack.c.l.b16 %v3605
        %v3672 = vunpack.c.l.b16 %v3606
        %v3673 = vunpack.c.l.b16 %v3607
        %v3674 = vunpack.c.l.b16 %v3608
        %v3675 = vunpack.c.l.b16 %v3609
        %v3676 = vunpack.c.l.b16 %v3610
        %v3677 = vunpack.c.l.b16 %v3611
        %v3678 = vunpack.c.l.b16 %v3612
        %v3679 = vunpack.c.l.b16 %v3613
        %v3680 = vunpack.c.l.b16 %v3614
        %v3681 = vunpack.c.l.b16 %v3615
        %v3682 = vunpack.c.l.b16 %v3616
        %v3683 = vunpack.c.l.b16 %v3617
        %v3684 = vunpack.c.l.b16 %v3618
        %v3685 = vunpack.c.l.b16 %v3619
        %v3686 = vunpack.c.l.b16 %v3620
        %v3687 = vunpack.c.l.b16 %v3621
        %v3688 = vunpack.c.l.b16 %v3622
        %v3689 = vunpack.c.l.b16 %v3623
        %v3690 = vunpack.c.l.b16 %v3624
        %v3691 = vunpack.c.l.b16 %v3625
        %v3692 = vunpack.c.l.b16 %v3626
        %v3693 = vunpack.c.l.b16 %v3627
        %v3694 = vunpack.c.l.b16 %v3628
        %v3695 = vunpack.c.l.b16 %v3629
        %v3696 = vunpack.c.l.b16 %v3630
        %v3697 = vunpack.c.l.b16 %v3631
        %v3698 = vunpack.c.l.b16 %v3632
        %v3699 = vunpack.c.l.b16 %v3633
        %v3700 = vunpack.c.l.b16 %v3634
        %v3701 = vunpack.c.l.b16 %v3635
        %v3702 = vpack.c.b16 %v3671, %v3670
        %v3703 = vpack.c.b16 %v3673, %v3672
        %v3704 = vpack.c.b16 %v3675, %v3674
        %v3705 = vpack.c.b16 %v3677, %v3676
        %v3706 = vpack.c.b16 %v3679, %v3678
        %v3707 = vpack.c.b16 %v3681, %v3680
        %v3708 = vpack.c.b16 %v3683, %v3682
        %v3709 = vpack.c.b16 %v3685, %v3684
        %v3710 = vpack.c.b16 %v3687, %v3686
        %v3711 = vpack.c.b16 %v3689, %v3688
        %v3712 = vpack.c.b16 %v3691, %v3690
        %v3713 = vpack.c.b16 %v3693, %v3692
        %v3714 = vpack.c.b16 %v3695, %v3694
        %v3715 = vpack.c.b16 %v3697, %v3696
        %v3716 = vpack.c.b16 %v3699, %v3698
        %v3717 = vpack.c.b16 %v3701, %v3700
        %v3720 = vunpack.c.l.s4 1983009808
        %v3721 = vunpack.c.0.s8 %v3720
        %v3722 = vlaneseq
        %v3723 = vshrl.u32 %v3722, 7
        %v3724 = vsub.s32 %v3721, %v3723
        %v3725 = vrot.slane %v3637, %v3724
        %v3726 = vcombine.high %v3725, %v3725
        %v3728 = vsel %vm408, %v3702, 0
        %v3731 = vsel %vm408, %v3703, 0
        %v3734 = vsel %vm408, %v3704, 0
        %v3737 = vsel %vm408, %v3705, 0
        %v3740 = vsel %vm408, %v3706, 0
        %v3743 = vsel %vm408, %v3707, 0
        %v3746 = vsel %vm408, %v3708, 0
        %v3749 = vsel %vm408, %v3709, 0
        %v3752 = vsel %vm408, %v3710, 0
        %v3755 = vsel %vm408, %v3711, 0
        %v3758 = vsel %vm408, %v3712, 0
        %v3761 = vsel %vm408, %v3713, 0
        %v3764 = vsel %vm408, %v3714, 0
        %v3767 = vsel %vm408, %v3715, 0
        %v3770 = vsel %vm408, %v3716, 0
        %v3773 = vsel %vm408, %v3717, 0
        %v3776 = vsel %vm457, %v3725, 0
        %v3779 = vsel %vm457, %v3726, 0
        %3781 = vmatprep.subr.bf16.mxu0 0
        %3782 = vmatpush1.bf16.msra.mxu0 0
        %3783 = vmatprep.subr.bf16.mxu0 0
        %3784 = vmatpush1.bf16.msra.mxu0 0
        %3785 = vmatprep.subr.bf16.mxu0 0
        %3786 = vmatpush1.bf16.msra.mxu0 0
        %3787 = vmatprep.subr.bf16.mxu0 0
        %3788 = vmatpush1.bf16.msra.mxu0 0
        %3789 = vmatprep.subr.bf16.mxu0 0
        %3790 = vmatpush1.bf16.msra.mxu0 0
        %3791 = vmatprep.subr.bf16.mxu0 0
        %3792 = vmatpush1.bf16.msra.mxu0 0
        %3793 = vmatprep.subr.bf16.mxu0 0
        %3794 = vmatpush1.bf16.msra.mxu0 0
        %3795 = vmatprep.subr.bf16.mxu0 %v3779
        %3796 = vmatpush1.bf16.msra.mxu0 %v3776
        %3797 = vmatprep.subr.bf16.mxu0 0
        %3798 = vmatpush2.bf16.msra.mxu0 0
        %3799 = vmatprep.subr.bf16.mxu0 0
        %3800 = vmatpush2.bf16.msra.mxu0 0
        %3801 = vmatprep.subr.bf16.mxu0 0
        %3802 = vmatpush2.bf16.msra.mxu0 0
        %3803 = vmatprep.subr.bf16.mxu0 0
        %3804 = vmatpush2.bf16.msra.mxu0 0
        %3805 = vmatprep.subr.bf16.mxu0 0
        %3806 = vmatpush2.bf16.msra.mxu0 0
        %3807 = vmatprep.subr.bf16.mxu0 0
        %3808 = vmatpush2.bf16.msra.mxu0 0
        %3809 = vmatprep.subr.bf16.mxu0 0
        %3810 = vmatpush2.bf16.msra.mxu0 0
        %3811 = vmatprep.subr.bf16.mxu0 0
        %3812 = vmatpush2.bf16.msra.mxu0 0
        %3813 = vmatprep.mubr.bf16.mxu0 0
        %3814 = vmatmul.mubr.bf16.gmra.mxu0 %v3728
        %v3815 = vpop.f32.mrf.mxu0
        %v3816 = vadd.f32 0.0, %v3815
        %v3817 = vpop.f32.mrf.mxu0
        %v3818 = vadd.f32 0.0, %v3817
        %v3819 = vpop.f32.mrf.mxu0
        %v3820 = vadd.f32 0.0, %v3819
        %v3821 = vpop.f32.mrf.mxu0
        %v3822 = vadd.f32 0.0, %v3821
        %3823 = vmatprep.mubr.bf16.mxu0 0
        %3824 = vmatmul.mubr.bf16.gmra.mxu0 %v3731
        %v3825 = vpop.f32.mrf.mxu0
        %v3826 = vadd.f32 0.0, %v3825
        %v3827 = vpop.f32.mrf.mxu0
        %v3828 = vadd.f32 0.0, %v3827
        %v3829 = vpop.f32.mrf.mxu0
        %v3830 = vadd.f32 0.0, %v3829
        %v3831 = vpop.f32.mrf.mxu0
        %v3832 = vadd.f32 0.0, %v3831
        %3833 = vmatprep.mubr.bf16.mxu0 0
        %3834 = vmatmul.mubr.bf16.gmra.mxu0 %v3734
        %v3835 = vpop.f32.mrf.mxu0
        %v3836 = vadd.f32 0.0, %v3835
        %v3837 = vpop.f32.mrf.mxu0
        %v3838 = vadd.f32 0.0, %v3837
        %v3839 = vpop.f32.mrf.mxu0
        %v3840 = vadd.f32 0.0, %v3839
        %v3841 = vpop.f32.mrf.mxu0
        %v3842 = vadd.f32 0.0, %v3841
        %3843 = vmatprep.mubr.bf16.mxu0 0
        %3844 = vmatmul.mubr.bf16.gmra.mxu0 %v3737
        %v3845 = vpop.f32.mrf.mxu0
        %v3846 = vadd.f32 0.0, %v3845
        %v3847 = vpop.f32.mrf.mxu0
        %v3848 = vadd.f32 0.0, %v3847
        %v3849 = vpop.f32.mrf.mxu0
        %v3850 = vadd.f32 0.0, %v3849
        %v3851 = vpop.f32.mrf.mxu0
        %v3852 = vadd.f32 0.0, %v3851
        %3853 = vmatprep.mubr.bf16.mxu0 0
        %3854 = vmatmul.mubr.bf16.gmra.mxu0 %v3740
        %v3855 = vpop.f32.mrf.mxu0
        %v3856 = vadd.f32 0.0, %v3855
        %v3857 = vpop.f32.mrf.mxu0
        %v3858 = vadd.f32 0.0, %v3857
        %v3859 = vpop.f32.mrf.mxu0
        %v3860 = vadd.f32 0.0, %v3859
        %v3861 = vpop.f32.mrf.mxu0
        %v3862 = vadd.f32 0.0, %v3861
        %3863 = vmatprep.mubr.bf16.mxu0 0
        %3864 = vmatmul.mubr.bf16.gmra.mxu0 %v3743
        %v3865 = vpop.f32.mrf.mxu0
        %v3866 = vadd.f32 0.0, %v3865
        %v3867 = vpop.f32.mrf.mxu0
        %v3868 = vadd.f32 0.0, %v3867
        %v3869 = vpop.f32.mrf.mxu0
        %v3870 = vadd.f32 0.0, %v3869
        %v3871 = vpop.f32.mrf.mxu0
        %v3872 = vadd.f32 0.0, %v3871
        %3873 = vmatprep.mubr.bf16.mxu0 0
        %3874 = vmatmul.mubr.bf16.gmra.mxu0 %v3746
        %v3875 = vpop.f32.mrf.mxu0
        %v3876 = vadd.f32 0.0, %v3875
        %v3877 = vpop.f32.mrf.mxu0
        %v3878 = vadd.f32 0.0, %v3877
        %v3879 = vpop.f32.mrf.mxu0
        %v3880 = vadd.f32 0.0, %v3879
        %v3881 = vpop.f32.mrf.mxu0
        %v3882 = vadd.f32 0.0, %v3881
        %3883 = vmatprep.mubr.bf16.mxu0 0
        %3884 = vmatmul.mubr.bf16.gmra.mxu0 %v3749
        %v3885 = vpop.f32.mrf.mxu0
        %v3886 = vadd.f32 0.0, %v3885
        %v3887 = vpop.f32.mrf.mxu0
        %v3888 = vadd.f32 0.0, %v3887
        %v3889 = vpop.f32.mrf.mxu0
        %v3890 = vadd.f32 0.0, %v3889
        %v3891 = vpop.f32.mrf.mxu0
        %v3892 = vadd.f32 0.0, %v3891
        %3893 = vmatprep.mubr.bf16.mxu0 0
        %3894 = vmatmul.mubr.bf16.gmra.mxu0 %v3752
        %v3895 = vpop.f32.mrf.mxu0
        %v3896 = vadd.f32 0.0, %v3895
        %v3897 = vpop.f32.mrf.mxu0
        %v3898 = vadd.f32 0.0, %v3897
        %v3899 = vpop.f32.mrf.mxu0
        %v3900 = vadd.f32 0.0, %v3899
        %v3901 = vpop.f32.mrf.mxu0
        %v3902 = vadd.f32 0.0, %v3901
        %3903 = vmatprep.mubr.bf16.mxu0 0
        %3904 = vmatmul.mubr.bf16.gmra.mxu0 %v3755
        %v3905 = vpop.f32.mrf.mxu0
        %v3906 = vadd.f32 0.0, %v3905
        %v3907 = vpop.f32.mrf.mxu0
        %v3908 = vadd.f32 0.0, %v3907
        %v3909 = vpop.f32.mrf.mxu0
        %v3910 = vadd.f32 0.0, %v3909
        %v3911 = vpop.f32.mrf.mxu0
        %v3912 = vadd.f32 0.0, %v3911
        %3913 = vmatprep.mubr.bf16.mxu0 0
        %3914 = vmatmul.mubr.bf16.gmra.mxu0 %v3758
        %v3915 = vpop.f32.mrf.mxu0
        %v3916 = vadd.f32 0.0, %v3915
        %v3917 = vpop.f32.mrf.mxu0
        %v3918 = vadd.f32 0.0, %v3917
        %v3919 = vpop.f32.mrf.mxu0
        %v3920 = vadd.f32 0.0, %v3919
        %v3921 = vpop.f32.mrf.mxu0
        %v3922 = vadd.f32 0.0, %v3921
        %3923 = vmatprep.mubr.bf16.mxu0 0
        %3924 = vmatmul.mubr.bf16.gmra.mxu0 %v3761
        %v3925 = vpop.f32.mrf.mxu0
        %v3926 = vadd.f32 0.0, %v3925
        %v3927 = vpop.f32.mrf.mxu0
        %v3928 = vadd.f32 0.0, %v3927
        %v3929 = vpop.f32.mrf.mxu0
        %v3930 = vadd.f32 0.0, %v3929
        %v3931 = vpop.f32.mrf.mxu0
        %v3932 = vadd.f32 0.0, %v3931
        %3933 = vmatprep.mubr.bf16.mxu0 0
        %3934 = vmatmul.mubr.bf16.gmra.mxu0 %v3764
        %v3935 = vpop.f32.mrf.mxu0
        %v3936 = vadd.f32 0.0, %v3935
        %v3937 = vpop.f32.mrf.mxu0
        %v3938 = vadd.f32 0.0, %v3937
        %v3939 = vpop.f32.mrf.mxu0
        %v3940 = vadd.f32 0.0, %v3939
        %v3941 = vpop.f32.mrf.mxu0
        %v3942 = vadd.f32 0.0, %v3941
        %3943 = vmatprep.mubr.bf16.mxu0 0
        %3944 = vmatmul.mubr.bf16.gmra.mxu0 %v3767
        %v3945 = vpop.f32.mrf.mxu0
        %v3946 = vadd.f32 0.0, %v3945
        %v3947 = vpop.f32.mrf.mxu0
        %v3948 = vadd.f32 0.0, %v3947
        %v3949 = vpop.f32.mrf.mxu0
        %v3950 = vadd.f32 0.0, %v3949
        %v3951 = vpop.f32.mrf.mxu0
        %v3952 = vadd.f32 0.0, %v3951
        %3953 = vmatprep.mubr.bf16.mxu0 0
        %3954 = vmatmul.mubr.bf16.gmra.mxu0 %v3770
        %v3955 = vpop.f32.mrf.mxu0
        %v3956 = vadd.f32 0.0, %v3955
        %v3957 = vpop.f32.mrf.mxu0
        %v3958 = vadd.f32 0.0, %v3957
        %v3959 = vpop.f32.mrf.mxu0
        %v3960 = vadd.f32 0.0, %v3959
        %v3961 = vpop.f32.mrf.mxu0
        %v3962 = vadd.f32 0.0, %v3961
        %3963 = vmatprep.mubr.bf16.mxu0 0
        %3964 = vmatmul.mubr.bf16.gmra.mxu0 %v3773
        %v3965 = vpop.f32.mrf.mxu0
        %v3966 = vadd.f32 0.0, %v3965
        %v3967 = vpop.f32.mrf.mxu0
        %v3968 = vadd.f32 0.0, %v3967
        %v3969 = vpop.f32.mrf.mxu0
        %v3970 = vadd.f32 0.0, %v3969
        %v3971 = vpop.f32.mrf.mxu0
        %v3972 = vadd.f32 0.0, %v3971
        %3973 = vdwg.mxu0
        %v3974 = vadd.f32 %v3539, %v3816
        %v3975 = vadd.f32 %v3540, %v3818
        %v3976 = vadd.f32 %v3541, %v3820
        %v3977 = vadd.f32 %v3542, %v3822
        %v3978 = vadd.f32 %v3543, %v3826
        %v3979 = vadd.f32 %v3544, %v3828
        %v3980 = vadd.f32 %v3545, %v3830
        %v3981 = vadd.f32 %v3546, %v3832
        %v3982 = vadd.f32 %v3547, %v3836
        %v3983 = vadd.f32 %v3548, %v3838
        %v3984 = vadd.f32 %v3549, %v3840
        %v3985 = vadd.f32 %v3550, %v3842
        %v3986 = vadd.f32 %v3551, %v3846
        %v3987 = vadd.f32 %v3552, %v3848
        %v3988 = vadd.f32 %v3553, %v3850
        %v3989 = vadd.f32 %v3554, %v3852
        %v3990 = vadd.f32 %v3555, %v3856
        %v3991 = vadd.f32 %v3556, %v3858
        %v3992 = vadd.f32 %v3557, %v3860
        %v3993 = vadd.f32 %v3558, %v3862
        %v3994 = vadd.f32 %v3559, %v3866
        %v3995 = vadd.f32 %v3560, %v3868
        %v3996 = vadd.f32 %v3561, %v3870
        %v3997 = vadd.f32 %v3562, %v3872
        %v3998 = vadd.f32 %v3563, %v3876
        %v3999 = vadd.f32 %v3564, %v3878
        %v4000 = vadd.f32 %v3565, %v3880
        %v4001 = vadd.f32 %v3566, %v3882
        %v4002 = vadd.f32 %v3567, %v3886
        %v4003 = vadd.f32 %v3568, %v3888
        %v4004 = vadd.f32 %v3569, %v3890
        %v4005 = vadd.f32 %v3570, %v3892
        %v4006 = vadd.f32 %v3571, %v3896
        %v4007 = vadd.f32 %v3572, %v3898
        %v4008 = vadd.f32 %v3573, %v3900
        %v4009 = vadd.f32 %v3574, %v3902
        %v4010 = vadd.f32 %v3575, %v3906
        %v4011 = vadd.f32 %v3576, %v3908
        %v4012 = vadd.f32 %v3577, %v3910
        %v4013 = vadd.f32 %v3578, %v3912
        %v4014 = vadd.f32 %v3579, %v3916
        %v4015 = vadd.f32 %v3580, %v3918
        %v4016 = vadd.f32 %v3581, %v3920
        %v4017 = vadd.f32 %v3582, %v3922
        %v4018 = vadd.f32 %v3583, %v3926
        %v4019 = vadd.f32 %v3584, %v3928
        %v4020 = vadd.f32 %v3585, %v3930
        %v4021 = vadd.f32 %v3586, %v3932
        %v4022 = vadd.f32 %v3587, %v3936
        %v4023 = vadd.f32 %v3588, %v3938
        %v4024 = vadd.f32 %v3589, %v3940
        %v4025 = vadd.f32 %v3590, %v3942
        %v4026 = vadd.f32 %v3591, %v3946
        %v4027 = vadd.f32 %v3592, %v3948
        %v4028 = vadd.f32 %v3593, %v3950
        %v4029 = vadd.f32 %v3594, %v3952
        %v4030 = vadd.f32 %v3595, %v3956
        %v4031 = vadd.f32 %v3596, %v3958
        %v4032 = vadd.f32 %v3597, %v3960
        %v4033 = vadd.f32 %v3598, %v3962
        %v4034 = vadd.f32 %v3599, %v3966
        %v4035 = vadd.f32 %v3600, %v3968
        %v4036 = vadd.f32 %v3601, %v3970
        %v4037 = vadd.f32 %v3602, %v3972
        %v4038 = vld [vmem:[%s2] sm:$0x3]
        %v4040 = vlaneseq
        %v4041 = vshrl.u32 %v4040, 7
        %v4042 = vsub.s32 0, %v4041
        %v4043 = vrot.slane %v4038, %v4042
        %v4044 = vlaneseq
        %v4045 = vshrl.u32 %v4044, 7
        %v4046 = vsub.s32 1, %v4045
        %v4047 = vrot.slane %v4038, %v4046
        %v4050 = vadd.f32 %v3974, %v4043
        %v4051 = vadd.f32 %v3975, %v4047
        %v4052 = vadd.f32 %v3976, %v4043
        %v4053 = vadd.f32 %v3977, %v4047
        %v4054 = vadd.f32 %v3978, %v4043
        %v4055 = vadd.f32 %v3979, %v4047
        %v4056 = vadd.f32 %v3980, %v4043
        %v4057 = vadd.f32 %v3981, %v4047
        %v4058 = vadd.f32 %v3982, %v4043
        %v4059 = vadd.f32 %v3983, %v4047
        %v4060 = vadd.f32 %v3984, %v4043
        %v4061 = vadd.f32 %v3985, %v4047
        %v4062 = vadd.f32 %v3986, %v4043
        %v4063 = vadd.f32 %v3987, %v4047
        %v4064 = vadd.f32 %v3988, %v4043
        %v4065 = vadd.f32 %v3989, %v4047
        %v4066 = vadd.f32 %v3990, %v4043
        %v4067 = vadd.f32 %v3991, %v4047
        %v4068 = vadd.f32 %v3992, %v4043
        %v4069 = vadd.f32 %v3993, %v4047
        %v4070 = vadd.f32 %v3994, %v4043
        %v4071 = vadd.f32 %v3995, %v4047
        %v4072 = vadd.f32 %v3996, %v4043
        %v4073 = vadd.f32 %v3997, %v4047
        %v4074 = vadd.f32 %v3998, %v4043
        %v4075 = vadd.f32 %v3999, %v4047
        %v4076 = vadd.f32 %v4000, %v4043
        %v4077 = vadd.f32 %v4001, %v4047
        %v4078 = vadd.f32 %v4002, %v4043
        %v4079 = vadd.f32 %v4003, %v4047
        %v4080 = vadd.f32 %v4004, %v4043
        %v4081 = vadd.f32 %v4005, %v4047
        %v4082 = vadd.f32 %v4006, %v4043
        %v4083 = vadd.f32 %v4007, %v4047
        %v4084 = vadd.f32 %v4008, %v4043
        %v4085 = vadd.f32 %v4009, %v4047
        %v4086 = vadd.f32 %v4010, %v4043
        %v4087 = vadd.f32 %v4011, %v4047
        %v4088 = vadd.f32 %v4012, %v4043
        %v4089 = vadd.f32 %v4013, %v4047
        %v4090 = vadd.f32 %v4014, %v4043
        %v4091 = vadd.f32 %v4015, %v4047
        %v4092 = vadd.f32 %v4016, %v4043
        %v4093 = vadd.f32 %v4017, %v4047
        %v4094 = vadd.f32 %v4018, %v4043
        %v4095 = vadd.f32 %v4019, %v4047
        %v4096 = vadd.f32 %v4020, %v4043
        %v4097 = vadd.f32 %v4021, %v4047
        %v4098 = vadd.f32 %v4022, %v4043
        %v4099 = vadd.f32 %v4023, %v4047
        %v4100 = vadd.f32 %v4024, %v4043
        %v4101 = vadd.f32 %v4025, %v4047
        %v4102 = vadd.f32 %v4026, %v4043
        %v4103 = vadd.f32 %v4027, %v4047
        %v4104 = vadd.f32 %v4028, %v4043
        %v4105 = vadd.f32 %v4029, %v4047
        %v4106 = vadd.f32 %v4030, %v4043
        %v4107 = vadd.f32 %v4031, %v4047
        %v4108 = vadd.f32 %v4032, %v4043
        %v4109 = vadd.f32 %v4033, %v4047
        %v4110 = vadd.f32 %v4034, %v4043
        %v4111 = vadd.f32 %v4035, %v4047
        %v4112 = vadd.f32 %v4036, %v4043
        %v4113 = vadd.f32 %v4037, %v4047
        %v4114 = vmax.f32 %v4050, 0.0
        %v4115 = vmax.f32 %v4051, 0.0
        %v4116 = vmax.f32 %v4052, 0.0
        %v4117 = vmax.f32 %v4053, 0.0
        %v4118 = vmax.f32 %v4054, 0.0
        %v4119 = vmax.f32 %v4055, 0.0
        %v4120 = vmax.f32 %v4056, 0.0
        %v4121 = vmax.f32 %v4057, 0.0
        %v4122 = vmax.f32 %v4058, 0.0
        %v4123 = vmax.f32 %v4059, 0.0
        %v4124 = vmax.f32 %v4060, 0.0
        %v4125 = vmax.f32 %v4061, 0.0
        %v4126 = vmax.f32 %v4062, 0.0
        %v4127 = vmax.f32 %v4063, 0.0
        %v4128 = vmax.f32 %v4064, 0.0
        %v4129 = vmax.f32 %v4065, 0.0
        %v4130 = vmax.f32 %v4066, 0.0
        %v4131 = vmax.f32 %v4067, 0.0
        %v4132 = vmax.f32 %v4068, 0.0
        %v4133 = vmax.f32 %v4069, 0.0
        %v4134 = vmax.f32 %v4070, 0.0
        %v4135 = vmax.f32 %v4071, 0.0
        %v4136 = vmax.f32 %v4072, 0.0
        %v4137 = vmax.f32 %v4073, 0.0
        %v4138 = vmax.f32 %v4074, 0.0
        %v4139 = vmax.f32 %v4075, 0.0
        %v4140 = vmax.f32 %v4076, 0.0
        %v4141 = vmax.f32 %v4077, 0.0
        %v4142 = vmax.f32 %v4078, 0.0
        %v4143 = vmax.f32 %v4079, 0.0
        %v4144 = vmax.f32 %v4080, 0.0
        %v4145 = vmax.f32 %v4081, 0.0
        %v4146 = vmax.f32 %v4082, 0.0
        %v4147 = vmax.f32 %v4083, 0.0
        %v4148 = vmax.f32 %v4084, 0.0
        %v4149 = vmax.f32 %v4085, 0.0
        %v4150 = vmax.f32 %v4086, 0.0
        %v4151 = vmax.f32 %v4087, 0.0
        %v4152 = vmax.f32 %v4088, 0.0
        %v4153 = vmax.f32 %v4089, 0.0
        %v4154 = vmax.f32 %v4090, 0.0
        %v4155 = vmax.f32 %v4091, 0.0
        %v4156 = vmax.f32 %v4092, 0.0
        %v4157 = vmax.f32 %v4093, 0.0
        %v4158 = vmax.f32 %v4094, 0.0
        %v4159 = vmax.f32 %v4095, 0.0
        %v4160 = vmax.f32 %v4096, 0.0
        %v4161 = vmax.f32 %v4097, 0.0
        %v4162 = vmax.f32 %v4098, 0.0
        %v4163 = vmax.f32 %v4099, 0.0
        %v4164 = vmax.f32 %v4100, 0.0
        %v4165 = vmax.f32 %v4101, 0.0
        %v4166 = vmax.f32 %v4102, 0.0
        %v4167 = vmax.f32 %v4103, 0.0
        %v4168 = vmax.f32 %v4104, 0.0
        %v4169 = vmax.f32 %v4105, 0.0
        %v4170 = vmax.f32 %v4106, 0.0
        %v4171 = vmax.f32 %v4107, 0.0
        %v4172 = vmax.f32 %v4108, 0.0
        %v4173 = vmax.f32 %v4109, 0.0
        %v4174 = vmax.f32 %v4110, 0.0
        %v4175 = vmax.f32 %v4111, 0.0
        %v4176 = vmax.f32 %v4112, 0.0
        %v4177 = vmax.f32 %v4113, 0.0
        %v4178 = vadd.f32 %v4114, %v4116
        %v4179 = vadd.f32 %v4178, %v4118
        %v4180 = vadd.f32 %v4179, %v4120
        %v4181 = vadd.f32 %v4180, %v4122
        %v4182 = vadd.f32 %v4181, %v4124
        %v4183 = vadd.f32 %v4182, %v4126
        %v4184 = vadd.f32 %v4183, %v4128
        %v4185 = vadd.f32 %v4184, %v4130
        %v4186 = vadd.f32 %v4185, %v4132
        %v4187 = vadd.f32 %v4186, %v4134
        %v4188 = vadd.f32 %v4187, %v4136
        %v4189 = vadd.f32 %v4188, %v4138
        %v4190 = vadd.f32 %v4189, %v4140
        %v4191 = vadd.f32 %v4190, %v4142
        %v4192 = vadd.f32 %v4191, %v4144
        %v4193 = vadd.f32 %v4192, %v4146
        %v4194 = vadd.f32 %v4193, %v4148
        %v4195 = vadd.f32 %v4194, %v4150
        %v4196 = vadd.f32 %v4195, %v4152
        %v4197 = vadd.f32 %v4196, %v4154
        %v4198 = vadd.f32 %v4197, %v4156
        %v4199 = vadd.f32 %v4198, %v4158
        %v4200 = vadd.f32 %v4199, %v4160
        %v4201 = vadd.f32 %v4200, %v4162
        %v4202 = vadd.f32 %v4201, %v4164
        %v4203 = vadd.f32 %v4202, %v4166
        %v4204 = vadd.f32 %v4203, %v4168
        %v4205 = vadd.f32 %v4204, %v4170
        %v4206 = vadd.f32 %v4205, %v4172
        %v4207 = vadd.f32 %v4206, %v4174
        %v4208 = vadd.f32 %v4207, %v4176
        %v4209 = vrot.slane %v4208, 4
        %v4210 = vadd.f32 %v4208, %v4209
        %v4211 = vrot.slane %v4210, 2
        %v4212 = vadd.f32 %v4210, %v4211
        %v4213 = vrot.slane %v4212, 1
        %v4214 = vadd.f32 %v4212, %v4213
        %v4215 = vadd.f32 %v4115, %v4117
        %v4216 = vadd.f32 %v4215, %v4119
        %v4217 = vadd.f32 %v4216, %v4121
        %v4218 = vadd.f32 %v4217, %v4123
        %v4219 = vadd.f32 %v4218, %v4125
        %v4220 = vadd.f32 %v4219, %v4127
        %v4221 = vadd.f32 %v4220, %v4129
        %v4222 = vadd.f32 %v4221, %v4131
        %v4223 = vadd.f32 %v4222, %v4133
        %v4224 = vadd.f32 %v4223, %v4135
        %v4225 = vadd.f32 %v4224, %v4137
        %v4226 = vadd.f32 %v4225, %v4139
        %v4227 = vadd.f32 %v4226, %v4141
        %v4228 = vadd.f32 %v4227, %v4143
        %v4229 = vadd.f32 %v4228, %v4145
        %v4230 = vadd.f32 %v4229, %v4147
        %v4231 = vadd.f32 %v4230, %v4149
        %v4232 = vadd.f32 %v4231, %v4151
        %v4233 = vadd.f32 %v4232, %v4153
        %v4234 = vadd.f32 %v4233, %v4155
        %v4235 = vadd.f32 %v4234, %v4157
        %v4236 = vadd.f32 %v4235, %v4159
        %v4237 = vadd.f32 %v4236, %v4161
        %v4238 = vadd.f32 %v4237, %v4163
        %v4239 = vadd.f32 %v4238, %v4165
        %v4240 = vadd.f32 %v4239, %v4167
        %v4241 = vadd.f32 %v4240, %v4169
        %v4242 = vadd.f32 %v4241, %v4171
        %v4243 = vadd.f32 %v4242, %v4173
        %v4244 = vadd.f32 %v4243, %v4175
        %v4245 = vadd.f32 %v4244, %v4177
        %v4246 = vrot.slane %v4245, 4
        %v4247 = vadd.f32 %v4245, %v4246
        %v4248 = vrot.slane %v4247, 2
        %v4249 = vadd.f32 %v4247, %v4248
        %v4250 = vrot.slane %v4249, 1
        %v4251 = vadd.f32 %v4249, %v4250
        %v4252 = vmul.f32 %v4214, 0.00390625
        %v4253 = vmul.f32 %v4251, 0.00390625
        %v4254 = vadd.f32 %v4252, %v4253
        %v4255 = vld [vmem:[%s3] sm:$0xff]
        %v4256 = vld [vmem:[%s3 + $0x8] sm:$0xff]
        %v4257 = vld [vmem:[%s3 + $0x10] sm:$0xff]
        %v4258 = vld [vmem:[%s3 + $0x18] sm:$0xff]
        %v4259 = vld [vmem:[%s3 + $0x20] sm:$0xff]
        %v4260 = vld [vmem:[%s3 + $0x28] sm:$0xff]
        %v4261 = vld [vmem:[%s3 + $0x30] sm:$0xff]
        %v4262 = vld [vmem:[%s3 + $0x38] sm:$0xff]
        %v4263 = vld [vmem:[%s3 + $0x40] sm:$0xff]
        %v4264 = vld [vmem:[%s3 + $0x48] sm:$0xff]
        %v4265 = vld [vmem:[%s3 + $0x50] sm:$0xff]
        %v4266 = vld [vmem:[%s3 + $0x58] sm:$0xff]
        %v4267 = vld [vmem:[%s3 + $0x60] sm:$0xff]
        %v4268 = vld [vmem:[%s3 + $0x68] sm:$0xff]
        %v4269 = vld [vmem:[%s3 + $0x70] sm:$0xff]
        %v4270 = vld [vmem:[%s3 + $0x78] sm:$0xff]
        %v4271 = vld [vmem:[%s4] sm:$0x1]
        %4272 = vmatprep.subr.mxu0 0.0
        %4273 = vmatpush1.msra.mxu0 %v4270
        %4274 = vmatprep.subr.mxu0 0.0
        %4275 = vmatpush1.msra.mxu0 %v4269
        %4276 = vmatprep.subr.mxu0 0.0
        %4277 = vmatpush1.msra.mxu0 %v4268
        %4278 = vmatprep.subr.mxu0 0.0
        %4279 = vmatpush1.msra.mxu0 %v4267
        %4280 = vmatprep.subr.mxu0 0.0
        %4281 = vmatpush1.msra.mxu0 %v4266
        %4282 = vmatprep.subr.mxu0 0.0
        %4283 = vmatpush1.msra.mxu0 %v4265
        %4284 = vmatprep.subr.mxu0 0.0
        %4285 = vmatpush1.msra.mxu0 %v4264
        %4286 = vmatprep.subr.mxu0 0.0
        %4287 = vmatpush1.msra.mxu0 %v4263
        %4288 = vmatprep.subr.mxu0 0.0
        %4289 = vmatpush1.msra.mxu0 %v4262
        %4290 = vmatprep.subr.mxu0 0.0
        %4291 = vmatpush1.msra.mxu0 %v4261
        %4292 = vmatprep.subr.mxu0 0.0
        %4293 = vmatpush1.msra.mxu0 %v4260
        %4294 = vmatprep.subr.mxu0 0.0
        %4295 = vmatpush1.msra.mxu0 %v4259
        %4296 = vmatprep.subr.mxu0 0.0
        %4297 = vmatpush1.msra.mxu0 %v4258
        %4298 = vmatprep.subr.mxu0 0.0
        %4299 = vmatpush1.msra.mxu0 %v4257
        %4300 = vmatprep.subr.mxu0 0.0
        %4301 = vmatpush1.msra.mxu0 %v4256
        %4302 = vmatprep.subr.mxu0 0.0
        %4303 = vmatpush1.msra.mxu0 %v4255
        %4304 = vmatprep.subr.mxu0 0.0
        %4305 = vmatpush2.msra.mxu0 0.0
        %4306 = vmatprep.subr.mxu0 0.0
        %4307 = vmatpush2.msra.mxu0 0.0
        %4308 = vmatprep.subr.mxu0 0.0
        %4309 = vmatpush2.msra.mxu0 0.0
        %4310 = vmatprep.subr.mxu0 0.0
        %4311 = vmatpush2.msra.mxu0 0.0
        %4312 = vmatprep.subr.mxu0 0.0
        %4313 = vmatpush2.msra.mxu0 0.0
        %4314 = vmatprep.subr.mxu0 0.0
        %4315 = vmatpush2.msra.mxu0 0.0
        %4316 = vmatprep.subr.mxu0 0.0
        %4317 = vmatpush2.msra.mxu0 0.0
        %4318 = vmatprep.subr.mxu0 0.0
        %4319 = vmatpush2.msra.mxu0 0.0
        %4320 = vmatprep.subr.mxu0 0.0
        %4321 = vmatpush2.msra.mxu0 0.0
        %4322 = vmatprep.subr.mxu0 0.0
        %4323 = vmatpush2.msra.mxu0 0.0
        %4324 = vmatprep.subr.mxu0 0.0
        %4325 = vmatpush2.msra.mxu0 0.0
        %4326 = vmatprep.subr.mxu0 0.0
        %4327 = vmatpush2.msra.mxu0 0.0
        %4328 = vmatprep.subr.mxu0 0.0
        %4329 = vmatpush2.msra.mxu0 0.0
        %4330 = vmatprep.subr.mxu0 0.0
        %4331 = vmatpush2.msra.mxu0 0.0
        %4332 = vmatprep.subr.mxu0 0.0
        %4333 = vmatpush2.msra.mxu0 0.0
        %4334 = vmatprep.subr.mxu0 0.0
        %4335 = vmatpush2.msra.mxu0 0.0
        %4336 = vmatprep.mubr.f32.mxu0 0.0
        %4337 = vmatmul.mubr.f32.gmra.mxu0 %v4254
        %v4338 = vpop.f32.mrf.mxu0
        %v4339 = vadd.f32 %v4271, %v4338
        %v4340 = vpop.f32.mrf.mxu0
        %4341 = vdwg.mxu0
        %v4342 = vld [vmem:[%s5] sm:$0xff]
        %v4343 = vld [vmem:[%s5 + $0x8] sm:$0xff]
        %v4344 = vld [vmem:[%s5 + $0x10] sm:$0xff]
        %v4345 = vld [vmem:[%s5 + $0x18] sm:$0xff]
        %v4346 = vld [vmem:[%s5 + $0x20] sm:$0xff]
        %v4347 = vld [vmem:[%s5 + $0x28] sm:$0xff]
        %v4348 = vld [vmem:[%s5 + $0x30] sm:$0xff]
        %v4349 = vld [vmem:[%s5 + $0x38] sm:$0xff]
        %v4350 = vld [vmem:[%s5 + $0x40] sm:$0xff]
        %v4351 = vld [vmem:[%s5 + $0x48] sm:$0xff]
        %v4352 = vld [vmem:[%s5 + $0x50] sm:$0xff]
        %v4353 = vld [vmem:[%s5 + $0x58] sm:$0xff]
        %v4354 = vld [vmem:[%s5 + $0x60] sm:$0xff]
        %v4355 = vld [vmem:[%s5 + $0x68] sm:$0xff]
        %v4356 = vld [vmem:[%s5 + $0x70] sm:$0xff]
        %v4357 = vld [vmem:[%s5 + $0x78] sm:$0xff]
        %v4358 = vld [vmem:[%s5 + $0x80] sm:$0xff]
        %v4359 = vld [vmem:[%s5 + $0x88] sm:$0xff]
        %v4360 = vld [vmem:[%s5 + $0x90] sm:$0xff]
        %v4361 = vld [vmem:[%s5 + $0x98] sm:$0xff]
        %v4362 = vld [vmem:[%s5 + $0xa0] sm:$0xff]
        %v4363 = vld [vmem:[%s5 + $0xa8] sm:$0xff]
        %v4364 = vld [vmem:[%s5 + $0xb0] sm:$0xff]
        %v4365 = vld [vmem:[%s5 + $0xb8] sm:$0xff]
        %v4366 = vld [vmem:[%s5 + $0xc0] sm:$0xff]
        %v4367 = vld [vmem:[%s5 + $0xc8] sm:$0xff]
        %v4368 = vld [vmem:[%s5 + $0xd0] sm:$0xff]
        %v4369 = vld [vmem:[%s5 + $0xd8] sm:$0xff]
        %v4370 = vld [vmem:[%s5 + $0xe0] sm:$0xff]
        %v4371 = vld [vmem:[%s5 + $0xe8] sm:$0xff]
        %v4372 = vld [vmem:[%s5 + $0xf0] sm:$0xff]
        %v4373 = vld [vmem:[%s5 + $0xf8] sm:$0xff]
        %4374 = vmatprep.subr.mxu0 %v4373
        %4375 = vmatpush1.msra.mxu0 %v4372
        %4376 = vmatprep.subr.mxu0 %v4371
        %4377 = vmatpush1.msra.mxu0 %v4370
        %4378 = vmatprep.subr.mxu0 %v4369
        %4379 = vmatpush1.msra.mxu0 %v4368
        %4380 = vmatprep.subr.mxu0 %v4367
        %4381 = vmatpush1.msra.mxu0 %v4366
        %4382 = vmatprep.subr.mxu0 %v4365
        %4383 = vmatpush1.msra.mxu0 %v4364
        %4384 = vmatprep.subr.mxu0 %v4363
        %4385 = vmatpush1.msra.mxu0 %v4362
        %4386 = vmatprep.subr.mxu0 %v4361
        %4387 = vmatpush1.msra.mxu0 %v4360
        %4388 = vmatprep.subr.mxu0 %v4359
        %4389 = vmatpush1.msra.mxu0 %v4358
        %4390 = vmatprep.subr.mxu0 %v4357
        %4391 = vmatpush1.msra.mxu0 %v4356
        %4392 = vmatprep.subr.mxu0 %v4355
        %4393 = vmatpush1.msra.mxu0 %v4354
        %4394 = vmatprep.subr.mxu0 %v4353
        %4395 = vmatpush1.msra.mxu0 %v4352
        %4396 = vmatprep.subr.mxu0 %v4351
        %4397 = vmatpush1.msra.mxu0 %v4350
        %4398 = vmatprep.subr.mxu0 %v4349
        %4399 = vmatpush1.msra.mxu0 %v4348
        %4400 = vmatprep.subr.mxu0 %v4347
        %4401 = vmatpush1.msra.mxu0 %v4346
        %4402 = vmatprep.subr.mxu0 %v4345
        %4403 = vmatpush1.msra.mxu0 %v4344
        %4404 = vmatprep.subr.mxu0 %v4343
        %4405 = vmatpush1.msra.mxu0 %v4342
        %4406 = vmatprep.subr.mxu0 0.0
        %4407 = vmatpush2.msra.mxu0 0.0
        %4408 = vmatprep.subr.mxu0 0.0
        %4409 = vmatpush2.msra.mxu0 0.0
        %4410 = vmatprep.subr.mxu0 0.0
        %4411 = vmatpush2.msra.mxu0 0.0
        %4412 = vmatprep.subr.mxu0 0.0
        %4413 = vmatpush2.msra.mxu0 0.0
        %4414 = vmatprep.subr.mxu0 0.0
        %4415 = vmatpush2.msra.mxu0 0.0
        %4416 = vmatprep.subr.mxu0 0.0
        %4417 = vmatpush2.msra.mxu0 0.0
        %4418 = vmatprep.subr.mxu0 0.0
        %4419 = vmatpush2.msra.mxu0 0.0
        %4420 = vmatprep.subr.mxu0 0.0
        %4421 = vmatpush2.msra.mxu0 0.0
        %4422 = vmatprep.subr.mxu0 0.0
        %4423 = vmatpush2.msra.mxu0 0.0
        %4424 = vmatprep.subr.mxu0 0.0
        %4425 = vmatpush2.msra.mxu0 0.0
        %4426 = vmatprep.subr.mxu0 0.0
        %4427 = vmatpush2.msra.mxu0 0.0
        %4428 = vmatprep.subr.mxu0 0.0
        %4429 = vmatpush2.msra.mxu0 0.0
        %4430 = vmatprep.subr.mxu0 0.0
        %4431 = vmatpush2.msra.mxu0 0.0
        %4432 = vmatprep.subr.mxu0 0.0
        %4433 = vmatpush2.msra.mxu0 0.0
        %4434 = vmatprep.subr.mxu0 0.0
        %4435 = vmatpush2.msra.mxu0 0.0
        %4436 = vmatprep.subr.mxu0 0.0
        %4437 = vmatpush2.msra.mxu0 0.0
        %4438 = vmatprep.mubr.f32.mxu0 0.0
        %4439 = vmatmul.mubr.f32.gmra.mxu0 %v4339
        %v4440 = vpop.f32.mrf.mxu0
        %v4441 = vadd.f32 0.0, %v4440
        %v4442 = vpop.f32.mrf.mxu0
        %v4443 = vadd.f32 0.0, %v4442
        %4444 = vdwg.mxu0
        %v4445 = vmax.f32 %v4441, %v4443
        %v4446 = vsub.f32 %v4441, %v4445
        %v4447 = vmul.f32 %v4446, 1.442695
        %v4448 = vpow.pop %v4447
        %v4449 = vsub.f32 %v4443, %v4445
        %v4450 = vmul.f32 %v4449, 1.442695
        %v4451 = vpow.pop %v4450
        %v4452 = vadd.f32 %v4448, %v4451
        %v4453 = vrcp.pop %v4452
        %v4454 = vmul.f32 %v4448, %v4453
        %v4455 = vlaneseq
        %v4456 = vshrl.u32 %v4455, 7
        %v4457 = vsub.s32 0, %v4456
        %v4458 = vrot.slane %v4454, %v4457
        %v4459 = vmul.f32 %v4458, %v4114
        %v4460 = vmul.f32 %v4458, %v4116
        %v4461 = vmul.f32 %v4458, %v4118
        %v4462 = vmul.f32 %v4458, %v4120
        %v4463 = vmul.f32 %v4458, %v4122
        %v4464 = vmul.f32 %v4458, %v4124
        %v4465 = vmul.f32 %v4458, %v4126
        %v4466 = vmul.f32 %v4458, %v4128
        %v4467 = vmul.f32 %v4458, %v4130
        %v4468 = vmul.f32 %v4458, %v4132
        %v4469 = vmul.f32 %v4458, %v4134
        %v4470 = vmul.f32 %v4458, %v4136
        %v4471 = vmul.f32 %v4458, %v4138
        %v4472 = vmul.f32 %v4458, %v4140
        %v4473 = vmul.f32 %v4458, %v4142
        %v4474 = vmul.f32 %v4458, %v4144
        %v4475 = vmul.f32 %v4458, %v4146
        %v4476 = vmul.f32 %v4458, %v4148
        %v4477 = vmul.f32 %v4458, %v4150
        %v4478 = vmul.f32 %v4458, %v4152
        %v4479 = vmul.f32 %v4458, %v4154
        %v4480 = vmul.f32 %v4458, %v4156
        %v4481 = vmul.f32 %v4458, %v4158
        %v4482 = vmul.f32 %v4458, %v4160
        %v4483 = vmul.f32 %v4458, %v4162
        %v4484 = vmul.f32 %v4458, %v4164
        %v4485 = vmul.f32 %v4458, %v4166
        %v4486 = vmul.f32 %v4458, %v4168
        %v4487 = vmul.f32 %v4458, %v4170
        %v4488 = vmul.f32 %v4458, %v4172
        %v4489 = vmul.f32 %v4458, %v4174
        %v4490 = vmul.f32 %v4458, %v4176
        %v4491 = vmul.f32 %v4451, %v4453
        %v4492 = vlaneseq
        %v4493 = vshrl.u32 %v4492, 7
        %v4494 = vsub.s32 0, %v4493
        %v4495 = vrot.slane %v4491, %v4494
        %v4496 = vmul.f32 %v4495, %v4115
        %v4497 = vmul.f32 %v4495, %v4117
        %v4498 = vmul.f32 %v4495, %v4119
        %v4499 = vmul.f32 %v4495, %v4121
        %v4500 = vmul.f32 %v4495, %v4123
        %v4501 = vmul.f32 %v4495, %v4125
        %v4502 = vmul.f32 %v4495, %v4127
        %v4503 = vmul.f32 %v4495, %v4129
        %v4504 = vmul.f32 %v4495, %v4131
        %v4505 = vmul.f32 %v4495, %v4133
        %v4506 = vmul.f32 %v4495, %v4135
        %v4507 = vmul.f32 %v4495, %v4137
        %v4508 = vmul.f32 %v4495, %v4139
        %v4509 = vmul.f32 %v4495, %v4141
        %v4510 = vmul.f32 %v4495, %v4143
        %v4511 = vmul.f32 %v4495, %v4145
        %v4512 = vmul.f32 %v4495, %v4147
        %v4513 = vmul.f32 %v4495, %v4149
        %v4514 = vmul.f32 %v4495, %v4151
        %v4515 = vmul.f32 %v4495, %v4153
        %v4516 = vmul.f32 %v4495, %v4155
        %v4517 = vmul.f32 %v4495, %v4157
        %v4518 = vmul.f32 %v4495, %v4159
        %v4519 = vmul.f32 %v4495, %v4161
        %v4520 = vmul.f32 %v4495, %v4163
        %v4521 = vmul.f32 %v4495, %v4165
        %v4522 = vmul.f32 %v4495, %v4167
        %v4523 = vmul.f32 %v4495, %v4169
        %v4524 = vmul.f32 %v4495, %v4171
        %v4525 = vmul.f32 %v4495, %v4173
        %v4526 = vmul.f32 %v4495, %v4175
        %v4527 = vmul.f32 %v4495, %v4177
        %v4528 = vadd.f32 %v4459, %v4496
        %v4529 = vadd.f32 %v4460, %v4497
        %v4530 = vadd.f32 %v4461, %v4498
        %v4531 = vadd.f32 %v4462, %v4499
        %v4532 = vadd.f32 %v4463, %v4500
        %v4533 = vadd.f32 %v4464, %v4501
        %v4534 = vadd.f32 %v4465, %v4502
        %v4535 = vadd.f32 %v4466, %v4503
        %v4536 = vadd.f32 %v4467, %v4504
        %v4537 = vadd.f32 %v4468, %v4505
        %v4538 = vadd.f32 %v4469, %v4506
        %v4539 = vadd.f32 %v4470, %v4507
        %v4540 = vadd.f32 %v4471, %v4508
        %v4541 = vadd.f32 %v4472, %v4509
        %v4542 = vadd.f32 %v4473, %v4510
        %v4543 = vadd.f32 %v4474, %v4511
        %v4544 = vadd.f32 %v4475, %v4512
        %v4545 = vadd.f32 %v4476, %v4513
        %v4546 = vadd.f32 %v4477, %v4514
        %v4547 = vadd.f32 %v4478, %v4515
        %v4548 = vadd.f32 %v4479, %v4516
        %v4549 = vadd.f32 %v4480, %v4517
        %v4550 = vadd.f32 %v4481, %v4518
        %v4551 = vadd.f32 %v4482, %v4519
        %v4552 = vadd.f32 %v4483, %v4520
        %v4553 = vadd.f32 %v4484, %v4521
        %v4554 = vadd.f32 %v4485, %v4522
        %v4555 = vadd.f32 %v4486, %v4523
        %v4556 = vadd.f32 %v4487, %v4524
        %v4557 = vadd.f32 %v4488, %v4525
        %v4558 = vadd.f32 %v4489, %v4526
        %v4559 = vadd.f32 %v4490, %v4527
        %v4560 = vmax.f32 %v4528, %v4536
        %v4561 = vmax.f32 %v4529, %v4537
        %v4562 = vmax.f32 %v4530, %v4538
        %v4563 = vmax.f32 %v4531, %v4539
        %v4564 = vmax.f32 %v4532, %v4540
        %v4565 = vmax.f32 %v4533, %v4541
        %v4566 = vmax.f32 %v4534, %v4542
        %v4567 = vmax.f32 %v4535, %v4543
        %v4568 = vmax.f32 %v4560, %v4544
        %v4569 = vmax.f32 %v4561, %v4545
        %v4570 = vmax.f32 %v4562, %v4546
        %v4571 = vmax.f32 %v4563, %v4547
        %v4572 = vmax.f32 %v4564, %v4548
        %v4573 = vmax.f32 %v4565, %v4549
        %v4574 = vmax.f32 %v4566, %v4550
        %v4575 = vmax.f32 %v4567, %v4551
        %v4576 = vmax.f32 %v4568, %v4552
        %v4577 = vmax.f32 %v4569, %v4553
        %v4578 = vmax.f32 %v4570, %v4554
        %v4579 = vmax.f32 %v4571, %v4555
        %v4580 = vmax.f32 %v4572, %v4556
        %v4581 = vmax.f32 %v4573, %v4557
        %v4582 = vmax.f32 %v4574, %v4558
        %v4583 = vmax.f32 %v4575, %v4559
        %v4584 = vpack.c.bf16 %v4577, %v4576
        %v4585 = vpack.c.bf16 %v4579, %v4578
        %v4586 = vpack.c.bf16 %v4581, %v4580
        %v4587 = vpack.c.bf16 %v4583, %v4582
        %v4592 = vunpack.c.l.b16 %v4584
        %v4593 = vunpack.c.h.b16 %v4584
        %v4594 = vunpack.c.l.b16 %v4585
        %v4595 = vunpack.c.h.b16 %v4585
        %v4596 = vunpack.c.l.b16 %v4586
        %v4597 = vunpack.c.h.b16 %v4586
        %v4598 = vunpack.c.l.b16 %v4587
        %v4599 = vunpack.c.h.b16 %v4587
        %v4600 = vpack.c.b16 %v4592, %v4592
        %v4601 = vpack.c.b16 %v4593, %v4593
        %v4602 = vpack.c.b16 %v4594, %v4594
        %v4603 = vpack.c.b16 %v4595, %v4595
        %v4604 = vpack.c.b16 %v4596, %v4596
        %v4605 = vpack.c.b16 %v4597, %v4597
        %v4606 = vpack.c.b16 %v4598, %v4598
        %v4607 = vpack.c.b16 %v4599, %v4599
        %4616 = vst [vmem:[%s244] sm:$0xf] %v4600
        %4617 = vst [vmem:[%s244 + $0x4] sm:$0xf] %v4601
        %4618 = vst [vmem:[%s244 + $0x8] sm:$0xf] %v4602
        %4619 = vst [vmem:[%s244 + $0xc] sm:$0xf] %v4603
        %4620 = vst [vmem:[%s244 + $0x10] sm:$0xf] %v4604
        %4621 = vst [vmem:[%s244 + $0x14] sm:$0xf] %v4605
        %4622 = vst [vmem:[%s244 + $0x18] sm:$0xf] %v4606
        %4623 = vst [vmem:[%s244 + $0x1c] sm:$0xf] %v4607
        %s4624 = sand.u32 %s159, 1
        %s4625 = scalar_lea.sflag [#allocation3], %s4624
        %s4626 = sand.u32 %s159, 1
        %s4627 = smul.addr %s4626, 32
        %s4628 = scalar_lea.vmem [#allocation2], %s4627
        // Predicated region
        $region45: #{tpu_custom_call.1} parent=43 // pred_check
          %p4629 = pneg %p169
        $region46: #{tpu_custom_call.1} parent=43 // pred_check_branch
          %4631 = sbr.rel (%p4629) target = $region48
        $region47: #{tpu_custom_call.1} parent=43 // pred_region
          %s4633 = ssub.s32 512, 512
          %4634 = vsyncadd %s4625, %s4633
          %s4635 = smul.addr %s20, 8
          %s4636 = smul.addr %s4635, 64
          %s4637 = scalar_lea.hbm %s6, %s4636
          %s4638 = sshll.u32 %s4628, 4
          %s4639 = int_to_ptr.vmem [resolvable:$true] %s4638
          %4644 = dma.vmem_to_hbm [thread:$0]  %s4639, 512, %s4637, %s4625, 64, 64, 4
        $region48: #{tpu_custom_call.1} parent=43 // pred_fallthru
          _
      $region44: #{tpu_custom_call.1} parent=5 // pred_fallthru
        _
      %p4645 = scmp.le.s32.totalorder 2, %s15
      // Predicated region
      $region49: #{tpu_custom_call.1} parent=5 // pred_check
        %p4646 = pneg %p4645
      $region50: #{tpu_custom_call.1} parent=5 // pred_check_branch
        %4648 = sbr.rel (%p4646) target = $region52
      $region51: #{tpu_custom_call.1} parent=5 // pred_region
        %s4649 = ssub.s32 %s15, 2
        // Predicated region
        $region53: #{tpu_custom_call.1} parent=51 // pred_check
          %p4650 = pneg %p175
        $region54: #{tpu_custom_call.1} parent=51 // pred_check_branch
          %4652 = sbr.rel (%p4650) target = $region56
        $region55: #{tpu_custom_call.1} parent=51 // pred_region
          %s4653 = sand.u32 %s160, 1
          %s4654 = scalar_lea.sflag [#allocation3], %s4653
          %s4655 = sand.u32 %s160, 1
          %s4656 = smul.addr %s4655, 32
          %s4657 = scalar_lea.vmem [#allocation2], %s4656
          %4658 = dma.done %s4654, 512
        $region56: #{tpu_custom_call.1} parent=51 // pred_fallthru
          _
      $region52: #{tpu_custom_call.1} parent=5 // pred_fallthru
        _
    $region6: #{tpu_custom_call.1} parent=1 // loop_footer
      %s19 = sadd.s32 1, %s15
    $region7: #{tpu_custom_call.1} parent=1 // loop_footer_branch
      %14 = sbr.rel target = $region3
    $region8: #{tpu_custom_call.1} parent=1 // loop_exit
      _
    %4659 = vsyncpa [#allocation3], 1
    %s4660 = scalar_lea.sflag [#allocation3], 1
    %4661 = vsyncpa %s4660, 1

</llo_original>
